<compile_context>
chip_gen: v7x
topology: tpu7x:2x2x1
jax: 0.10.0
libtpu: 0.0.40
codegen_flags: <defaults>
</compile_context>

<pallas_src>
import jax
import jax.numpy as jnp
import numpy as np
from jax import lax
from jax.experimental import pallas as pl
from jax.experimental.pallas import tpu as pltpu


def _round_up(x, m):
    return (x + m - 1) // m * m


def _pick_batch_block(n, per_image_bytes, budget=8 << 20):
    """Largest divisor of n that keeps >=2 grid steps (megacore) and fits budget."""
    best = 1
    for nb in range(1, n + 1):
        if n % nb:
            continue
        if n >= 2 and n // nb < 2:
            continue                      # keep both v7x TensorCores busy
        if nb * per_image_bytes <= budget:
            best = nb
    return best


def _make_fused_kernel(W, S_al, Nb, pad, Cmid, Cout):
    """Fused ConvRelu(3x3) -> ConvTranspose2d(4,2,1) -> ReLU for Nb images.

    Spatial data lives flattened along lanes: image b occupies lanes
    [b*S_al, b*S_al + S) of a zero-flanked buffer, where S = (H+2)*(W+2).
    Shifting by a 3x3 tap is then a static lane slice; the S_al-S (>= Wp+1)
    slack plus the 128-lane flanks make every shifted slice in-range and every
    aligned store full-width.
    """
    Wp = W + 2
    L = Nb * S_al

    def kernel(x_ref, w1_ref, b1_ref, w2_ref, b2_ref, mask_ref, o_ref, ybuf_ref):
        # One-time hygiene: zero the persistent scratch flanks.  Valid output
        # lanes never read the flanks (interior taps stay inside [pad, pad+L)),
        # so correctness does not depend on this even when a megacore core
        # never executes grid step 0.
        @pl.when(pl.program_id(0) == 0)
        def _():
            ybuf_ref[:, :pad] = jnp.zeros((Cmid, pad), ybuf_ref.dtype)
            ybuf_ref[:, pad + L:] = jnp.zeros((Cmid, pad), ybuf_ref.dtype)

        # ---- stage 1: conv3x3 (pad=1) + bias + ReLU as 9 accumulating dots ----
        acc = jnp.zeros((Cmid, L), jnp.float32)
        for ty in range(3):
            for tx in range(3):
                off = pad + (ty - 1) * Wp + (tx - 1)
                acc = acc + jnp.dot(w1_ref[ty * 3 + tx],
                                    x_ref[0, :, off:off + L],
                                    preferred_element_type=jnp.float32)
        # mask zeroes the padded ring + alignment slack so stage 2 sees the
        # exact zero-padded ConvRelu output.
        y = jnp.maximum(acc + b1_ref[...], 0.0) * mask_ref[...]
        ybuf_ref[:, pad:pad + L] = y.astype(ybuf_ref.dtype)   # 128-aligned store

        # ---- stage 2: 4x4 stride-2 deconv as 4 sub-pixel phases x 4 dense taps ----
        for ry in range(2):
            for rx in range(2):
                r = ry * 2 + rx
                accp = jnp.zeros((Cout, L), jnp.float32)
                for dy in range(2):
                    for dx in range(2):
                        ty, tx = ry + dy, rx + dx
                        off = pad + (ty - 1) * Wp + (tx - 1)
                        accp = accp + jnp.dot(w2_ref[r * 4 + dy * 2 + dx],
                                              ybuf_ref[:, off:off + L],
                                              preferred_element_type=jnp.float32)
                o_ref[0, r * Cout:(r + 1) * Cout, :] = jnp.maximum(
                    accp + b2_ref[...], 0.0)

    return kernel


@jax.jit
def decoder_block_v2(x, w1, b1, w2, b2):
    """DecoderBlockV2(is_deconv=True) forward.

    x : (N, Cin, H, W) f32 NCHW
    w1: (Cmid, Cin, 3, 3), b1: (Cmid,)    -- Conv2d(3x3, pad=1)
    w2: (Cmid, Cout, 4, 4), b2: (Cout,)   -- ConvTranspose2d(k=4, s=2, p=1)
    returns (N, Cout, 2H, 2W) f32
    """
    N, Cin, H, W = x.shape
    Cmid = w1.shape[0]
    Cout = w2.shape[1]
    Hp, Wp = H + 2, W + 2
    S = Hp * Wp
    S_al = _round_up(S, 128)              # lane-dense stores
    if S_al - S < Wp + 1:                 # slack must cover the max tap shift
        S_al += 128
    pad = 128                             # 128-aligned flank >= Wp + 1

    # how many images share one grid step (batch packed along lanes)
    per_img = S_al * (2 * Cin * 2 + 2 * 4 * Cout * 4 + Cmid * 2 + 4)
    Nb = _pick_batch_block(N, per_img)
    G = N // Nb
    L = Nb * S_al
    FWx = pad + L + pad

    # ---- XLA-side glue: input flattening/padding + weight re-layout ----
    xf = jnp.pad(x, ((0, 0), (0, 0), (1, 1), (1, 1))).reshape(N, Cin, S)
    xf = jnp.pad(xf, ((0, 0), (0, 0), (0, S_al - S)))
    xf = xf.reshape(G, Nb, Cin, S_al).transpose(0, 2, 1, 3).reshape(G, Cin, L)
    xbuf = jnp.pad(xf, ((0, 0), (0, 0), (pad, pad))).astype(jnp.bfloat16)

    # conv1 weights, tap-major: tap t = ty*3 + tx -> (Cmid, Cin)
    w1t = jnp.transpose(w1, (2, 3, 0, 1)).reshape(9, Cmid, Cin).astype(jnp.bfloat16)
    b1c = b1.reshape(Cmid, 1).astype(jnp.float32)

    # deconv weights: 4 sub-pixel phases x 4 (2x2) taps, each a DENSE
    # (Cout, Cmid) matrix (no structural zeros).
    w2t = jnp.zeros((16, Cout, Cmid), jnp.float32)
    for ry in range(2):
        for rx in range(2):
            for dy in range(2):
                for dx in range(2):
                    kh, kw = 3 - ry - 2 * dy, 3 - rx - 2 * dx
                    w2t = w2t.at[(ry * 2 + rx) * 4 + dy * 2 + dx].set(
                        w2[:, :, kh, kw].T)
    w2t = w2t.astype(jnp.bfloat16)
    b2c = b2.reshape(Cout, 1).astype(jnp.float32)

    # mask zeroing the padded ring + alignment slack of the stage-1 output
    m = jnp.pad(jnp.ones((H, W), jnp.float32), ((1, 1), (1, 1))).reshape(S)
    m = jnp.pad(m, (0, S_al - S))
    mask = jnp.tile(m, Nb).reshape(1, L)

    # per-step VMEM: double-buffered x/out blocks + weights + ybuf scratch
    vmem_est = (2 * Cin * FWx * 2 + 2 * 4 * Cout * L * 4 + Cmid * FWx * 2
                + 2 * (9 * Cmid * Cin + 16 * Cout * Cmid) * 2
                + 2 * (Cmid + Cout) * 4 + 2 * L * 4)
    vmem_limit = int(max(32 << 20, min(96 << 20, 4 * vmem_est)))

    out = pl.pallas_call(
        _make_fused_kernel(W, S_al, Nb, pad, Cmid, Cout),
        out_shape=jax.ShapeDtypeStruct((G, 4 * Cout, L), jnp.float32),
        grid=(G,),
        in_specs=[
            pl.BlockSpec((1, Cin, FWx), lambda g: (g, 0, 0)),
            # NOTE: the operands below have constant index maps; at production
            # channel widths consider pipeline_mode=pl.Buffered(1) (or a
            # one-time scratch preload) to drop their second pipeline buffer.
            # They are tiny here, so default buffering is kept for robustness.
            pl.BlockSpec((9, Cmid, Cin), lambda g: (0, 0, 0)),
            pl.BlockSpec((Cmid, 1), lambda g: (0, 0)),
            pl.BlockSpec((16, Cout, Cmid), lambda g: (0, 0, 0)),
            pl.BlockSpec((Cout, 1), lambda g: (0, 0)),
            pl.BlockSpec((1, L), lambda g: (0, 0)),
        ],
        out_specs=pl.BlockSpec((1, 4 * Cout, L), lambda g: (g, 0, 0)),
        scratch_shapes=[pltpu.VMEM((Cmid, FWx), jnp.bfloat16)],  # stage-1 result
        compiler_params=pltpu.CompilerParams(
            dimension_semantics=("parallel",),     # batch splits across v7x TCs
            vmem_limit_bytes=vmem_limit,
        ),
    )(xbuf, w1t, b1c, w2t, b2c, mask)

    # depth-to-space + crop: interleave the 4 sub-pixel phases into NCHW.
    # TODO(synk): a downstream Pallas consumer could read the phase-planar
    # (G, 4*Cout, Nb*S_al) layout directly and fold this interleave into its
    # index_map, saving one full HBM pass over the output.
    z = out.reshape(G, 2, 2, Cout, Nb, S_al)[..., :S]
    z = z.reshape(G, 2, 2, Cout, Nb, Hp, Wp)[:, :, :, :, :, 1:H + 1, 1:W + 1]
    z = jnp.transpose(z, (0, 4, 3, 5, 1, 6, 2)).reshape(N, Cout, 2 * H, 2 * W)
    return z


def _reference(x_nchw, w1, b1, w2, b2):
    """Pure-XLA f32 reference of the same forward pass (for verification)."""
    dn = ("NCHW", "OIHW", "NCHW")
    y = lax.conv_general_dilated(
        x_nchw, w1, (1, 1), ((1, 1), (1, 1)),
        dimension_numbers=dn, precision=lax.Precision.HIGHEST,
    ) + b1[None, :, None, None]
    y = jnp.maximum(y, 0.0)
    w2_eq = jnp.transpose(jnp.flip(w2, (2, 3)), (1, 0, 2, 3))   # (Cout, Cmid, 4, 4)
    z = lax.conv_general_dilated(
        y, w2_eq, (1, 1), ((2, 2), (2, 2)), lhs_dilation=(2, 2),
        dimension_numbers=dn, precision=lax.Precision.HIGHEST,
    ) + b2[None, :, None, None]
    return jnp.maximum(z, 0.0)


if __name__ == "__main__":
    key = jax.random.PRNGKey(0)
    kx, k1, kb1, k2, kb2 = jax.random.split(key, 5)

    N, Cin, H, W = 2, 4, 16, 16
    Cmid, Cout = 8, 4

    x = jax.random.normal(kx, (N, Cin, H, W), jnp.float32)
    # deterministic synthetic parameters (shapes follow the nn.Module __init__)
    w1 = 0.1 * jax.random.normal(k1, (Cmid, Cin, 3, 3), jnp.float32)
    b1 = 0.1 * jax.random.normal(kb1, (Cmid,), jnp.float32)
    w2 = 0.1 * jax.random.normal(k2, (Cmid, Cout, 4, 4), jnp.float32)
    b2 = 0.1 * jax.random.normal(kb2, (Cout,), jnp.float32)

    out = jax.block_until_ready(decoder_block_v2(x, w1, b1, w2, b2))
    assert out.shape == (N, Cout, 2 * H, 2 * W), out.shape

    ref = jax.block_until_ready(_reference(x, w1, b1, w2, b2))
    # bf16 MXU operands (f32 accumulation) vs. f32 HIGHEST reference
    np.testing.assert_allclose(np.asarray(out), np.asarray(ref), rtol=5e-2, atol=5e-2)

    print("KERNEL_OK")
</pallas_src>

<mosaic_0001>
module attributes {stable_mosaic.version = 11 : i64} {
  func.func @kernel(%arg0: i32, %arg1: memref<1x4x640xbf16, #tpu.memory_space<vmem>>, %arg2: memref<9x8x4xbf16, #tpu.memory_space<vmem>>, %arg3: memref<8x1xf32, #tpu.memory_space<vmem>>, %arg4: memref<16x4x8xbf16, #tpu.memory_space<vmem>>, %arg5: memref<4x1xf32, #tpu.memory_space<vmem>>, %arg6: memref<1x384xf32, #tpu.memory_space<vmem>>, %arg7: memref<1x16x384xf32, #tpu.memory_space<vmem>>, %arg8: memref<8x640xbf16, #tpu.memory_space<vmem>>) attributes {dimension_semantics = [#tpu.dimension_semantics<parallel>], iteration_bounds = array<i64: 2>, scalar_prefetch = 0 : i64, scratch_operands = 1 : i64, tpu.core_type = #tpu.core_type<tc>, window_params = [{transform_indices = @transform_0, window_bounds = array<i64: 1, 4, 640>}, {pipeline_mode = #tpu.pipeline_mode<synchronous>, transform_indices = @transform_1, window_bounds = array<i64: 9, 8, 4>}, {pipeline_mode = #tpu.pipeline_mode<synchronous>, transform_indices = @transform_2, window_bounds = array<i64: 8, 1>}, {pipeline_mode = #tpu.pipeline_mode<synchronous>, transform_indices = @transform_3, window_bounds = array<i64: 16, 4, 8>}, {pipeline_mode = #tpu.pipeline_mode<synchronous>, transform_indices = @transform_4, window_bounds = array<i64: 4, 1>}, {pipeline_mode = #tpu.pipeline_mode<synchronous>, transform_indices = @transform_5, window_bounds = array<i64: 1, 384>}, {transform_indices = @transform_6, window_bounds = array<i64: 1, 16, 384>}]} {
    %c0_i32 = arith.constant 0 : i32
    %0 = arith.cmpi eq, %arg0, %c0_i32 : i32
    %1 = arith.extui %0 : i1 to i32
    %c0_i32_0 = arith.constant 0 : i32
    %2 = arith.cmpi ne, %1, %c0_i32_0 : i32
    scf.if %2 {
      %cst_170 = arith.constant 0.000000e+00 : bf16
      %184 = vector.broadcast %cst_170 : bf16 to vector<8x128xbf16>
      %c0_171 = arith.constant 0 : index
      %c0_172 = arith.constant 0 : index
      %185 = vector.load %arg8[%c0_171, %c0_172] : memref<8x640xbf16, #tpu.memory_space<vmem>>, vector<8x128xbf16>
      tpu.vector_store %arg8[%c0_171, %c0_172], %184 {strides = array<i32>} : memref<8x640xbf16, #tpu.memory_space<vmem>>, vector<8x128xbf16>,
      %cst_173 = arith.constant 0.000000e+00 : bf16
      %186 = vector.broadcast %cst_173 : bf16 to vector<8x128xbf16>
      %c0_174 = arith.constant 0 : index
      %c512 = arith.constant 512 : index
      %187 = vector.load %arg8[%c0_174, %c512] : memref<8x640xbf16, #tpu.memory_space<vmem>>, vector<8x128xbf16>
      tpu.vector_store %arg8[%c0_174, %c512], %186 {strides = array<i32>} : memref<8x640xbf16, #tpu.memory_space<vmem>>, vector<8x128xbf16>,
    } else {
    }
    %cst = arith.constant 0.000000e+00 : f32
    %3 = vector.broadcast %cst : f32 to vector<8x384xf32>
    %c0 = arith.constant 0 : index
    %c0_1 = arith.constant 0 : index
    %c0_2 = arith.constant 0 : index
    %4 = vector.load %arg2[%c0, %c0_1, %c0_2] : memref<9x8x4xbf16, #tpu.memory_space<vmem>>, vector<1x8x4xbf16>
    %5 = vector.shape_cast %4 : vector<1x8x4xbf16> to vector<8x4xbf16>
    %c0_3 = arith.constant 0 : index
    %c0_4 = arith.constant 0 : index
    %c109 = arith.constant 109 : index
    %6 = vector.load %arg1[%c0_3, %c0_4, %c109] : memref<1x4x640xbf16, #tpu.memory_space<vmem>>, vector<1x4x384xbf16>
    %7 = vector.shape_cast %6 : vector<1x4x384xbf16> to vector<4x384xbf16>
    %cst_5 = arith.constant dense<0.000000e+00> : vector<8x384xf32>
    %8 = tpu.matmul %5, %7, %cst_5 {dimension_numbers = #tpu.dot_dimension_numbers<[1], [0], [0], [1], [0, 0, 1, 1], [], []>} : vector<8x4xbf16>, vector<4x384xbf16>, vector<8x384xf32> -> vector<8x384xf32>
    %9 = arith.addf %3, %8 : vector<8x384xf32>
    %c1 = arith.constant 1 : index
    %c0_6 = arith.constant 0 : index
    %c0_7 = arith.constant 0 : index
    %10 = vector.load %arg2[%c1, %c0_6, %c0_7] : memref<9x8x4xbf16, #tpu.memory_space<vmem>>, vector<1x8x4xbf16>
    %11 = vector.shape_cast %10 : vector<1x8x4xbf16> to vector<8x4xbf16>
    %c0_8 = arith.constant 0 : index
    %c0_9 = arith.constant 0 : index
    %c110 = arith.constant 110 : index
    %12 = vector.load %arg1[%c0_8, %c0_9, %c110] : memref<1x4x640xbf16, #tpu.memory_space<vmem>>, vector<1x4x384xbf16>
    %13 = vector.shape_cast %12 : vector<1x4x384xbf16> to vector<4x384xbf16>
    %cst_10 = arith.constant dense<0.000000e+00> : vector<8x384xf32>
    %14 = tpu.matmul %11, %13, %cst_10 {dimension_numbers = #tpu.dot_dimension_numbers<[1], [0], [0], [1], [0, 0, 1, 1], [], []>} : vector<8x4xbf16>, vector<4x384xbf16>, vector<8x384xf32> -> vector<8x384xf32>
    %15 = arith.addf %9, %14 : vector<8x384xf32>
    %c2 = arith.constant 2 : index
    %c0_11 = arith.constant 0 : index
    %c0_12 = arith.constant 0 : index
    %16 = vector.load %arg2[%c2, %c0_11, %c0_12] : memref<9x8x4xbf16, #tpu.memory_space<vmem>>, vector<1x8x4xbf16>
    %17 = vector.shape_cast %16 : vector<1x8x4xbf16> to vector<8x4xbf16>
    %c0_13 = arith.constant 0 : index
    %c0_14 = arith.constant 0 : index
    %c111 = arith.constant 111 : index
    %18 = vector.load %arg1[%c0_13, %c0_14, %c111] : memref<1x4x640xbf16, #tpu.memory_space<vmem>>, vector<1x4x384xbf16>
    %19 = vector.shape_cast %18 : vector<1x4x384xbf16> to vector<4x384xbf16>
    %cst_15 = arith.constant dense<0.000000e+00> : vector<8x384xf32>
    %20 = tpu.matmul %17, %19, %cst_15 {dimension_numbers = #tpu.dot_dimension_numbers<[1], [0], [0], [1], [0, 0, 1, 1], [], []>} : vector<8x4xbf16>, vector<4x384xbf16>, vector<8x384xf32> -> vector<8x384xf32>
    %21 = arith.addf %15, %20 : vector<8x384xf32>
    %c3 = arith.constant 3 : index
    %c0_16 = arith.constant 0 : index
    %c0_17 = arith.constant 0 : index
    %22 = vector.load %arg2[%c3, %c0_16, %c0_17] : memref<9x8x4xbf16, #tpu.memory_space<vmem>>, vector<1x8x4xbf16>
    %23 = vector.shape_cast %22 : vector<1x8x4xbf16> to vector<8x4xbf16>
    %c0_18 = arith.constant 0 : index
    %c0_19 = arith.constant 0 : index
    %c127 = arith.constant 127 : index
    %24 = vector.load %arg1[%c0_18, %c0_19, %c127] : memref<1x4x640xbf16, #tpu.memory_space<vmem>>, vector<1x4x384xbf16>
    %25 = vector.shape_cast %24 : vector<1x4x384xbf16> to vector<4x384xbf16>
    %cst_20 = arith.constant dense<0.000000e+00> : vector<8x384xf32>
    %26 = tpu.matmul %23, %25, %cst_20 {dimension_numbers = #tpu.dot_dimension_numbers<[1], [0], [0], [1], [0, 0, 1, 1], [], []>} : vector<8x4xbf16>, vector<4x384xbf16>, vector<8x384xf32> -> vector<8x384xf32>
    %27 = arith.addf %21, %26 : vector<8x384xf32>
    %c4 = arith.constant 4 : index
    %c0_21 = arith.constant 0 : index
    %c0_22 = arith.constant 0 : index
    %28 = vector.load %arg2[%c4, %c0_21, %c0_22] : memref<9x8x4xbf16, #tpu.memory_space<vmem>>, vector<1x8x4xbf16>
    %29 = vector.shape_cast %28 : vector<1x8x4xbf16> to vector<8x4xbf16>
    %c0_23 = arith.constant 0 : index
    %c0_24 = arith.constant 0 : index
    %c128 = arith.constant 128 : index
    %30 = vector.load %arg1[%c0_23, %c0_24, %c128] : memref<1x4x640xbf16, #tpu.memory_space<vmem>>, vector<1x4x384xbf16>
    %31 = vector.shape_cast %30 : vector<1x4x384xbf16> to vector<4x384xbf16>
    %cst_25 = arith.constant dense<0.000000e+00> : vector<8x384xf32>
    %32 = tpu.matmul %29, %31, %cst_25 {dimension_numbers = #tpu.dot_dimension_numbers<[1], [0], [0], [1], [0, 0, 1, 1], [], []>} : vector<8x4xbf16>, vector<4x384xbf16>, vector<8x384xf32> -> vector<8x384xf32>
    %33 = arith.addf %27, %32 : vector<8x384xf32>
    %c5 = arith.constant 5 : index
    %c0_26 = arith.constant 0 : index
    %c0_27 = arith.constant 0 : index
    %34 = vector.load %arg2[%c5, %c0_26, %c0_27] : memref<9x8x4xbf16, #tpu.memory_space<vmem>>, vector<1x8x4xbf16>
    %35 = vector.shape_cast %34 : vector<1x8x4xbf16> to vector<8x4xbf16>
    %c0_28 = arith.constant 0 : index
    %c0_29 = arith.constant 0 : index
    %c129 = arith.constant 129 : index
    %36 = vector.load %arg1[%c0_28, %c0_29, %c129] : memref<1x4x640xbf16, #tpu.memory_space<vmem>>, vector<1x4x384xbf16>
    %37 = vector.shape_cast %36 : vector<1x4x384xbf16> to vector<4x384xbf16>
    %cst_30 = arith.constant dense<0.000000e+00> : vector<8x384xf32>
    %38 = tpu.matmul %35, %37, %cst_30 {dimension_numbers = #tpu.dot_dimension_numbers<[1], [0], [0], [1], [0, 0, 1, 1], [], []>} : vector<8x4xbf16>, vector<4x384xbf16>, vector<8x384xf32> -> vector<8x384xf32>
    %39 = arith.addf %33, %38 : vector<8x384xf32>
    %c6 = arith.constant 6 : index
    %c0_31 = arith.constant 0 : index
    %c0_32 = arith.constant 0 : index
    %40 = vector.load %arg2[%c6, %c0_31, %c0_32] : memref<9x8x4xbf16, #tpu.memory_space<vmem>>, vector<1x8x4xbf16>
    %41 = vector.shape_cast %40 : vector<1x8x4xbf16> to vector<8x4xbf16>
    %c0_33 = arith.constant 0 : index
    %c0_34 = arith.constant 0 : index
    %c145 = arith.constant 145 : index
    %42 = vector.load %arg1[%c0_33, %c0_34, %c145] : memref<1x4x640xbf16, #tpu.memory_space<vmem>>, vector<1x4x384xbf16>
    %43 = vector.shape_cast %42 : vector<1x4x384xbf16> to vector<4x384xbf16>
    %cst_35 = arith.constant dense<0.000000e+00> : vector<8x384xf32>
    %44 = tpu.matmul %41, %43, %cst_35 {dimension_numbers = #tpu.dot_dimension_numbers<[1], [0], [0], [1], [0, 0, 1, 1], [], []>} : vector<8x4xbf16>, vector<4x384xbf16>, vector<8x384xf32> -> vector<8x384xf32>
    %45 = arith.addf %39, %44 : vector<8x384xf32>
    %c7 = arith.constant 7 : index
    %c0_36 = arith.constant 0 : index
    %c0_37 = arith.constant 0 : index
    %46 = vector.load %arg2[%c7, %c0_36, %c0_37] : memref<9x8x4xbf16, #tpu.memory_space<vmem>>, vector<1x8x4xbf16>
    %47 = vector.shape_cast %46 : vector<1x8x4xbf16> to vector<8x4xbf16>
    %c0_38 = arith.constant 0 : index
    %c0_39 = arith.constant 0 : index
    %c146 = arith.constant 146 : index
    %48 = vector.load %arg1[%c0_38, %c0_39, %c146] : memref<1x4x640xbf16, #tpu.memory_space<vmem>>, vector<1x4x384xbf16>
    %49 = vector.shape_cast %48 : vector<1x4x384xbf16> to vector<4x384xbf16>
    %cst_40 = arith.constant dense<0.000000e+00> : vector<8x384xf32>
    %50 = tpu.matmul %47, %49, %cst_40 {dimension_numbers = #tpu.dot_dimension_numbers<[1], [0], [0], [1], [0, 0, 1, 1], [], []>} : vector<8x4xbf16>, vector<4x384xbf16>, vector<8x384xf32> -> vector<8x384xf32>
    %51 = arith.addf %45, %50 : vector<8x384xf32>
    %c8 = arith.constant 8 : index
    %c0_41 = arith.constant 0 : index
    %c0_42 = arith.constant 0 : index
    %52 = vector.load %arg2[%c8, %c0_41, %c0_42] : memref<9x8x4xbf16, #tpu.memory_space<vmem>>, vector<1x8x4xbf16>
    %53 = vector.shape_cast %52 : vector<1x8x4xbf16> to vector<8x4xbf16>
    %c0_43 = arith.constant 0 : index
    %c0_44 = arith.constant 0 : index
    %c147 = arith.constant 147 : index
    %54 = vector.load %arg1[%c0_43, %c0_44, %c147] : memref<1x4x640xbf16, #tpu.memory_space<vmem>>, vector<1x4x384xbf16>
    %55 = vector.shape_cast %54 : vector<1x4x384xbf16> to vector<4x384xbf16>
    %cst_45 = arith.constant dense<0.000000e+00> : vector<8x384xf32>
    %56 = tpu.matmul %53, %55, %cst_45 {dimension_numbers = #tpu.dot_dimension_numbers<[1], [0], [0], [1], [0, 0, 1, 1], [], []>} : vector<8x4xbf16>, vector<4x384xbf16>, vector<8x384xf32> -> vector<8x384xf32>
    %57 = arith.addf %51, %56 : vector<8x384xf32>
    %c0_46 = arith.constant 0 : index
    %c0_47 = arith.constant 0 : index
    %58 = vector.load %arg3[%c0_46, %c0_47] : memref<8x1xf32, #tpu.memory_space<vmem>>, vector<8x1xf32>
    %59 = vector.broadcast %58 : vector<8x1xf32> to vector<8x384xf32>
    %60 = arith.addf %57, %59 : vector<8x384xf32>
    %cst_48 = arith.constant 0.000000e+00 : f32
    %61 = vector.broadcast %cst_48 : f32 to vector<8x384xf32>
    %62 = arith.maximumf %60, %61 : vector<8x384xf32>
    %c0_49 = arith.constant 0 : index
    %c0_50 = arith.constant 0 : index
    %63 = vector.load %arg6[%c0_49, %c0_50] : memref<1x384xf32, #tpu.memory_space<vmem>>, vector<1x384xf32>
    %64 = vector.broadcast %63 : vector<1x384xf32> to vector<8x384xf32>
    %65 = arith.mulf %62, %64 : vector<8x384xf32>
    %66 = arith.truncf %65 : vector<8x384xf32> to vector<8x384xbf16>
    %c0_51 = arith.constant 0 : index
    %c128_52 = arith.constant 128 : index
    %67 = vector.load %arg8[%c0_51, %c128_52] : memref<8x640xbf16, #tpu.memory_space<vmem>>, vector<8x384xbf16>
    tpu.vector_store %arg8[%c0_51, %c128_52], %66 {strides = array<i32>} : memref<8x640xbf16, #tpu.memory_space<vmem>>, vector<8x384xbf16>,
    %cst_53 = arith.constant 0.000000e+00 : f32
    %68 = vector.broadcast %cst_53 : f32 to vector<4x384xf32>
    %c0_54 = arith.constant 0 : index
    %c0_55 = arith.constant 0 : index
    %c0_56 = arith.constant 0 : index
    %69 = vector.load %arg4[%c0_54, %c0_55, %c0_56] : memref<16x4x8xbf16, #tpu.memory_space<vmem>>, vector<1x4x8xbf16>
    %70 = vector.shape_cast %69 : vector<1x4x8xbf16> to vector<4x8xbf16>
    %c0_57 = arith.constant 0 : index
    %c109_58 = arith.constant 109 : index
    %71 = vector.load %arg8[%c0_57, %c109_58] : memref<8x640xbf16, #tpu.memory_space<vmem>>, vector<8x384xbf16>
    %cst_59 = arith.constant dense<0.000000e+00> : vector<4x384xf32>
    %72 = tpu.matmul %70, %71, %cst_59 {dimension_numbers = #tpu.dot_dimension_numbers<[1], [0], [0], [1], [0, 0, 1, 1], [], []>} : vector<4x8xbf16>, vector<8x384xbf16>, vector<4x384xf32> -> vector<4x384xf32>
    %73 = arith.addf %68, %72 : vector<4x384xf32>
    %c1_60 = arith.constant 1 : index
    %c0_61 = arith.constant 0 : index
    %c0_62 = arith.constant 0 : index
    %74 = vector.load %arg4[%c1_60, %c0_61, %c0_62] : memref<16x4x8xbf16, #tpu.memory_space<vmem>>, vector<1x4x8xbf16>
    %75 = vector.shape_cast %74 : vector<1x4x8xbf16> to vector<4x8xbf16>
    %c0_63 = arith.constant 0 : index
    %c110_64 = arith.constant 110 : index
    %76 = vector.load %arg8[%c0_63, %c110_64] : memref<8x640xbf16, #tpu.memory_space<vmem>>, vector<8x384xbf16>
    %cst_65 = arith.constant dense<0.000000e+00> : vector<4x384xf32>
    %77 = tpu.matmul %75, %76, %cst_65 {dimension_numbers = #tpu.dot_dimension_numbers<[1], [0], [0], [1], [0, 0, 1, 1], [], []>} : vector<4x8xbf16>, vector<8x384xbf16>, vector<4x384xf32> -> vector<4x384xf32>
    %78 = arith.addf %73, %77 : vector<4x384xf32>
    %c2_66 = arith.constant 2 : index
    %c0_67 = arith.constant 0 : index
    %c0_68 = arith.constant 0 : index
    %79 = vector.load %arg4[%c2_66, %c0_67, %c0_68] : memref<16x4x8xbf16, #tpu.memory_space<vmem>>, vector<1x4x8xbf16>
    %80 = vector.shape_cast %79 : vector<1x4x8xbf16> to vector<4x8xbf16>
    %c0_69 = arith.constant 0 : index
    %c127_70 = arith.constant 127 : index
    %81 = vector.load %arg8[%c0_69, %c127_70] : memref<8x640xbf16, #tpu.memory_space<vmem>>, vector<8x384xbf16>
    %cst_71 = arith.constant dense<0.000000e+00> : vector<4x384xf32>
    %82 = tpu.matmul %80, %81, %cst_71 {dimension_numbers = #tpu.dot_dimension_numbers<[1], [0], [0], [1], [0, 0, 1, 1], [], []>} : vector<4x8xbf16>, vector<8x384xbf16>, vector<4x384xf32> -> vector<4x384xf32>
    %83 = arith.addf %78, %82 : vector<4x384xf32>
    %c3_72 = arith.constant 3 : index
    %c0_73 = arith.constant 0 : index
    %c0_74 = arith.constant 0 : index
    %84 = vector.load %arg4[%c3_72, %c0_73, %c0_74] : memref<16x4x8xbf16, #tpu.memory_space<vmem>>, vector<1x4x8xbf16>
    %85 = vector.shape_cast %84 : vector<1x4x8xbf16> to vector<4x8xbf16>
    %c0_75 = arith.constant 0 : index
    %c128_76 = arith.constant 128 : index
    %86 = vector.load %arg8[%c0_75, %c128_76] : memref<8x640xbf16, #tpu.memory_space<vmem>>, vector<8x384xbf16>
    %cst_77 = arith.constant dense<0.000000e+00> : vector<4x384xf32>
    %87 = tpu.matmul %85, %86, %cst_77 {dimension_numbers = #tpu.dot_dimension_numbers<[1], [0], [0], [1], [0, 0, 1, 1], [], []>} : vector<4x8xbf16>, vector<8x384xbf16>, vector<4x384xf32> -> vector<4x384xf32>
    %88 = arith.addf %83, %87 : vector<4x384xf32>
    %c0_78 = arith.constant 0 : index
    %c0_79 = arith.constant 0 : index
    %89 = vector.load %arg5[%c0_78, %c0_79] : memref<4x1xf32, #tpu.memory_space<vmem>>, vector<4x1xf32>
    %90 = vector.broadcast %89 : vector<4x1xf32> to vector<4x384xf32>
    %91 = arith.addf %88, %90 : vector<4x384xf32>
    %cst_80 = arith.constant 0.000000e+00 : f32
    %92 = vector.broadcast %cst_80 : f32 to vector<4x384xf32>
    %93 = arith.maximumf %91, %92 : vector<4x384xf32>
    %c0_81 = arith.constant 0 : index
    %c0_82 = arith.constant 0 : index
    %c0_83 = arith.constant 0 : index
    %94 = vector.load %arg7[%c0_81, %c0_82, %c0_83] : memref<1x16x384xf32, #tpu.memory_space<vmem>>, vector<1x4x384xf32>
    %95 = vector.shape_cast %94 : vector<1x4x384xf32> to vector<4x384xf32>
    %96 = vector.shape_cast %93 : vector<4x384xf32> to vector<1x4x384xf32>
    tpu.vector_store %arg7[%c0_81, %c0_82, %c0_83], %96 {strides = array<i32>} : memref<1x16x384xf32, #tpu.memory_space<vmem>>, vector<1x4x384xf32>,
    %cst_84 = arith.constant 0.000000e+00 : f32
    %97 = vector.broadcast %cst_84 : f32 to vector<4x384xf32>
    %c4_85 = arith.constant 4 : index
    %c0_86 = arith.constant 0 : index
    %c0_87 = arith.constant 0 : index
    %98 = vector.load %arg4[%c4_85, %c0_86, %c0_87] : memref<16x4x8xbf16, #tpu.memory_space<vmem>>, vector<1x4x8xbf16>
    %99 = vector.shape_cast %98 : vector<1x4x8xbf16> to vector<4x8xbf16>
    %c0_88 = arith.constant 0 : index
    %c110_89 = arith.constant 110 : index
    %100 = vector.load %arg8[%c0_88, %c110_89] : memref<8x640xbf16, #tpu.memory_space<vmem>>, vector<8x384xbf16>
    %cst_90 = arith.constant dense<0.000000e+00> : vector<4x384xf32>
    %101 = tpu.matmul %99, %100, %cst_90 {dimension_numbers = #tpu.dot_dimension_numbers<[1], [0], [0], [1], [0, 0, 1, 1], [], []>} : vector<4x8xbf16>, vector<8x384xbf16>, vector<4x384xf32> -> vector<4x384xf32>
    %102 = arith.addf %97, %101 : vector<4x384xf32>
    %c5_91 = arith.constant 5 : index
    %c0_92 = arith.constant 0 : index
    %c0_93 = arith.constant 0 : index
    %103 = vector.load %arg4[%c5_91, %c0_92, %c0_93] : memref<16x4x8xbf16, #tpu.memory_space<vmem>>, vector<1x4x8xbf16>
    %104 = vector.shape_cast %103 : vector<1x4x8xbf16> to vector<4x8xbf16>
    %c0_94 = arith.constant 0 : index
    %c111_95 = arith.constant 111 : index
    %105 = vector.load %arg8[%c0_94, %c111_95] : memref<8x640xbf16, #tpu.memory_space<vmem>>, vector<8x384xbf16>
    %cst_96 = arith.constant dense<0.000000e+00> : vector<4x384xf32>
    %106 = tpu.matmul %104, %105, %cst_96 {dimension_numbers = #tpu.dot_dimension_numbers<[1], [0], [0], [1], [0, 0, 1, 1], [], []>} : vector<4x8xbf16>, vector<8x384xbf16>, vector<4x384xf32> -> vector<4x384xf32>
    %107 = arith.addf %102, %106 : vector<4x384xf32>
    %c6_97 = arith.constant 6 : index
    %c0_98 = arith.constant 0 : index
    %c0_99 = arith.constant 0 : index
    %108 = vector.load %arg4[%c6_97, %c0_98, %c0_99] : memref<16x4x8xbf16, #tpu.memory_space<vmem>>, vector<1x4x8xbf16>
    %109 = vector.shape_cast %108 : vector<1x4x8xbf16> to vector<4x8xbf16>
    %c0_100 = arith.constant 0 : index
    %c128_101 = arith.constant 128 : index
    %110 = vector.load %arg8[%c0_100, %c128_101] : memref<8x640xbf16, #tpu.memory_space<vmem>>, vector<8x384xbf16>
    %cst_102 = arith.constant dense<0.000000e+00> : vector<4x384xf32>
    %111 = tpu.matmul %109, %110, %cst_102 {dimension_numbers = #tpu.dot_dimension_numbers<[1], [0], [0], [1], [0, 0, 1, 1], [], []>} : vector<4x8xbf16>, vector<8x384xbf16>, vector<4x384xf32> -> vector<4x384xf32>
    %112 = arith.addf %107, %111 : vector<4x384xf32>
    %c7_103 = arith.constant 7 : index
    %c0_104 = arith.constant 0 : index
    %c0_105 = arith.constant 0 : index
    %113 = vector.load %arg4[%c7_103, %c0_104, %c0_105] : memref<16x4x8xbf16, #tpu.memory_space<vmem>>, vector<1x4x8xbf16>
    %114 = vector.shape_cast %113 : vector<1x4x8xbf16> to vector<4x8xbf16>
    %c0_106 = arith.constant 0 : index
    %c129_107 = arith.constant 129 : index
    %115 = vector.load %arg8[%c0_106, %c129_107] : memref<8x640xbf16, #tpu.memory_space<vmem>>, vector<8x384xbf16>
    %cst_108 = arith.constant dense<0.000000e+00> : vector<4x384xf32>
    %116 = tpu.matmul %114, %115, %cst_108 {dimension_numbers = #tpu.dot_dimension_numbers<[1], [0], [0], [1], [0, 0, 1, 1], [], []>} : vector<4x8xbf16>, vector<8x384xbf16>, vector<4x384xf32> -> vector<4x384xf32>
    %117 = arith.addf %112, %116 : vector<4x384xf32>
    %c0_109 = arith.constant 0 : index
    %c0_110 = arith.constant 0 : index
    %118 = vector.load %arg5[%c0_109, %c0_110] : memref<4x1xf32, #tpu.memory_space<vmem>>, vector<4x1xf32>
    %119 = vector.broadcast %118 : vector<4x1xf32> to vector<4x384xf32>
    %120 = arith.addf %117, %119 : vector<4x384xf32>
    %cst_111 = arith.constant 0.000000e+00 : f32
    %121 = vector.broadcast %cst_111 : f32 to vector<4x384xf32>
    %122 = arith.maximumf %120, %121 : vector<4x384xf32>
    %c0_112 = arith.constant 0 : index
    %c4_113 = arith.constant 4 : index
    %c0_114 = arith.constant 0 : index
    %123 = vector.load %arg7[%c0_112, %c4_113, %c0_114] : memref<1x16x384xf32, #tpu.memory_space<vmem>>, vector<1x4x384xf32>
    %124 = vector.shape_cast %123 : vector<1x4x384xf32> to vector<4x384xf32>
    %125 = vector.shape_cast %122 : vector<4x384xf32> to vector<1x4x384xf32>
    tpu.vector_store %arg7[%c0_112, %c4_113, %c0_114], %125 {strides = array<i32>} : memref<1x16x384xf32, #tpu.memory_space<vmem>>, vector<1x4x384xf32>,
    %cst_115 = arith.constant 0.000000e+00 : f32
    %126 = vector.broadcast %cst_115 : f32 to vector<4x384xf32>
    %c8_116 = arith.constant 8 : index
    %c0_117 = arith.constant 0 : index
    %c0_118 = arith.constant 0 : index
    %127 = vector.load %arg4[%c8_116, %c0_117, %c0_118] : memref<16x4x8xbf16, #tpu.memory_space<vmem>>, vector<1x4x8xbf16>
    %128 = vector.shape_cast %127 : vector<1x4x8xbf16> to vector<4x8xbf16>
    %c0_119 = arith.constant 0 : index
    %c127_120 = arith.constant 127 : index
    %129 = vector.load %arg8[%c0_119, %c127_120] : memref<8x640xbf16, #tpu.memory_space<vmem>>, vector<8x384xbf16>
    %cst_121 = arith.constant dense<0.000000e+00> : vector<4x384xf32>
    %130 = tpu.matmul %128, %129, %cst_121 {dimension_numbers = #tpu.dot_dimension_numbers<[1], [0], [0], [1], [0, 0, 1, 1], [], []>} : vector<4x8xbf16>, vector<8x384xbf16>, vector<4x384xf32> -> vector<4x384xf32>
    %131 = arith.addf %126, %130 : vector<4x384xf32>
    %c9 = arith.constant 9 : index
    %c0_122 = arith.constant 0 : index
    %c0_123 = arith.constant 0 : index
    %132 = vector.load %arg4[%c9, %c0_122, %c0_123] : memref<16x4x8xbf16, #tpu.memory_space<vmem>>, vector<1x4x8xbf16>
    %133 = vector.shape_cast %132 : vector<1x4x8xbf16> to vector<4x8xbf16>
    %c0_124 = arith.constant 0 : index
    %c128_125 = arith.constant 128 : index
    %134 = vector.load %arg8[%c0_124, %c128_125] : memref<8x640xbf16, #tpu.memory_space<vmem>>, vector<8x384xbf16>
    %cst_126 = arith.constant dense<0.000000e+00> : vector<4x384xf32>
    %135 = tpu.matmul %133, %134, %cst_126 {dimension_numbers = #tpu.dot_dimension_numbers<[1], [0], [0], [1], [0, 0, 1, 1], [], []>} : vector<4x8xbf16>, vector<8x384xbf16>, vector<4x384xf32> -> vector<4x384xf32>
    %136 = arith.addf %131, %135 : vector<4x384xf32>
    %c10 = arith.constant 10 : index
    %c0_127 = arith.constant 0 : index
    %c0_128 = arith.constant 0 : index
    %137 = vector.load %arg4[%c10, %c0_127, %c0_128] : memref<16x4x8xbf16, #tpu.memory_space<vmem>>, vector<1x4x8xbf16>
    %138 = vector.shape_cast %137 : vector<1x4x8xbf16> to vector<4x8xbf16>
    %c0_129 = arith.constant 0 : index
    %c145_130 = arith.constant 145 : index
    %139 = vector.load %arg8[%c0_129, %c145_130] : memref<8x640xbf16, #tpu.memory_space<vmem>>, vector<8x384xbf16>
    %cst_131 = arith.constant dense<0.000000e+00> : vector<4x384xf32>
    %140 = tpu.matmul %138, %139, %cst_131 {dimension_numbers = #tpu.dot_dimension_numbers<[1], [0], [0], [1], [0, 0, 1, 1], [], []>} : vector<4x8xbf16>, vector<8x384xbf16>, vector<4x384xf32> -> vector<4x384xf32>
    %141 = arith.addf %136, %140 : vector<4x384xf32>
    %c11 = arith.constant 11 : index
    %c0_132 = arith.constant 0 : index
    %c0_133 = arith.constant 0 : index
    %142 = vector.load %arg4[%c11, %c0_132, %c0_133] : memref<16x4x8xbf16, #tpu.memory_space<vmem>>, vector<1x4x8xbf16>
    %143 = vector.shape_cast %142 : vector<1x4x8xbf16> to vector<4x8xbf16>
    %c0_134 = arith.constant 0 : index
    %c146_135 = arith.constant 146 : index
    %144 = vector.load %arg8[%c0_134, %c146_135] : memref<8x640xbf16, #tpu.memory_space<vmem>>, vector<8x384xbf16>
    %cst_136 = arith.constant dense<0.000000e+00> : vector<4x384xf32>
    %145 = tpu.matmul %143, %144, %cst_136 {dimension_numbers = #tpu.dot_dimension_numbers<[1], [0], [0], [1], [0, 0, 1, 1], [], []>} : vector<4x8xbf16>, vector<8x384xbf16>, vector<4x384xf32> -> vector<4x384xf32>
    %146 = arith.addf %141, %145 : vector<4x384xf32>
    %c0_137 = arith.constant 0 : index
    %c0_138 = arith.constant 0 : index
    %147 = vector.load %arg5[%c0_137, %c0_138] : memref<4x1xf32, #tpu.memory_space<vmem>>, vector<4x1xf32>
    %148 = vector.broadcast %147 : vector<4x1xf32> to vector<4x384xf32>
    %149 = arith.addf %146, %148 : vector<4x384xf32>
    %cst_139 = arith.constant 0.000000e+00 : f32
    %150 = vector.broadcast %cst_139 : f32 to vector<4x384xf32>
    %151 = arith.maximumf %149, %150 : vector<4x384xf32>
    %c0_140 = arith.constant 0 : index
    %c8_141 = arith.constant 8 : index
    %c0_142 = arith.constant 0 : index
    %152 = vector.load %arg7[%c0_140, %c8_141, %c0_142] : memref<1x16x384xf32, #tpu.memory_space<vmem>>, vector<1x4x384xf32>
    %153 = vector.shape_cast %152 : vector<1x4x384xf32> to vector<4x384xf32>
    %154 = vector.shape_cast %151 : vector<4x384xf32> to vector<1x4x384xf32>
    tpu.vector_store %arg7[%c0_140, %c8_141, %c0_142], %154 {strides = array<i32>} : memref<1x16x384xf32, #tpu.memory_space<vmem>>, vector<1x4x384xf32>,
    %cst_143 = arith.constant 0.000000e+00 : f32
    %155 = vector.broadcast %cst_143 : f32 to vector<4x384xf32>
    %c12 = arith.constant 12 : index
    %c0_144 = arith.constant 0 : index
    %c0_145 = arith.constant 0 : index
    %156 = vector.load %arg4[%c12, %c0_144, %c0_145] : memref<16x4x8xbf16, #tpu.memory_space<vmem>>, vector<1x4x8xbf16>
    %157 = vector.shape_cast %156 : vector<1x4x8xbf16> to vector<4x8xbf16>
    %c0_146 = arith.constant 0 : index
    %c128_147 = arith.constant 128 : index
    %158 = vector.load %arg8[%c0_146, %c128_147] : memref<8x640xbf16, #tpu.memory_space<vmem>>, vector<8x384xbf16>
    %cst_148 = arith.constant dense<0.000000e+00> : vector<4x384xf32>
    %159 = tpu.matmul %157, %158, %cst_148 {dimension_numbers = #tpu.dot_dimension_numbers<[1], [0], [0], [1], [0, 0, 1, 1], [], []>} : vector<4x8xbf16>, vector<8x384xbf16>, vector<4x384xf32> -> vector<4x384xf32>
    %160 = arith.addf %155, %159 : vector<4x384xf32>
    %c13 = arith.constant 13 : index
    %c0_149 = arith.constant 0 : index
    %c0_150 = arith.constant 0 : index
    %161 = vector.load %arg4[%c13, %c0_149, %c0_150] : memref<16x4x8xbf16, #tpu.memory_space<vmem>>, vector<1x4x8xbf16>
    %162 = vector.shape_cast %161 : vector<1x4x8xbf16> to vector<4x8xbf16>
    %c0_151 = arith.constant 0 : index
    %c129_152 = arith.constant 129 : index
    %163 = vector.load %arg8[%c0_151, %c129_152] : memref<8x640xbf16, #tpu.memory_space<vmem>>, vector<8x384xbf16>
    %cst_153 = arith.constant dense<0.000000e+00> : vector<4x384xf32>
    %164 = tpu.matmul %162, %163, %cst_153 {dimension_numbers = #tpu.dot_dimension_numbers<[1], [0], [0], [1], [0, 0, 1, 1], [], []>} : vector<4x8xbf16>, vector<8x384xbf16>, vector<4x384xf32> -> vector<4x384xf32>
    %165 = arith.addf %160, %164 : vector<4x384xf32>
    %c14 = arith.constant 14 : index
    %c0_154 = arith.constant 0 : index
    %c0_155 = arith.constant 0 : index
    %166 = vector.load %arg4[%c14, %c0_154, %c0_155] : memref<16x4x8xbf16, #tpu.memory_space<vmem>>, vector<1x4x8xbf16>
    %167 = vector.shape_cast %166 : vector<1x4x8xbf16> to vector<4x8xbf16>
    %c0_156 = arith.constant 0 : index
    %c146_157 = arith.constant 146 : index
    %168 = vector.load %arg8[%c0_156, %c146_157] : memref<8x640xbf16, #tpu.memory_space<vmem>>, vector<8x384xbf16>
    %cst_158 = arith.constant dense<0.000000e+00> : vector<4x384xf32>
    %169 = tpu.matmul %167, %168, %cst_158 {dimension_numbers = #tpu.dot_dimension_numbers<[1], [0], [0], [1], [0, 0, 1, 1], [], []>} : vector<4x8xbf16>, vector<8x384xbf16>, vector<4x384xf32> -> vector<4x384xf32>
    %170 = arith.addf %165, %169 : vector<4x384xf32>
    %c15 = arith.constant 15 : index
    %c0_159 = arith.constant 0 : index
    %c0_160 = arith.constant 0 : index
    %171 = vector.load %arg4[%c15, %c0_159, %c0_160] : memref<16x4x8xbf16, #tpu.memory_space<vmem>>, vector<1x4x8xbf16>
    %172 = vector.shape_cast %171 : vector<1x4x8xbf16> to vector<4x8xbf16>
    %c0_161 = arith.constant 0 : index
    %c147_162 = arith.constant 147 : index
    %173 = vector.load %arg8[%c0_161, %c147_162] : memref<8x640xbf16, #tpu.memory_space<vmem>>, vector<8x384xbf16>
    %cst_163 = arith.constant dense<0.000000e+00> : vector<4x384xf32>
    %174 = tpu.matmul %172, %173, %cst_163 {dimension_numbers = #tpu.dot_dimension_numbers<[1], [0], [0], [1], [0, 0, 1, 1], [], []>} : vector<4x8xbf16>, vector<8x384xbf16>, vector<4x384xf32> -> vector<4x384xf32>
    %175 = arith.addf %170, %174 : vector<4x384xf32>
    %c0_164 = arith.constant 0 : index
    %c0_165 = arith.constant 0 : index
    %176 = vector.load %arg5[%c0_164, %c0_165] : memref<4x1xf32, #tpu.memory_space<vmem>>, vector<4x1xf32>
    %177 = vector.broadcast %176 : vector<4x1xf32> to vector<4x384xf32>
    %178 = arith.addf %175, %177 : vector<4x384xf32>
    %cst_166 = arith.constant 0.000000e+00 : f32
    %179 = vector.broadcast %cst_166 : f32 to vector<4x384xf32>
    %180 = arith.maximumf %178, %179 : vector<4x384xf32>
    %c0_167 = arith.constant 0 : index
    %c12_168 = arith.constant 12 : index
    %c0_169 = arith.constant 0 : index
    %181 = vector.load %arg7[%c0_167, %c12_168, %c0_169] : memref<1x16x384xf32, #tpu.memory_space<vmem>>, vector<1x4x384xf32>
    %182 = vector.shape_cast %181 : vector<1x4x384xf32> to vector<4x384xf32>
    %183 = vector.shape_cast %180 : vector<4x384xf32> to vector<1x4x384xf32>
    tpu.vector_store %arg7[%c0_167, %c12_168, %c0_169], %183 {strides = array<i32>} : memref<1x16x384xf32, #tpu.memory_space<vmem>>, vector<1x4x384xf32>,
    return
  }
  func.func @transform_0(%arg0: i32) -> (i32, i32, i32) {
    %c0_i32 = arith.constant 0 : i32
    %c0_i32_0 = arith.constant 0 : i32
    %c0_i32_1 = arith.constant 0 : i32
    return %arg0, %c0_i32, %c0_i32_0 : i32, i32, i32
  }
  func.func @transform_1(%arg0: i32) -> (i32, i32, i32) {
    %c0_i32 = arith.constant 0 : i32
    %c0_i32_0 = arith.constant 0 : i32
    %c0_i32_1 = arith.constant 0 : i32
    %c0_i32_2 = arith.constant 0 : i32
    return %c0_i32, %c0_i32_0, %c0_i32_1 : i32, i32, i32
  }
  func.func @transform_2(%arg0: i32) -> (i32, i32) {
    %c0_i32 = arith.constant 0 : i32
    %c0_i32_0 = arith.constant 0 : i32
    %c0_i32_1 = arith.constant 0 : i32
    return %c0_i32, %c0_i32_0 : i32, i32
  }
  func.func @transform_3(%arg0: i32) -> (i32, i32, i32) {
    %c0_i32 = arith.constant 0 : i32
    %c0_i32_0 = arith.constant 0 : i32
    %c0_i32_1 = arith.constant 0 : i32
    %c0_i32_2 = arith.constant 0 : i32
    return %c0_i32, %c0_i32_0, %c0_i32_1 : i32, i32, i32
  }
  func.func @transform_4(%arg0: i32) -> (i32, i32) {
    %c0_i32 = arith.constant 0 : i32
    %c0_i32_0 = arith.constant 0 : i32
    %c0_i32_1 = arith.constant 0 : i32
    return %c0_i32, %c0_i32_0 : i32, i32
  }
  func.func @transform_5(%arg0: i32) -> (i32, i32) {
    %c0_i32 = arith.constant 0 : i32
    %c0_i32_0 = arith.constant 0 : i32
    %c0_i32_1 = arith.constant 0 : i32
    return %c0_i32, %c0_i32_0 : i32, i32
  }
  func.func @transform_6(%arg0: i32) -> (i32, i32, i32) {
    %c0_i32 = arith.constant 0 : i32
    %c0_i32_0 = arith.constant 0 : i32
    %c0_i32_1 = arith.constant 0 : i32
    return %arg0, %c0_i32, %c0_i32_0 : i32, i32, i32
  }
}

</mosaic_0001>

<llo_original>
// kernel: tile.1
$region0: #{tile.1}
  #allocation0 [shape = 's32[1]{0}', space=sflag, size = 0x4, scoped, tag = 'scoped memory for tile.1']
  %s0 = inlined_call_operand.vmem [shape: f32[384], index: 0, kind: input, shape index: {}]
  %s1 = inlined_call_operand.vmem [shape: f32[1,384], index: 1, kind: output, shape index: {}]
  // Predicated region
  $region2: #{tile.1} parent=0 // pred_check
    _
  $region3: #{tile.1} parent=0 // pred_check_branch
    %3 = sbr.rel (0) target = $region5
  $region4: #{tile.1} parent=0 // pred_region
    _
  $region5: #{tile.1} parent=0 // pred_fallthru
    _
  %v4 = vld [vmem:[%s0] ss:$0 sm:$0xff]
  %5 = vst [vmem:[%s1] sm:$0x1] %v4
  %s6 = scalar_lea.vmem %s0, 1
  %v7 = vld [vmem:[%s6] ss:$0 sm:$0xff]
  %s8 = scalar_lea.vmem %s1, 1
  %9 = vst [vmem:[%s8] sm:$0x1] %v7
  %s10 = scalar_lea.vmem %s0, 2
  %v11 = vld [vmem:[%s10] ss:$0 sm:$0xff]
  %s12 = scalar_lea.vmem %s1, 2
  %13 = vst [vmem:[%s12] sm:$0x1] %v11

// kernel: decoder_block_v2.1
$region0: #{decoder_block_v2.1}
  #allocation0 [shape = 'u32[]', space=smem, size = 0x4, offset = 0x4, fixed_abs, tag = 'smem constant byte address 0x4 - core index']
  #allocation1 [shape = 'u32[144,128]{1,0:T(1,128)}', space=vmem, size = 0x12000, scoped, tag = 'internal scratch']
  #allocation2 [shape = 'bf16[8,640]{1,0:T(8,128)(2,1)}', space=vmem, size = 0x2800, scoped, tag = 'scratch operand']
  %s0 = inlined_call_operand.vmem [shape: bf16[2,4,640], index: 0, kind: input, shape index: {}]
  %s1 = inlined_call_operand.vmem [shape: bf16[9,8,4], index: 1, kind: input, shape index: {}]
  %s2 = inlined_call_operand.vmem [shape: f32[8,1], index: 2, kind: input, shape index: {}]
  %s3 = inlined_call_operand.vmem [shape: bf16[16,4,8], index: 3, kind: input, shape index: {}]
  %s4 = inlined_call_operand.vmem [shape: f32[4,1], index: 4, kind: input, shape index: {}]
  %s5 = inlined_call_operand.vmem [shape: f32[1,384], index: 5, kind: input, shape index: {}]
  %s6 = inlined_call_operand.vmem [shape: f32[2,16,384], index: 6, kind: output, shape index: {}]
  %s7 = sld [smem:[#allocation0]]
  $region61: #{decoder_block_v2.1} parent=0
    _
  %s9 = ssub.s32 1, %s7
  %s10 = scalar_select 0, %s9, %s7
  loop: start=0, step=1, limit=4
  $region2: #{decoder_block_v2.1} parent=0 // loop_pre_header
    _
  $region3: #{decoder_block_v2.1} parent=0 // loop_header
    %s12 = sphi 0, %s16
    %p13 = scmp.ge.s32.totalorder %s12, 4
    %s22 = sphi 0, %s24
    %s25 = sphi 0, %s22
    %s26 = sphi 0, %s25
    %s42 = sphi 0, %s26
    %s46 = sphi 0, %s46
    %s48 = sphi 0, %s46
    %s49 = sphi 0, %s48
    %s63 = sphi 0, %s49
    %s67 = sphi 0, %s67
    %s69 = sphi 0, %s67
    %s70 = sphi 0, %s69
    %s84 = sphi 0, %s70
    %s88 = sphi 0, %s88
    %s90 = sphi 0, %s88
    %s91 = sphi 0, %s90
    %s105 = sphi 0, %s91
    %s109 = sphi 0, %s109
    %s111 = sphi 0, %s109
    %s112 = sphi 0, %s111
    %s126 = sphi 0, %s112
    %s130 = sphi 0, %s130
    %s132 = sphi 0, %s130
    %s133 = sphi 0, %s132
    %s147 = sphi 0, %s133
    %s153 = sphi 0, %s155
    %s156 = sphi 0, %s153
    %s157 = sphi 0, %s156
    %s173 = sphi 0, %s157
  $region4: #{decoder_block_v2.1} parent=0 // loop_header_branch
    %15 = sbr.rel (%p13) target = $region8
  $region5: #{decoder_block_v2.1} parent=0 // loop_body
    %s17 = ssub.s32 %s12, 1
    %s18 = ssub.s32 %s12, 2
    %s19 = sadd.s32 %s12, 1
    %s20 = ssub.s32 %s12, %s19
    %p21 = scmp.eq.s32.totalorder %s20, 0
    %s23 = sadd.s32 %s22, 1
    %s24 = scalar_select %p21, %s22, %s23
    %p27 = pneg %p21
    %p28 = scmp.eq.s32.totalorder %s12, 1
    %p29 = por %p27, %p28
    %p30 = scmp.ne.s32.totalorder %s22, %s25
    %p31 = scmp.eq.s32.totalorder %s12, 0
    %p32 = por %p30, %p31
    %p33 = scmp.ne.s32.totalorder %s22, %s25
    %p34 = scmp.eq.s32.totalorder %s17, 1
    %p35 = por %p33, %p34
    %p36 = scmp.ne.s32.totalorder %s25, %s26
    %p37 = scmp.eq.s32.totalorder %s17, 0
    %p38 = por %p36, %p37
    %p39 = scmp.ne.s32.totalorder %s25, %s26
    %p40 = scmp.eq.s32.totalorder %s18, 1
    %p41 = por %p39, %p40
    %p43 = scmp.ne.s32.totalorder %s26, %s42
    %p44 = scmp.eq.s32.totalorder %s18, 0
    %p45 = por %p43, %p44
    %s47 = sadd.s32 %s46, 1
    %p50 = scmp.eq.s32.totalorder %s12, 1
    %p51 = scmp.ne.s32.totalorder %s46, %s48
    %p52 = scmp.eq.s32.totalorder %s12, 0
    %p53 = por %p51, %p52
    %p54 = scmp.ne.s32.totalorder %s46, %s48
    %p55 = scmp.eq.s32.totalorder %s17, 1
    %p56 = por %p54, %p55
    %p57 = scmp.ne.s32.totalorder %s48, %s49
    %p58 = scmp.eq.s32.totalorder %s17, 0
    %p59 = por %p57, %p58
    %p60 = scmp.ne.s32.totalorder %s48, %s49
    %p61 = scmp.eq.s32.totalorder %s18, 1
    %p62 = por %p60, %p61
    %p64 = scmp.ne.s32.totalorder %s49, %s63
    %p65 = scmp.eq.s32.totalorder %s18, 0
    %p66 = por %p64, %p65
    %s68 = sadd.s32 %s67, 1
    %p71 = scmp.eq.s32.totalorder %s12, 1
    %p72 = scmp.ne.s32.totalorder %s67, %s69
    %p73 = scmp.eq.s32.totalorder %s12, 0
    %p74 = por %p72, %p73
    %p75 = scmp.ne.s32.totalorder %s67, %s69
    %p76 = scmp.eq.s32.totalorder %s17, 1
    %p77 = por %p75, %p76
    %p78 = scmp.ne.s32.totalorder %s69, %s70
    %p79 = scmp.eq.s32.totalorder %s17, 0
    %p80 = por %p78, %p79
    %p81 = scmp.ne.s32.totalorder %s69, %s70
    %p82 = scmp.eq.s32.totalorder %s18, 1
    %p83 = por %p81, %p82
    %p85 = scmp.ne.s32.totalorder %s70, %s84
    %p86 = scmp.eq.s32.totalorder %s18, 0
    %p87 = por %p85, %p86
    %s89 = sadd.s32 %s88, 1
    %p92 = scmp.eq.s32.totalorder %s12, 1
    %p93 = scmp.ne.s32.totalorder %s88, %s90
    %p94 = scmp.eq.s32.totalorder %s12, 0
    %p95 = por %p93, %p94
    %p96 = scmp.ne.s32.totalorder %s88, %s90
    %p97 = scmp.eq.s32.totalorder %s17, 1
    %p98 = por %p96, %p97
    %p99 = scmp.ne.s32.totalorder %s90, %s91
    %p100 = scmp.eq.s32.totalorder %s17, 0
    %p101 = por %p99, %p100
    %p102 = scmp.ne.s32.totalorder %s90, %s91
    %p103 = scmp.eq.s32.totalorder %s18, 1
    %p104 = por %p102, %p103
    %p106 = scmp.ne.s32.totalorder %s91, %s105
    %p107 = scmp.eq.s32.totalorder %s18, 0
    %p108 = por %p106, %p107
    %s110 = sadd.s32 %s109, 1
    %p113 = scmp.eq.s32.totalorder %s12, 1
    %p114 = scmp.ne.s32.totalorder %s109, %s111
    %p115 = scmp.eq.s32.totalorder %s12, 0
    %p116 = por %p114, %p115
    %p117 = scmp.ne.s32.totalorder %s109, %s111
    %p118 = scmp.eq.s32.totalorder %s17, 1
    %p119 = por %p117, %p118
    %p120 = scmp.ne.s32.totalorder %s111, %s112
    %p121 = scmp.eq.s32.totalorder %s17, 0
    %p122 = por %p120, %p121
    %p123 = scmp.ne.s32.totalorder %s111, %s112
    %p124 = scmp.eq.s32.totalorder %s18, 1
    %p125 = por %p123, %p124
    %p127 = scmp.ne.s32.totalorder %s112, %s126
    %p128 = scmp.eq.s32.totalorder %s18, 0
    %p129 = por %p127, %p128
    %s131 = sadd.s32 %s130, 1
    %p134 = scmp.eq.s32.totalorder %s12, 1
    %p135 = scmp.ne.s32.totalorder %s130, %s132
    %p136 = scmp.eq.s32.totalorder %s12, 0
    %p137 = por %p135, %p136
    %p138 = scmp.ne.s32.totalorder %s130, %s132
    %p139 = scmp.eq.s32.totalorder %s17, 1
    %p140 = por %p138, %p139
    %p141 = scmp.ne.s32.totalorder %s132, %s133
    %p142 = scmp.eq.s32.totalorder %s17, 0
    %p143 = por %p141, %p142
    %p144 = scmp.ne.s32.totalorder %s132, %s133
    %p145 = scmp.eq.s32.totalorder %s18, 1
    %p146 = por %p144, %p145
    %p148 = scmp.ne.s32.totalorder %s133, %s147
    %p149 = scmp.eq.s32.totalorder %s18, 0
    %p150 = por %p148, %p149
    %s151 = ssub.s32 %s12, %s19
    %p152 = scmp.eq.s32.totalorder %s151, 0
    %s154 = sadd.s32 %s153, 1
    %s155 = scalar_select %p152, %s153, %s154
    %p158 = pneg %p152
    %p159 = scmp.eq.s32.totalorder %s12, 1
    %p160 = por %p158, %p159
    %p161 = scmp.ne.s32.totalorder %s153, %s156
    %p162 = scmp.eq.s32.totalorder %s12, 0
    %p163 = por %p161, %p162
    %p164 = scmp.ne.s32.totalorder %s153, %s156
    %p165 = scmp.eq.s32.totalorder %s17, 1
    %p166 = por %p164, %p165
    %p167 = scmp.ne.s32.totalorder %s156, %s157
    %p168 = scmp.eq.s32.totalorder %s17, 0
    %p169 = por %p167, %p168
    %p170 = scmp.ne.s32.totalorder %s156, %s157
    %p171 = scmp.eq.s32.totalorder %s18, 1
    %p172 = por %p170, %p171
    %p174 = scmp.ne.s32.totalorder %s157, %s173
    %p175 = scmp.eq.s32.totalorder %s18, 0
    %p176 = por %p174, %p175
    %p177 = scmp.le.s32.totalorder 1, %s12
    %p178 = scmp.lt.s32.totalorder %s12, 3
    %p179 = pnand %p177, %p178
    %p180 = pneg %p179
    // Predicated region
    $region9: #{decoder_block_v2.1} parent=5 // pred_check
      _
    $region10: #{decoder_block_v2.1} parent=5 // pred_check_branch
      %182 = sbr.rel (%p179) target = $region12
    $region11: #{decoder_block_v2.1} parent=5 // pred_region
      %s183 = ssub.s32 %s12, 1
      // Predicated region
      $region13: #{decoder_block_v2.1} parent=11 // pred_check
        %p184 = pneg %p59
      $region14: #{decoder_block_v2.1} parent=11 // pred_check_branch
        %186 = sbr.rel (%p184) target = $region16
      $region15: #{decoder_block_v2.1} parent=11 // pred_region
        _
      $region16: #{decoder_block_v2.1} parent=11 // pred_fallthru
        _
      // Predicated region
      $region17: #{decoder_block_v2.1} parent=11 // pred_check
        %p187 = pneg %p80
      $region18: #{decoder_block_v2.1} parent=11 // pred_check_branch
        %189 = sbr.rel (%p187) target = $region20
      $region19: #{decoder_block_v2.1} parent=11 // pred_region
        _
      $region20: #{decoder_block_v2.1} parent=11 // pred_fallthru
        _
      // Predicated region
      $region21: #{decoder_block_v2.1} parent=11 // pred_check
        %p190 = pneg %p101
      $region22: #{decoder_block_v2.1} parent=11 // pred_check_branch
        %192 = sbr.rel (%p190) target = $region24
      $region23: #{decoder_block_v2.1} parent=11 // pred_region
        _
      $region24: #{decoder_block_v2.1} parent=11 // pred_fallthru
        _
      // Predicated region
      $region25: #{decoder_block_v2.1} parent=11 // pred_check
        %p193 = pneg %p122
      $region26: #{decoder_block_v2.1} parent=11 // pred_check_branch
        %195 = sbr.rel (%p193) target = $region28
      $region27: #{decoder_block_v2.1} parent=11 // pred_region
        _
      $region28: #{decoder_block_v2.1} parent=11 // pred_fallthru
        _
      // Predicated region
      $region29: #{decoder_block_v2.1} parent=11 // pred_check
        %p196 = pneg %p143
      $region30: #{decoder_block_v2.1} parent=11 // pred_check_branch
        %198 = sbr.rel (%p196) target = $region32
      $region31: #{decoder_block_v2.1} parent=11 // pred_region
        _
      $region32: #{decoder_block_v2.1} parent=11 // pred_fallthru
        _
    $region12: #{decoder_block_v2.1} parent=5 // pred_fallthru
      _
    %p199 = scmp.lt.s32.totalorder %s12, 2
    // Predicated region
    $region33: #{decoder_block_v2.1} parent=5 // pred_check
      %p200 = pneg %p199
    $region34: #{decoder_block_v2.1} parent=5 // pred_check_branch
      %202 = sbr.rel (%p200) target = $region36
    $region35: #{decoder_block_v2.1} parent=5 // pred_region
      // Predicated region
      $region37: #{decoder_block_v2.1} parent=35 // pred_check
        %p203 = pneg %p32
      $region38: #{decoder_block_v2.1} parent=35 // pred_check_branch
        %205 = sbr.rel (%p203) target = $region40
      $region39: #{decoder_block_v2.1} parent=35 // pred_region
        %p206 = scmp.lt.s32.totalorder %s12, 1
        %s207 = scalar_select %p206, %s12, 1
        %s208 = smul.addr %s207, 5
        %s209 = smul.addr %s208, 2
        %s210 = scalar_lea.vmem %s0, %s209
      $region40: #{decoder_block_v2.1} parent=35 // pred_fallthru
        _
    $region36: #{decoder_block_v2.1} parent=5 // pred_fallthru
      _
    %p211 = scmp.le.s32.totalorder 1, %s12
    %p212 = scmp.lt.s32.totalorder %s12, 3
    %p213 = pnand %p211, %p212
    %p214 = pneg %p213
    // Predicated region
    $region41: #{decoder_block_v2.1} parent=5 // pred_check
      _
    $region42: #{decoder_block_v2.1} parent=5 // pred_check_branch
      %216 = sbr.rel (%p213) target = $region44
    $region43: #{decoder_block_v2.1} parent=5 // pred_region
      %s217 = ssub.s32 %s12, 1
      %p218 = scmp.lt.s32.totalorder %s17, 1
      %s219 = scalar_select %p218, %s17, 1
      %s220 = smul.addr %s219, 5
      %s221 = smul.addr %s220, 2
      %s222 = scalar_lea.vmem %s0, %s221
      %p223 = pneg %p38
      %p224 = pneg %p35
      %p225 = pneg %p59
      %p226 = pneg %p56
      %p227 = pneg %p80
      %p228 = pneg %p77
      %p229 = pneg %p101
      %p230 = pneg %p98
      %p231 = pneg %p122
      %p232 = pneg %p119
      %p233 = pneg %p143
      %p234 = pneg %p140
      %p235 = pneg %p169
      %p236 = pneg %p166
      %p237 = scmp.lt.s32.totalorder %s17, 1
      %s238 = scalar_select %p237, %s17, 1
      %s239 = smul.addr %s238, 6
      %s240 = smul.addr %s239, 8
      %s241 = scalar_lea.vmem %s6, %s240
      %p242 = scmp.lt.s32.totalorder %s17, 1
      %s243 = scalar_select %p242, %s17, 1
      %s244 = smul.addr %s243, 5
      %s245 = smul.addr %s244, 2
      %s246 = scalar_lea.vmem %s0, %s245
      %p247 = scmp.lt.s32.totalorder %s17, 1
      %s248 = scalar_select %p247, %s17, 1
      %s249 = smul.addr %s248, 6
      %s250 = smul.addr %s249, 8
      %s251 = scalar_lea.vmem %s6, %s250
      %p253 = scmp.eq.s32.totalorder %s17, 0
      // Predicated region
      $region45: #{decoder_block_v2.1} parent=43 // pred_check
        %p254 = pneg %p253
      $region46: #{decoder_block_v2.1} parent=43 // pred_check_branch
        %256 = sbr.rel (%p254) target = $region48
      $region47: #{decoder_block_v2.1} parent=43 // pred_region
        %257 = vst [vmem:[#allocation2] sm:$0xf] 0
        %258 = vst [vmem:[#allocation2 + $0x10] sm:$0xf] 0
      $region48: #{decoder_block_v2.1} parent=43 // pred_fallthru
        _
      %v259 = vld [vmem:[%s1] sm:$0xf]
      %v260 = vld [vmem:[%s246] sm:$0xff]
      %s261 = scalar_lea.vmem %s1, 4
      %v262 = vld [vmem:[%s261] sm:$0xf]
      %v264 = vcombine.high %v260, %v260
      %v266 = vunpack.c.l.s4 1983009808
      %v267 = vunpack.c.0.s8 %v266
      %v268 = vlaneseq
      %v269 = vshrl.u32 %v268, 7
      %v270 = vsub.s32 %v267, %v269
      %v271 = vrot.slane %v260, %v270
      %v273 = vunpack.c.l.s4 1983009808
      %v274 = vunpack.c.0.s8 %v273
      %v275 = vlaneseq
      %v276 = vshrl.u32 %v275, 7
      %v277 = vsub.s32 %v274, %v276
      %v278 = vrot.slane %v264, %v277
      %v279 = vcombine.high %v271, %v271
      %v280 = vcombine.high %v278, %v278
      %281 = vrot.lane.b32.xlu0 %v271, 18
      %v282 = vpop.permute.xlu0 %281
      %283 = vrot.lane.b32.xlu0 %v279, 18
      %v284 = vpop.permute.xlu0 %283
      %285 = vrot.lane.b32.xlu0 %v278, 18
      %v286 = vpop.permute.xlu0 %285
      %287 = vrot.lane.b32.xlu0 %v280, 18
      %v288 = vpop.permute.xlu0 %287
      %vm289 = vcmask 146432
      %v290 = vsel %vm289, %v282, %v284
      %v291 = vsel %vm289, %v284, %v286
      %v292 = vsel %vm289, %v286, %v288
      %vm293 = vcmask 31744
      %v295 = vsel %vm293, %v262, 0
      %vm297 = vcmask 1041408
      %v299 = vsel %vm297, %v290, 0
      %v302 = vsel %vm297, %v291, 0
      %v305 = vsel %vm297, %v292, 0
      %307 = vmatprep.subr.bf16.mxu0 %v302
      %308 = vmatpush1.bf16.msra.mxu0 %v299
      %309 = vmatprep.subr.bf16.mxu0 0
      %310 = vmatpush1.bf16.msra.mxu0 0
      %311 = vmatprep.subr.bf16.mxu0 0
      %312 = vmatpush1.bf16.msra.mxu0 0
      %313 = vmatprep.subr.bf16.mxu0 0
      %314 = vmatpush1.bf16.msra.mxu0 0
      %315 = vmatprep.subr.bf16.mxu0 0
      %316 = vmatpush1.bf16.msra.mxu0 0
      %317 = vmatprep.subr.bf16.mxu0 0
      %318 = vmatpush1.bf16.msra.mxu0 0
      %319 = vmatprep.subr.bf16.mxu0 0
      %320 = vmatpush1.bf16.msra.mxu0 0
      %321 = vmatprep.subr.bf16.mxu0 0
      %322 = vmatpush1.bf16.msra.mxu0 0
      %323 = vmatprep.subr.bf16.mxu0 0
      %324 = vmatpush1.bf16.msra.mxu0 0
      %325 = vmatprep.subr.bf16.mxu0 0
      %326 = vmatpush1.bf16.msra.mxu0 0
      %327 = vmatprep.subr.bf16.mxu0 0
      %328 = vmatpush1.bf16.msra.mxu0 0
      %329 = vmatprep.subr.bf16.mxu0 0
      %330 = vmatpush1.bf16.msra.mxu0 0
      %331 = vmatprep.subr.bf16.mxu0 0
      %332 = vmatpush1.bf16.msra.mxu0 0
      %333 = vmatprep.subr.bf16.mxu0 0
      %334 = vmatpush1.bf16.msra.mxu0 0
      %335 = vmatprep.subr.bf16.mxu0 0
      %336 = vmatpush1.bf16.msra.mxu0 0
      %337 = vmatprep.subr.bf16.mxu0 0
      %338 = vmatpush1.bf16.msra.mxu0 0
      %339 = vmatprep.mubr.bf16.mxu0 0
      %340 = vmatmul.mubr.bf16.gmra.mrb[0].mxu0 %v295
      %v341 = vpop.f32.mrb[0].mxu0
      %v342 = vadd.f32 0.0, %v341
      %v343 = vpop.f32.mrb[0].mxu0
      %v344 = vadd.f32 0.0, %v343
      %v345 = vpop.f32.mrb[0].mxu0
      %v346 = vpop.f32.mrb[0].mxu0
      %347 = vdwg.mxu0
      %348 = vmatprep.subr.bf16.mxu0 0
      %349 = vmatpush1.bf16.msra.mxu0 %v305
      %350 = vmatprep.subr.bf16.mxu0 0
      %351 = vmatpush1.bf16.msra.mxu0 0
      %352 = vmatprep.subr.bf16.mxu0 0
      %353 = vmatpush1.bf16.msra.mxu0 0
      %354 = vmatprep.subr.bf16.mxu0 0
      %355 = vmatpush1.bf16.msra.mxu0 0
      %356 = vmatprep.subr.bf16.mxu0 0
      %357 = vmatpush1.bf16.msra.mxu0 0
      %358 = vmatprep.subr.bf16.mxu0 0
      %359 = vmatpush1.bf16.msra.mxu0 0
      %360 = vmatprep.subr.bf16.mxu0 0
      %361 = vmatpush1.bf16.msra.mxu0 0
      %362 = vmatprep.subr.bf16.mxu0 0
      %363 = vmatpush1.bf16.msra.mxu0 0
      %364 = vmatprep.subr.bf16.mxu0 0
      %365 = vmatpush1.bf16.msra.mxu0 0
      %366 = vmatprep.subr.bf16.mxu0 0
      %367 = vmatpush1.bf16.msra.mxu0 0
      %368 = vmatprep.subr.bf16.mxu0 0
      %369 = vmatpush1.bf16.msra.mxu0 0
      %370 = vmatprep.subr.bf16.mxu0 0
      %371 = vmatpush1.bf16.msra.mxu0 0
      %372 = vmatprep.subr.bf16.mxu0 0
      %373 = vmatpush1.bf16.msra.mxu0 0
      %374 = vmatprep.subr.bf16.mxu0 0
      %375 = vmatpush1.bf16.msra.mxu0 0
      %376 = vmatprep.subr.bf16.mxu0 0
      %377 = vmatpush1.bf16.msra.mxu0 0
      %378 = vmatprep.subr.bf16.mxu0 0
      %379 = vmatpush1.bf16.msra.mxu0 0
      %380 = vmatprep.mubr.bf16.mxu0 0
      %381 = vmatmul.mubr.bf16.gmra.mrb[0].mxu0 %v295
      %v382 = vpop.f32.mrb[0].mxu0
      %v383 = vadd.f32 0.0, %v382
      %v384 = vpop.f32.mrb[0].mxu0
      %v385 = vpop.f32.mrb[0].mxu0
      %v386 = vpop.f32.mrb[0].mxu0
      %387 = vdwg.mxu0
      %388 = vrot.lane.b32.xlu0 %v271, 19
      %v389 = vpop.permute.xlu0 %388
      %390 = vrot.lane.b32.xlu0 %v279, 19
      %v391 = vpop.permute.xlu0 %390
      %392 = vrot.lane.b32.xlu0 %v278, 19
      %v393 = vpop.permute.xlu0 %392
      %394 = vrot.lane.b32.xlu0 %v280, 19
      %v395 = vpop.permute.xlu0 %394
      %vm396 = vcmask 154624
      %v397 = vsel %vm396, %v389, %v391
      %v398 = vsel %vm396, %v391, %v393
      %v399 = vsel %vm396, %v393, %v395
      %v401 = vsel %vm293, %v259, 0
      %v404 = vsel %vm297, %v397, 0
      %v407 = vsel %vm297, %v398, 0
      %v410 = vsel %vm297, %v399, 0
      %412 = vmatprep.subr.bf16.mxu0 %v407
      %413 = vmatpush1.bf16.msra.mxu0 %v404
      %414 = vmatprep.subr.bf16.mxu0 0
      %415 = vmatpush1.bf16.msra.mxu0 0
      %416 = vmatprep.subr.bf16.mxu0 0
      %417 = vmatpush1.bf16.msra.mxu0 0
      %418 = vmatprep.subr.bf16.mxu0 0
      %419 = vmatpush1.bf16.msra.mxu0 0
      %420 = vmatprep.subr.bf16.mxu0 0
      %421 = vmatpush1.bf16.msra.mxu0 0
      %422 = vmatprep.subr.bf16.mxu0 0
      %423 = vmatpush1.bf16.msra.mxu0 0
      %424 = vmatprep.subr.bf16.mxu0 0
      %425 = vmatpush1.bf16.msra.mxu0 0
      %426 = vmatprep.subr.bf16.mxu0 0
      %427 = vmatpush1.bf16.msra.mxu0 0
      %428 = vmatprep.subr.bf16.mxu0 0
      %429 = vmatpush1.bf16.msra.mxu0 0
      %430 = vmatprep.subr.bf16.mxu0 0
      %431 = vmatpush1.bf16.msra.mxu0 0
      %432 = vmatprep.subr.bf16.mxu0 0
      %433 = vmatpush1.bf16.msra.mxu0 0
      %434 = vmatprep.subr.bf16.mxu0 0
      %435 = vmatpush1.bf16.msra.mxu0 0
      %436 = vmatprep.subr.bf16.mxu0 0
      %437 = vmatpush1.bf16.msra.mxu0 0
      %438 = vmatprep.subr.bf16.mxu0 0
      %439 = vmatpush1.bf16.msra.mxu0 0
      %440 = vmatprep.subr.bf16.mxu0 0
      %441 = vmatpush1.bf16.msra.mxu0 0
      %442 = vmatprep.subr.bf16.mxu0 0
      %443 = vmatpush1.bf16.msra.mxu0 0
      %444 = vmatprep.mubr.bf16.mxu0 0
      %445 = vmatmul.mubr.bf16.gmra.mrb[0].mxu0 %v401
      %v446 = vpop.f32.mrb[0].mxu0
      %v447 = vadd.f32 %v342, %v446
      %v448 = vpop.f32.mrb[0].mxu0
      %v449 = vadd.f32 %v344, %v448
      %v450 = vpop.f32.mrb[0].mxu0
      %v451 = vpop.f32.mrb[0].mxu0
      %452 = vdwg.mxu0
      %453 = vmatprep.subr.bf16.mxu0 0
      %454 = vmatpush1.bf16.msra.mxu0 %v410
      %455 = vmatprep.subr.bf16.mxu0 0
      %456 = vmatpush1.bf16.msra.mxu0 0
      %457 = vmatprep.subr.bf16.mxu0 0
      %458 = vmatpush1.bf16.msra.mxu0 0
      %459 = vmatprep.subr.bf16.mxu0 0
      %460 = vmatpush1.bf16.msra.mxu0 0
      %461 = vmatprep.subr.bf16.mxu0 0
      %462 = vmatpush1.bf16.msra.mxu0 0
      %463 = vmatprep.subr.bf16.mxu0 0
      %464 = vmatpush1.bf16.msra.mxu0 0
      %465 = vmatprep.subr.bf16.mxu0 0
      %466 = vmatpush1.bf16.msra.mxu0 0
      %467 = vmatprep.subr.bf16.mxu0 0
      %468 = vmatpush1.bf16.msra.mxu0 0
      %469 = vmatprep.subr.bf16.mxu0 0
      %470 = vmatpush1.bf16.msra.mxu0 0
      %471 = vmatprep.subr.bf16.mxu0 0
      %472 = vmatpush1.bf16.msra.mxu0 0
      %473 = vmatprep.subr.bf16.mxu0 0
      %474 = vmatpush1.bf16.msra.mxu0 0
      %475 = vmatprep.subr.bf16.mxu0 0
      %476 = vmatpush1.bf16.msra.mxu0 0
      %477 = vmatprep.subr.bf16.mxu0 0
      %478 = vmatpush1.bf16.msra.mxu0 0
      %479 = vmatprep.subr.bf16.mxu0 0
      %480 = vmatpush1.bf16.msra.mxu0 0
      %481 = vmatprep.subr.bf16.mxu0 0
      %482 = vmatpush1.bf16.msra.mxu0 0
      %483 = vmatprep.subr.bf16.mxu0 0
      %484 = vmatpush1.bf16.msra.mxu0 0
      %485 = vmatprep.mubr.bf16.mxu0 0
      %486 = vmatmul.mubr.bf16.gmra.mrb[0].mxu0 %v401
      %v487 = vpop.f32.mrb[0].mxu0
      %v488 = vadd.f32 %v383, %v487
      %v489 = vpop.f32.mrb[0].mxu0
      %v490 = vpop.f32.mrb[0].mxu0
      %v491 = vpop.f32.mrb[0].mxu0
      %492 = vdwg.mxu0
      %s493 = scalar_lea.vmem %s1, 8
      %v494 = vld [vmem:[%s493] sm:$0xf]
      %v495 = vld [vmem:[%s246] sm:$0xff]
      %v497 = vcombine.high %v495, %v495
      %v499 = vunpack.c.l.s4 1983009808
      %v500 = vunpack.c.0.s8 %v499
      %v501 = vlaneseq
      %v502 = vshrl.u32 %v501, 7
      %v503 = vsub.s32 %v500, %v502
      %v504 = vrot.slane %v495, %v503
      %v506 = vunpack.c.l.s4 1983009808
      %v507 = vunpack.c.0.s8 %v506
      %v508 = vlaneseq
      %v509 = vshrl.u32 %v508, 7
      %v510 = vsub.s32 %v507, %v509
      %v511 = vrot.slane %v497, %v510
      %v512 = vcombine.high %v504, %v504
      %v513 = vcombine.high %v511, %v511
      %514 = vrot.lane.b32.xlu0 %v504, 17
      %v515 = vpop.permute.xlu0 %514
      %516 = vrot.lane.b32.xlu0 %v512, 17
      %v517 = vpop.permute.xlu0 %516
      %518 = vrot.lane.b32.xlu0 %v511, 17
      %v519 = vpop.permute.xlu0 %518
      %520 = vrot.lane.b32.xlu0 %v513, 17
      %v521 = vpop.permute.xlu0 %520
      %vm522 = vcmask 138240
      %v523 = vsel %vm522, %v515, %v517
      %v524 = vsel %vm522, %v517, %v519
      %v525 = vsel %vm522, %v519, %v521
      %v527 = vsel %vm293, %v494, 0
      %v530 = vsel %vm297, %v523, 0
      %v533 = vsel %vm297, %v524, 0
      %v536 = vsel %vm297, %v525, 0
      %538 = vmatprep.subr.bf16.mxu0 %v533
      %539 = vmatpush1.bf16.msra.mxu0 %v530
      %540 = vmatprep.subr.bf16.mxu0 0
      %541 = vmatpush1.bf16.msra.mxu0 0
      %542 = vmatprep.subr.bf16.mxu0 0
      %543 = vmatpush1.bf16.msra.mxu0 0
      %544 = vmatprep.subr.bf16.mxu0 0
      %545 = vmatpush1.bf16.msra.mxu0 0
      %546 = vmatprep.subr.bf16.mxu0 0
      %547 = vmatpush1.bf16.msra.mxu0 0
      %548 = vmatprep.subr.bf16.mxu0 0
      %549 = vmatpush1.bf16.msra.mxu0 0
      %550 = vmatprep.subr.bf16.mxu0 0
      %551 = vmatpush1.bf16.msra.mxu0 0
      %552 = vmatprep.subr.bf16.mxu0 0
      %553 = vmatpush1.bf16.msra.mxu0 0
      %554 = vmatprep.subr.bf16.mxu0 0
      %555 = vmatpush1.bf16.msra.mxu0 0
      %556 = vmatprep.subr.bf16.mxu0 0
      %557 = vmatpush1.bf16.msra.mxu0 0
      %558 = vmatprep.subr.bf16.mxu0 0
      %559 = vmatpush1.bf16.msra.mxu0 0
      %560 = vmatprep.subr.bf16.mxu0 0
      %561 = vmatpush1.bf16.msra.mxu0 0
      %562 = vmatprep.subr.bf16.mxu0 0
      %563 = vmatpush1.bf16.msra.mxu0 0
      %564 = vmatprep.subr.bf16.mxu0 0
      %565 = vmatpush1.bf16.msra.mxu0 0
      %566 = vmatprep.subr.bf16.mxu0 0
      %567 = vmatpush1.bf16.msra.mxu0 0
      %568 = vmatprep.subr.bf16.mxu0 0
      %569 = vmatpush1.bf16.msra.mxu0 0
      %570 = vmatprep.mubr.bf16.mxu0 0
      %571 = vmatmul.mubr.bf16.gmra.mrb[0].mxu0 %v527
      %v572 = vpop.f32.mrb[0].mxu0
      %v573 = vadd.f32 0.0, %v572
      %v574 = vpop.f32.mrb[0].mxu0
      %v575 = vadd.f32 0.0, %v574
      %v576 = vpop.f32.mrb[0].mxu0
      %v577 = vpop.f32.mrb[0].mxu0
      %578 = vdwg.mxu0
      %579 = vmatprep.subr.bf16.mxu0 0
      %580 = vmatpush1.bf16.msra.mxu0 %v536
      %581 = vmatprep.subr.bf16.mxu0 0
      %582 = vmatpush1.bf16.msra.mxu0 0
      %583 = vmatprep.subr.bf16.mxu0 0
      %584 = vmatpush1.bf16.msra.mxu0 0
      %585 = vmatprep.subr.bf16.mxu0 0
      %586 = vmatpush1.bf16.msra.mxu0 0
      %587 = vmatprep.subr.bf16.mxu0 0
      %588 = vmatpush1.bf16.msra.mxu0 0
      %589 = vmatprep.subr.bf16.mxu0 0
      %590 = vmatpush1.bf16.msra.mxu0 0
      %591 = vmatprep.subr.bf16.mxu0 0
      %592 = vmatpush1.bf16.msra.mxu0 0
      %593 = vmatprep.subr.bf16.mxu0 0
      %594 = vmatpush1.bf16.msra.mxu0 0
      %595 = vmatprep.subr.bf16.mxu0 0
      %596 = vmatpush1.bf16.msra.mxu0 0
      %597 = vmatprep.subr.bf16.mxu0 0
      %598 = vmatpush1.bf16.msra.mxu0 0
      %599 = vmatprep.subr.bf16.mxu0 0
      %600 = vmatpush1.bf16.msra.mxu0 0
      %601 = vmatprep.subr.bf16.mxu0 0
      %602 = vmatpush1.bf16.msra.mxu0 0
      %603 = vmatprep.subr.bf16.mxu0 0
      %604 = vmatpush1.bf16.msra.mxu0 0
      %605 = vmatprep.subr.bf16.mxu0 0
      %606 = vmatpush1.bf16.msra.mxu0 0
      %607 = vmatprep.subr.bf16.mxu0 0
      %608 = vmatpush1.bf16.msra.mxu0 0
      %609 = vmatprep.subr.bf16.mxu0 0
      %610 = vmatpush1.bf16.msra.mxu0 0
      %611 = vmatprep.mubr.bf16.mxu0 0
      %612 = vmatmul.mubr.bf16.gmra.mrb[0].mxu0 %v527
      %v613 = vpop.f32.mrb[0].mxu0
      %v614 = vadd.f32 0.0, %v613
      %v615 = vpop.f32.mrb[0].mxu0
      %v616 = vpop.f32.mrb[0].mxu0
      %v617 = vpop.f32.mrb[0].mxu0
      %618 = vdwg.mxu0
      %v619 = vadd.f32 %v447, %v573
      %v620 = vadd.f32 %v449, %v575
      %v621 = vadd.f32 %v488, %v614
      %s622 = scalar_lea.vmem %s1, 12
      %v623 = vld [vmem:[%s622] sm:$0xf]
      %v624 = vld [vmem:[%s246] sm:$0xff]
      %v626 = vcombine.high %v624, %v624
      %v628 = vunpack.c.l.s4 1983009808
      %v629 = vunpack.c.0.s8 %v628
      %v630 = vlaneseq
      %v631 = vshrl.u32 %v630, 7
      %v632 = vsub.s32 %v629, %v631
      %v633 = vrot.slane %v624, %v632
      %v635 = vunpack.c.l.s4 1983009808
      %v636 = vunpack.c.0.s8 %v635
      %v637 = vlaneseq
      %v638 = vshrl.u32 %v637, 7
      %v639 = vsub.s32 %v636, %v638
      %v640 = vrot.slane %v626, %v639
      %v641 = vcombine.high %v633, %v633
      %v642 = vcombine.high %v640, %v640
      %643 = vrot.lane.b32.xlu0 %v633, 1
      %v644 = vpop.permute.xlu0 %643
      %645 = vrot.lane.b32.xlu0 %v641, 1
      %v646 = vpop.permute.xlu0 %645
      %647 = vrot.lane.b32.xlu0 %v640, 1
      %v648 = vpop.permute.xlu0 %647
      %649 = vrot.lane.b32.xlu0 %v642, 1
      %v650 = vpop.permute.xlu0 %649
      %vm651 = vcmask 7168
      %v652 = vsel %vm651, %v644, %v646
      %v653 = vsel %vm651, %v646, %v648
      %v654 = vsel %vm651, %v648, %v650
      %v656 = vsel %vm293, %v623, 0
      %v659 = vsel %vm297, %v652, 0
      %v662 = vsel %vm297, %v653, 0
      %v665 = vsel %vm297, %v654, 0
      %667 = vmatprep.subr.bf16.mxu0 %v662
      %668 = vmatpush1.bf16.msra.mxu0 %v659
      %669 = vmatprep.subr.bf16.mxu0 0
      %670 = vmatpush1.bf16.msra.mxu0 0
      %671 = vmatprep.subr.bf16.mxu0 0
      %672 = vmatpush1.bf16.msra.mxu0 0
      %673 = vmatprep.subr.bf16.mxu0 0
      %674 = vmatpush1.bf16.msra.mxu0 0
      %675 = vmatprep.subr.bf16.mxu0 0
      %676 = vmatpush1.bf16.msra.mxu0 0
      %677 = vmatprep.subr.bf16.mxu0 0
      %678 = vmatpush1.bf16.msra.mxu0 0
      %679 = vmatprep.subr.bf16.mxu0 0
      %680 = vmatpush1.bf16.msra.mxu0 0
      %681 = vmatprep.subr.bf16.mxu0 0
      %682 = vmatpush1.bf16.msra.mxu0 0
      %683 = vmatprep.subr.bf16.mxu0 0
      %684 = vmatpush1.bf16.msra.mxu0 0
      %685 = vmatprep.subr.bf16.mxu0 0
      %686 = vmatpush1.bf16.msra.mxu0 0
      %687 = vmatprep.subr.bf16.mxu0 0
      %688 = vmatpush1.bf16.msra.mxu0 0
      %689 = vmatprep.subr.bf16.mxu0 0
      %690 = vmatpush1.bf16.msra.mxu0 0
      %691 = vmatprep.subr.bf16.mxu0 0
      %692 = vmatpush1.bf16.msra.mxu0 0
      %693 = vmatprep.subr.bf16.mxu0 0
      %694 = vmatpush1.bf16.msra.mxu0 0
      %695 = vmatprep.subr.bf16.mxu0 0
      %696 = vmatpush1.bf16.msra.mxu0 0
      %697 = vmatprep.subr.bf16.mxu0 0
      %698 = vmatpush1.bf16.msra.mxu0 0
      %699 = vmatprep.mubr.bf16.mxu0 0
      %700 = vmatmul.mubr.bf16.gmra.mrb[0].mxu0 %v656
      %v701 = vpop.f32.mrb[0].mxu0
      %v702 = vadd.f32 0.0, %v701
      %v703 = vpop.f32.mrb[0].mxu0
      %v704 = vadd.f32 0.0, %v703
      %v705 = vpop.f32.mrb[0].mxu0
      %v706 = vpop.f32.mrb[0].mxu0
      %707 = vdwg.mxu0
      %708 = vmatprep.subr.bf16.mxu0 0
      %709 = vmatpush1.bf16.msra.mxu0 %v665
      %710 = vmatprep.subr.bf16.mxu0 0
      %711 = vmatpush1.bf16.msra.mxu0 0
      %712 = vmatprep.subr.bf16.mxu0 0
      %713 = vmatpush1.bf16.msra.mxu0 0
      %714 = vmatprep.subr.bf16.mxu0 0
      %715 = vmatpush1.bf16.msra.mxu0 0
      %716 = vmatprep.subr.bf16.mxu0 0
      %717 = vmatpush1.bf16.msra.mxu0 0
      %718 = vmatprep.subr.bf16.mxu0 0
      %719 = vmatpush1.bf16.msra.mxu0 0
      %720 = vmatprep.subr.bf16.mxu0 0
      %721 = vmatpush1.bf16.msra.mxu0 0
      %722 = vmatprep.subr.bf16.mxu0 0
      %723 = vmatpush1.bf16.msra.mxu0 0
      %724 = vmatprep.subr.bf16.mxu0 0
      %725 = vmatpush1.bf16.msra.mxu0 0
      %726 = vmatprep.subr.bf16.mxu0 0
      %727 = vmatpush1.bf16.msra.mxu0 0
      %728 = vmatprep.subr.bf16.mxu0 0
      %729 = vmatpush1.bf16.msra.mxu0 0
      %730 = vmatprep.subr.bf16.mxu0 0
      %731 = vmatpush1.bf16.msra.mxu0 0
      %732 = vmatprep.subr.bf16.mxu0 0
      %733 = vmatpush1.bf16.msra.mxu0 0
      %734 = vmatprep.subr.bf16.mxu0 0
      %735 = vmatpush1.bf16.msra.mxu0 0
      %736 = vmatprep.subr.bf16.mxu0 0
      %737 = vmatpush1.bf16.msra.mxu0 0
      %738 = vmatprep.subr.bf16.mxu0 0
      %739 = vmatpush1.bf16.msra.mxu0 0
      %740 = vmatprep.mubr.bf16.mxu0 0
      %741 = vmatmul.mubr.bf16.gmra.mrb[0].mxu0 %v656
      %v742 = vpop.f32.mrb[0].mxu0
      %v743 = vadd.f32 0.0, %v742
      %v744 = vpop.f32.mrb[0].mxu0
      %v745 = vpop.f32.mrb[0].mxu0
      %v746 = vpop.f32.mrb[0].mxu0
      %747 = vdwg.mxu0
      %v748 = vadd.f32 %v619, %v702
      %v749 = vadd.f32 %v620, %v704
      %v750 = vadd.f32 %v621, %v743
      %s751 = scalar_lea.vmem %s1, 16
      %v752 = vld [vmem:[%s751] sm:$0xf]
      %v753 = vld [vmem:[%s246 + $0x2] sm:$0x3f]
      %v755 = vcombine.high %v753, %v753
      %v757 = vunpack.c.l.s4 1983009808
      %v758 = vunpack.c.0.s8 %v757
      %v759 = vlaneseq
      %v760 = vshrl.u32 %v759, 7
      %v761 = vsub.s32 %v758, %v760
      %v762 = vrot.slane %v753, %v761
      %v764 = vunpack.c.l.s4 1983009808
      %v765 = vunpack.c.0.s8 %v764
      %v766 = vlaneseq
      %v767 = vshrl.u32 %v766, 7
      %v768 = vsub.s32 %v765, %v767
      %v769 = vrot.slane %v755, %v768
      %v770 = vcombine.high %v762, %v762
      %v772 = vsel %vm293, %v752, 0
      %v775 = vsel %vm297, %v762, 0
      %v778 = vsel %vm297, %v770, 0
      %v781 = vsel %vm297, %v769, 0
      %783 = vmatprep.subr.bf16.mxu0 %v778
      %784 = vmatpush1.bf16.msra.mxu0 %v775
      %785 = vmatprep.subr.bf16.mxu0 0
      %786 = vmatpush1.bf16.msra.mxu0 0
      %787 = vmatprep.subr.bf16.mxu0 0
      %788 = vmatpush1.bf16.msra.mxu0 0
      %789 = vmatprep.subr.bf16.mxu0 0
      %790 = vmatpush1.bf16.msra.mxu0 0
      %791 = vmatprep.subr.bf16.mxu0 0
      %792 = vmatpush1.bf16.msra.mxu0 0
      %793 = vmatprep.subr.bf16.mxu0 0
      %794 = vmatpush1.bf16.msra.mxu0 0
      %795 = vmatprep.subr.bf16.mxu0 0
      %796 = vmatpush1.bf16.msra.mxu0 0
      %797 = vmatprep.subr.bf16.mxu0 0
      %798 = vmatpush1.bf16.msra.mxu0 0
      %799 = vmatprep.subr.bf16.mxu0 0
      %800 = vmatpush1.bf16.msra.mxu0 0
      %801 = vmatprep.subr.bf16.mxu0 0
      %802 = vmatpush1.bf16.msra.mxu0 0
      %803 = vmatprep.subr.bf16.mxu0 0
      %804 = vmatpush1.bf16.msra.mxu0 0
      %805 = vmatprep.subr.bf16.mxu0 0
      %806 = vmatpush1.bf16.msra.mxu0 0
      %807 = vmatprep.subr.bf16.mxu0 0
      %808 = vmatpush1.bf16.msra.mxu0 0
      %809 = vmatprep.subr.bf16.mxu0 0
      %810 = vmatpush1.bf16.msra.mxu0 0
      %811 = vmatprep.subr.bf16.mxu0 0
      %812 = vmatpush1.bf16.msra.mxu0 0
      %813 = vmatprep.subr.bf16.mxu0 0
      %814 = vmatpush1.bf16.msra.mxu0 0
      %815 = vmatprep.mubr.bf16.mxu0 0
      %816 = vmatmul.mubr.bf16.gmra.mrb[0].mxu0 %v772
      %v817 = vpop.f32.mrb[0].mxu0
      %v818 = vadd.f32 0.0, %v817
      %v819 = vpop.f32.mrb[0].mxu0
      %v820 = vadd.f32 0.0, %v819
      %v821 = vpop.f32.mrb[0].mxu0
      %v822 = vpop.f32.mrb[0].mxu0
      %823 = vdwg.mxu0
      %824 = vmatprep.subr.bf16.mxu0 0
      %825 = vmatpush1.bf16.msra.mxu0 %v781
      %826 = vmatprep.subr.bf16.mxu0 0
      %827 = vmatpush1.bf16.msra.mxu0 0
      %828 = vmatprep.subr.bf16.mxu0 0
      %829 = vmatpush1.bf16.msra.mxu0 0
      %830 = vmatprep.subr.bf16.mxu0 0
      %831 = vmatpush1.bf16.msra.mxu0 0
      %832 = vmatprep.subr.bf16.mxu0 0
      %833 = vmatpush1.bf16.msra.mxu0 0
      %834 = vmatprep.subr.bf16.mxu0 0
      %835 = vmatpush1.bf16.msra.mxu0 0
      %836 = vmatprep.subr.bf16.mxu0 0
      %837 = vmatpush1.bf16.msra.mxu0 0
      %838 = vmatprep.subr.bf16.mxu0 0
      %839 = vmatpush1.bf16.msra.mxu0 0
      %840 = vmatprep.subr.bf16.mxu0 0
      %841 = vmatpush1.bf16.msra.mxu0 0
      %842 = vmatprep.subr.bf16.mxu0 0
      %843 = vmatpush1.bf16.msra.mxu0 0
      %844 = vmatprep.subr.bf16.mxu0 0
      %845 = vmatpush1.bf16.msra.mxu0 0
      %846 = vmatprep.subr.bf16.mxu0 0
      %847 = vmatpush1.bf16.msra.mxu0 0
      %848 = vmatprep.subr.bf16.mxu0 0
      %849 = vmatpush1.bf16.msra.mxu0 0
      %850 = vmatprep.subr.bf16.mxu0 0
      %851 = vmatpush1.bf16.msra.mxu0 0
      %852 = vmatprep.subr.bf16.mxu0 0
      %853 = vmatpush1.bf16.msra.mxu0 0
      %854 = vmatprep.subr.bf16.mxu0 0
      %855 = vmatpush1.bf16.msra.mxu0 0
      %856 = vmatprep.mubr.bf16.mxu0 0
      %857 = vmatmul.mubr.bf16.gmra.mrb[0].mxu0 %v772
      %v858 = vpop.f32.mrb[0].mxu0
      %v859 = vadd.f32 0.0, %v858
      %v860 = vpop.f32.mrb[0].mxu0
      %v861 = vpop.f32.mrb[0].mxu0
      %v862 = vpop.f32.mrb[0].mxu0
      %863 = vdwg.mxu0
      %v864 = vadd.f32 %v748, %v818
      %v865 = vadd.f32 %v749, %v820
      %v866 = vadd.f32 %v750, %v859
      %s867 = scalar_lea.vmem %s1, 20
      %v868 = vld [vmem:[%s867] sm:$0xf]
      %v869 = vld [vmem:[%s246 + $0x2] sm:$0xff]
      %v871 = vcombine.high %v869, %v869
      %v873 = vunpack.c.l.s4 1983009808
      %v874 = vunpack.c.0.s8 %v873
      %v875 = vlaneseq
      %v876 = vshrl.u32 %v875, 7
      %v877 = vsub.s32 %v874, %v876
      %v878 = vrot.slane %v869, %v877
      %v880 = vunpack.c.l.s4 1983009808
      %v881 = vunpack.c.0.s8 %v880
      %v882 = vlaneseq
      %v883 = vshrl.u32 %v882, 7
      %v884 = vsub.s32 %v881, %v883
      %v885 = vrot.slane %v871, %v884
      %v886 = vcombine.high %v878, %v878
      %v887 = vcombine.high %v885, %v885
      %888 = vrot.lane.b32.xlu0 %v878, 127
      %v889 = vpop.permute.xlu0 %888
      %890 = vrot.lane.b32.xlu0 %v886, 127
      %v891 = vpop.permute.xlu0 %890
      %892 = vrot.lane.b32.xlu0 %v885, 127
      %v893 = vpop.permute.xlu0 %892
      %894 = vrot.lane.b32.xlu0 %v887, 127
      %v895 = vpop.permute.xlu0 %894
      %vm896 = vcmask 1039360
      %v897 = vsel %vm896, %v889, %v891
      %v898 = vsel %vm896, %v891, %v893
      %v899 = vsel %vm896, %v893, %v895
      %v901 = vsel %vm293, %v868, 0
      %v904 = vsel %vm297, %v897, 0
      %v907 = vsel %vm297, %v898, 0
      %v910 = vsel %vm297, %v899, 0
      %912 = vmatprep.subr.bf16.mxu0 %v907
      %913 = vmatpush1.bf16.msra.mxu0 %v904
      %914 = vmatprep.subr.bf16.mxu0 0
      %915 = vmatpush1.bf16.msra.mxu0 0
      %916 = vmatprep.subr.bf16.mxu0 0
      %917 = vmatpush1.bf16.msra.mxu0 0
      %918 = vmatprep.subr.bf16.mxu0 0
      %919 = vmatpush1.bf16.msra.mxu0 0
      %920 = vmatprep.subr.bf16.mxu0 0
      %921 = vmatpush1.bf16.msra.mxu0 0
      %922 = vmatprep.subr.bf16.mxu0 0
      %923 = vmatpush1.bf16.msra.mxu0 0
      %924 = vmatprep.subr.bf16.mxu0 0
      %925 = vmatpush1.bf16.msra.mxu0 0
      %926 = vmatprep.subr.bf16.mxu0 0
      %927 = vmatpush1.bf16.msra.mxu0 0
      %928 = vmatprep.subr.bf16.mxu0 0
      %929 = vmatpush1.bf16.msra.mxu0 0
      %930 = vmatprep.subr.bf16.mxu0 0
      %931 = vmatpush1.bf16.msra.mxu0 0
      %932 = vmatprep.subr.bf16.mxu0 0
      %933 = vmatpush1.bf16.msra.mxu0 0
      %934 = vmatprep.subr.bf16.mxu0 0
      %935 = vmatpush1.bf16.msra.mxu0 0
      %936 = vmatprep.subr.bf16.mxu0 0
      %937 = vmatpush1.bf16.msra.mxu0 0
      %938 = vmatprep.subr.bf16.mxu0 0
      %939 = vmatpush1.bf16.msra.mxu0 0
      %940 = vmatprep.subr.bf16.mxu0 0
      %941 = vmatpush1.bf16.msra.mxu0 0
      %942 = vmatprep.subr.bf16.mxu0 0
      %943 = vmatpush1.bf16.msra.mxu0 0
      %944 = vmatprep.mubr.bf16.mxu0 0
      %945 = vmatmul.mubr.bf16.gmra.mrb[0].mxu0 %v901
      %v946 = vpop.f32.mrb[0].mxu0
      %v947 = vadd.f32 0.0, %v946
      %v948 = vpop.f32.mrb[0].mxu0
      %v949 = vadd.f32 0.0, %v948
      %v950 = vpop.f32.mrb[0].mxu0
      %v951 = vpop.f32.mrb[0].mxu0
      %952 = vdwg.mxu0
      %953 = vmatprep.subr.bf16.mxu0 0
      %954 = vmatpush1.bf16.msra.mxu0 %v910
      %955 = vmatprep.subr.bf16.mxu0 0
      %956 = vmatpush1.bf16.msra.mxu0 0
      %957 = vmatprep.subr.bf16.mxu0 0
      %958 = vmatpush1.bf16.msra.mxu0 0
      %959 = vmatprep.subr.bf16.mxu0 0
      %960 = vmatpush1.bf16.msra.mxu0 0
      %961 = vmatprep.subr.bf16.mxu0 0
      %962 = vmatpush1.bf16.msra.mxu0 0
      %963 = vmatprep.subr.bf16.mxu0 0
      %964 = vmatpush1.bf16.msra.mxu0 0
      %965 = vmatprep.subr.bf16.mxu0 0
      %966 = vmatpush1.bf16.msra.mxu0 0
      %967 = vmatprep.subr.bf16.mxu0 0
      %968 = vmatpush1.bf16.msra.mxu0 0
      %969 = vmatprep.subr.bf16.mxu0 0
      %970 = vmatpush1.bf16.msra.mxu0 0
      %971 = vmatprep.subr.bf16.mxu0 0
      %972 = vmatpush1.bf16.msra.mxu0 0
      %973 = vmatprep.subr.bf16.mxu0 0
      %974 = vmatpush1.bf16.msra.mxu0 0
      %975 = vmatprep.subr.bf16.mxu0 0
      %976 = vmatpush1.bf16.msra.mxu0 0
      %977 = vmatprep.subr.bf16.mxu0 0
      %978 = vmatpush1.bf16.msra.mxu0 0
      %979 = vmatprep.subr.bf16.mxu0 0
      %980 = vmatpush1.bf16.msra.mxu0 0
      %981 = vmatprep.subr.bf16.mxu0 0
      %982 = vmatpush1.bf16.msra.mxu0 0
      %983 = vmatprep.subr.bf16.mxu0 0
      %984 = vmatpush1.bf16.msra.mxu0 0
      %985 = vmatprep.mubr.bf16.mxu0 0
      %986 = vmatmul.mubr.bf16.gmra.mrb[0].mxu0 %v901
      %v987 = vpop.f32.mrb[0].mxu0
      %v988 = vadd.f32 0.0, %v987
      %v989 = vpop.f32.mrb[0].mxu0
      %v990 = vpop.f32.mrb[0].mxu0
      %v991 = vpop.f32.mrb[0].mxu0
      %992 = vdwg.mxu0
      %v993 = vadd.f32 %v864, %v947
      %v994 = vadd.f32 %v865, %v949
      %v995 = vadd.f32 %v866, %v988
      %s996 = scalar_lea.vmem %s1, 24
      %v997 = vld [vmem:[%s996] sm:$0xf]
      %v998 = vld [vmem:[%s246 + $0x2] sm:$0xff]
      %v1000 = vcombine.high %v998, %v998
      %v1002 = vunpack.c.l.s4 1983009808
      %v1003 = vunpack.c.0.s8 %v1002
      %v1004 = vlaneseq
      %v1005 = vshrl.u32 %v1004, 7
      %v1006 = vsub.s32 %v1003, %v1005
      %v1007 = vrot.slane %v998, %v1006
      %v1009 = vunpack.c.l.s4 1983009808
      %v1010 = vunpack.c.0.s8 %v1009
      %v1011 = vlaneseq
      %v1012 = vshrl.u32 %v1011, 7
      %v1013 = vsub.s32 %v1010, %v1012
      %v1014 = vrot.slane %v1000, %v1013
      %v1015 = vcombine.high %v1007, %v1007
      %v1016 = vcombine.high %v1014, %v1014
      %1017 = vrot.lane.b32.xlu0 %v1007, 111
      %v1018 = vpop.permute.xlu0 %1017
      %1019 = vrot.lane.b32.xlu0 %v1015, 111
      %v1020 = vpop.permute.xlu0 %1019
      %1021 = vrot.lane.b32.xlu0 %v1014, 111
      %v1022 = vpop.permute.xlu0 %1021
      %1023 = vrot.lane.b32.xlu0 %v1016, 111
      %v1024 = vpop.permute.xlu0 %1023
      %vm1025 = vcmask 908288
      %v1026 = vsel %vm1025, %v1018, %v1020
      %v1027 = vsel %vm1025, %v1020, %v1022
      %v1028 = vsel %vm1025, %v1022, %v1024
      %v1030 = vsel %vm293, %v997, 0
      %v1033 = vsel %vm297, %v1026, 0
      %v1036 = vsel %vm297, %v1027, 0
      %v1039 = vsel %vm297, %v1028, 0
      %1041 = vmatprep.subr.bf16.mxu0 %v1036
      %1042 = vmatpush1.bf16.msra.mxu0 %v1033
      %1043 = vmatprep.subr.bf16.mxu0 0
      %1044 = vmatpush1.bf16.msra.mxu0 0
      %1045 = vmatprep.subr.bf16.mxu0 0
      %1046 = vmatpush1.bf16.msra.mxu0 0
      %1047 = vmatprep.subr.bf16.mxu0 0
      %1048 = vmatpush1.bf16.msra.mxu0 0
      %1049 = vmatprep.subr.bf16.mxu0 0
      %1050 = vmatpush1.bf16.msra.mxu0 0
      %1051 = vmatprep.subr.bf16.mxu0 0
      %1052 = vmatpush1.bf16.msra.mxu0 0
      %1053 = vmatprep.subr.bf16.mxu0 0
      %1054 = vmatpush1.bf16.msra.mxu0 0
      %1055 = vmatprep.subr.bf16.mxu0 0
      %1056 = vmatpush1.bf16.msra.mxu0 0
      %1057 = vmatprep.subr.bf16.mxu0 0
      %1058 = vmatpush1.bf16.msra.mxu0 0
      %1059 = vmatprep.subr.bf16.mxu0 0
      %1060 = vmatpush1.bf16.msra.mxu0 0
      %1061 = vmatprep.subr.bf16.mxu0 0
      %1062 = vmatpush1.bf16.msra.mxu0 0
      %1063 = vmatprep.subr.bf16.mxu0 0
      %1064 = vmatpush1.bf16.msra.mxu0 0
      %1065 = vmatprep.subr.bf16.mxu0 0
      %1066 = vmatpush1.bf16.msra.mxu0 0
      %1067 = vmatprep.subr.bf16.mxu0 0
      %1068 = vmatpush1.bf16.msra.mxu0 0
      %1069 = vmatprep.subr.bf16.mxu0 0
      %1070 = vmatpush1.bf16.msra.mxu0 0
      %1071 = vmatprep.subr.bf16.mxu0 0
      %1072 = vmatpush1.bf16.msra.mxu0 0
      %1073 = vmatprep.mubr.bf16.mxu0 0
      %1074 = vmatmul.mubr.bf16.gmra.mrb[0].mxu0 %v1030
      %v1075 = vpop.f32.mrb[0].mxu0
      %v1076 = vadd.f32 0.0, %v1075
      %v1077 = vpop.f32.mrb[0].mxu0
      %v1078 = vadd.f32 0.0, %v1077
      %v1079 = vpop.f32.mrb[0].mxu0
      %v1080 = vpop.f32.mrb[0].mxu0
      %1081 = vdwg.mxu0
      %1082 = vmatprep.subr.bf16.mxu0 0
      %1083 = vmatpush1.bf16.msra.mxu0 %v1039
      %1084 = vmatprep.subr.bf16.mxu0 0
      %1085 = vmatpush1.bf16.msra.mxu0 0
      %1086 = vmatprep.subr.bf16.mxu0 0
      %1087 = vmatpush1.bf16.msra.mxu0 0
      %1088 = vmatprep.subr.bf16.mxu0 0
      %1089 = vmatpush1.bf16.msra.mxu0 0
      %1090 = vmatprep.subr.bf16.mxu0 0
      %1091 = vmatpush1.bf16.msra.mxu0 0
      %1092 = vmatprep.subr.bf16.mxu0 0
      %1093 = vmatpush1.bf16.msra.mxu0 0
      %1094 = vmatprep.subr.bf16.mxu0 0
      %1095 = vmatpush1.bf16.msra.mxu0 0
      %1096 = vmatprep.subr.bf16.mxu0 0
      %1097 = vmatpush1.bf16.msra.mxu0 0
      %1098 = vmatprep.subr.bf16.mxu0 0
      %1099 = vmatpush1.bf16.msra.mxu0 0
      %1100 = vmatprep.subr.bf16.mxu0 0
      %1101 = vmatpush1.bf16.msra.mxu0 0
      %1102 = vmatprep.subr.bf16.mxu0 0
      %1103 = vmatpush1.bf16.msra.mxu0 0
      %1104 = vmatprep.subr.bf16.mxu0 0
      %1105 = vmatpush1.bf16.msra.mxu0 0
      %1106 = vmatprep.subr.bf16.mxu0 0
      %1107 = vmatpush1.bf16.msra.mxu0 0
      %1108 = vmatprep.subr.bf16.mxu0 0
      %1109 = vmatpush1.bf16.msra.mxu0 0
      %1110 = vmatprep.subr.bf16.mxu0 0
      %1111 = vmatpush1.bf16.msra.mxu0 0
      %1112 = vmatprep.subr.bf16.mxu0 0
      %1113 = vmatpush1.bf16.msra.mxu0 0
      %1114 = vmatprep.mubr.bf16.mxu0 0
      %1115 = vmatmul.mubr.bf16.gmra.mrb[0].mxu0 %v1030
      %v1116 = vpop.f32.mrb[0].mxu0
      %v1117 = vadd.f32 0.0, %v1116
      %v1118 = vpop.f32.mrb[0].mxu0
      %v1119 = vpop.f32.mrb[0].mxu0
      %v1120 = vpop.f32.mrb[0].mxu0
      %1121 = vdwg.mxu0
      %v1122 = vadd.f32 %v993, %v1076
      %v1123 = vadd.f32 %v994, %v1078
      %v1124 = vadd.f32 %v995, %v1117
      %s1125 = scalar_lea.vmem %s1, 28
      %v1126 = vld [vmem:[%s1125] sm:$0xf]
      %v1127 = vld [vmem:[%s246 + $0x2] sm:$0xff]
      %v1129 = vcombine.high %v1127, %v1127
      %v1131 = vunpack.c.l.s4 1983009808
      %v1132 = vunpack.c.0.s8 %v1131
      %v1133 = vlaneseq
      %v1134 = vshrl.u32 %v1133, 7
      %v1135 = vsub.s32 %v1132, %v1134
      %v1136 = vrot.slane %v1127, %v1135
      %v1138 = vunpack.c.l.s4 1983009808
      %v1139 = vunpack.c.0.s8 %v1138
      %v1140 = vlaneseq
      %v1141 = vshrl.u32 %v1140, 7
      %v1142 = vsub.s32 %v1139, %v1141
      %v1143 = vrot.slane %v1129, %v1142
      %v1144 = vcombine.high %v1136, %v1136
      %v1145 = vcombine.high %v1143, %v1143
      %1146 = vrot.lane.b32.xlu0 %v1136, 110
      %v1147 = vpop.permute.xlu0 %1146
      %1148 = vrot.lane.b32.xlu0 %v1144, 110
      %v1149 = vpop.permute.xlu0 %1148
      %1150 = vrot.lane.b32.xlu0 %v1143, 110
      %v1151 = vpop.permute.xlu0 %1150
      %1152 = vrot.lane.b32.xlu0 %v1145, 110
      %v1153 = vpop.permute.xlu0 %1152
      %vm1154 = vcmask 900096
      %v1155 = vsel %vm1154, %v1147, %v1149
      %v1156 = vsel %vm1154, %v1149, %v1151
      %v1157 = vsel %vm1154, %v1151, %v1153
      %v1159 = vsel %vm293, %v1126, 0
      %v1162 = vsel %vm297, %v1155, 0
      %v1165 = vsel %vm297, %v1156, 0
      %v1168 = vsel %vm297, %v1157, 0
      %1170 = vmatprep.subr.bf16.mxu0 %v1165
      %1171 = vmatpush1.bf16.msra.mxu0 %v1162
      %1172 = vmatprep.subr.bf16.mxu0 0
      %1173 = vmatpush1.bf16.msra.mxu0 0
      %1174 = vmatprep.subr.bf16.mxu0 0
      %1175 = vmatpush1.bf16.msra.mxu0 0
      %1176 = vmatprep.subr.bf16.mxu0 0
      %1177 = vmatpush1.bf16.msra.mxu0 0
      %1178 = vmatprep.subr.bf16.mxu0 0
      %1179 = vmatpush1.bf16.msra.mxu0 0
      %1180 = vmatprep.subr.bf16.mxu0 0
      %1181 = vmatpush1.bf16.msra.mxu0 0
      %1182 = vmatprep.subr.bf16.mxu0 0
      %1183 = vmatpush1.bf16.msra.mxu0 0
      %1184 = vmatprep.subr.bf16.mxu0 0
      %1185 = vmatpush1.bf16.msra.mxu0 0
      %1186 = vmatprep.subr.bf16.mxu0 0
      %1187 = vmatpush1.bf16.msra.mxu0 0
      %1188 = vmatprep.subr.bf16.mxu0 0
      %1189 = vmatpush1.bf16.msra.mxu0 0
      %1190 = vmatprep.subr.bf16.mxu0 0
      %1191 = vmatpush1.bf16.msra.mxu0 0
      %1192 = vmatprep.subr.bf16.mxu0 0
      %1193 = vmatpush1.bf16.msra.mxu0 0
      %1194 = vmatprep.subr.bf16.mxu0 0
      %1195 = vmatpush1.bf16.msra.mxu0 0
      %1196 = vmatprep.subr.bf16.mxu0 0
      %1197 = vmatpush1.bf16.msra.mxu0 0
      %1198 = vmatprep.subr.bf16.mxu0 0
      %1199 = vmatpush1.bf16.msra.mxu0 0
      %1200 = vmatprep.subr.bf16.mxu0 0
      %1201 = vmatpush1.bf16.msra.mxu0 0
      %1202 = vmatprep.mubr.bf16.mxu0 0
      %1203 = vmatmul.mubr.bf16.gmra.mrb[0].mxu0 %v1159
      %v1204 = vpop.f32.mrb[0].mxu0
      %v1205 = vadd.f32 0.0, %v1204
      %v1206 = vpop.f32.mrb[0].mxu0
      %v1207 = vadd.f32 0.0, %v1206
      %v1208 = vpop.f32.mrb[0].mxu0
      %v1209 = vpop.f32.mrb[0].mxu0
      %1210 = vdwg.mxu0
      %1211 = vmatprep.subr.bf16.mxu0 0
      %1212 = vmatpush1.bf16.msra.mxu0 %v1168
      %1213 = vmatprep.subr.bf16.mxu0 0
      %1214 = vmatpush1.bf16.msra.mxu0 0
      %1215 = vmatprep.subr.bf16.mxu0 0
      %1216 = vmatpush1.bf16.msra.mxu0 0
      %1217 = vmatprep.subr.bf16.mxu0 0
      %1218 = vmatpush1.bf16.msra.mxu0 0
      %1219 = vmatprep.subr.bf16.mxu0 0
      %1220 = vmatpush1.bf16.msra.mxu0 0
      %1221 = vmatprep.subr.bf16.mxu0 0
      %1222 = vmatpush1.bf16.msra.mxu0 0
      %1223 = vmatprep.subr.bf16.mxu0 0
      %1224 = vmatpush1.bf16.msra.mxu0 0
      %1225 = vmatprep.subr.bf16.mxu0 0
      %1226 = vmatpush1.bf16.msra.mxu0 0
      %1227 = vmatprep.subr.bf16.mxu0 0
      %1228 = vmatpush1.bf16.msra.mxu0 0
      %1229 = vmatprep.subr.bf16.mxu0 0
      %1230 = vmatpush1.bf16.msra.mxu0 0
      %1231 = vmatprep.subr.bf16.mxu0 0
      %1232 = vmatpush1.bf16.msra.mxu0 0
      %1233 = vmatprep.subr.bf16.mxu0 0
      %1234 = vmatpush1.bf16.msra.mxu0 0
      %1235 = vmatprep.subr.bf16.mxu0 0
      %1236 = vmatpush1.bf16.msra.mxu0 0
      %1237 = vmatprep.subr.bf16.mxu0 0
      %1238 = vmatpush1.bf16.msra.mxu0 0
      %1239 = vmatprep.subr.bf16.mxu0 0
      %1240 = vmatpush1.bf16.msra.mxu0 0
      %1241 = vmatprep.subr.bf16.mxu0 0
      %1242 = vmatpush1.bf16.msra.mxu0 0
      %1243 = vmatprep.mubr.bf16.mxu0 0
      %1244 = vmatmul.mubr.bf16.gmra.mrb[0].mxu0 %v1159
      %v1245 = vpop.f32.mrb[0].mxu0
      %v1246 = vadd.f32 0.0, %v1245
      %v1247 = vpop.f32.mrb[0].mxu0
      %v1248 = vpop.f32.mrb[0].mxu0
      %v1249 = vpop.f32.mrb[0].mxu0
      %1250 = vdwg.mxu0
      %v1251 = vadd.f32 %v1122, %v1205
      %v1252 = vadd.f32 %v1123, %v1207
      %v1253 = vadd.f32 %v1124, %v1246
      %s1254 = scalar_lea.vmem %s1, 32
      %v1255 = vld [vmem:[%s1254] sm:$0xf]
      %v1256 = vld [vmem:[%s246 + $0x2] sm:$0xff]
      %v1258 = vcombine.high %v1256, %v1256
      %v1260 = vunpack.c.l.s4 1983009808
      %v1261 = vunpack.c.0.s8 %v1260
      %v1262 = vlaneseq
      %v1263 = vshrl.u32 %v1262, 7
      %v1264 = vsub.s32 %v1261, %v1263
      %v1265 = vrot.slane %v1256, %v1264
      %v1267 = vunpack.c.l.s4 1983009808
      %v1268 = vunpack.c.0.s8 %v1267
      %v1269 = vlaneseq
      %v1270 = vshrl.u32 %v1269, 7
      %v1271 = vsub.s32 %v1268, %v1270
      %v1272 = vrot.slane %v1258, %v1271
      %v1273 = vcombine.high %v1265, %v1265
      %v1274 = vcombine.high %v1272, %v1272
      %1275 = vrot.lane.b32.xlu0 %v1265, 109
      %v1276 = vpop.permute.xlu0 %1275
      %1277 = vrot.lane.b32.xlu0 %v1273, 109
      %v1278 = vpop.permute.xlu0 %1277
      %1279 = vrot.lane.b32.xlu0 %v1272, 109
      %v1280 = vpop.permute.xlu0 %1279
      %1281 = vrot.lane.b32.xlu0 %v1274, 109
      %v1282 = vpop.permute.xlu0 %1281
      %vm1283 = vcmask 891904
      %v1284 = vsel %vm1283, %v1276, %v1278
      %v1285 = vsel %vm1283, %v1278, %v1280
      %v1286 = vsel %vm1283, %v1280, %v1282
      %v1288 = vsel %vm293, %v1255, 0
      %v1291 = vsel %vm297, %v1284, 0
      %v1294 = vsel %vm297, %v1285, 0
      %v1297 = vsel %vm297, %v1286, 0
      %1299 = vmatprep.subr.bf16.mxu0 %v1294
      %1300 = vmatpush1.bf16.msra.mxu0 %v1291
      %1301 = vmatprep.subr.bf16.mxu0 0
      %1302 = vmatpush1.bf16.msra.mxu0 0
      %1303 = vmatprep.subr.bf16.mxu0 0
      %1304 = vmatpush1.bf16.msra.mxu0 0
      %1305 = vmatprep.subr.bf16.mxu0 0
      %1306 = vmatpush1.bf16.msra.mxu0 0
      %1307 = vmatprep.subr.bf16.mxu0 0
      %1308 = vmatpush1.bf16.msra.mxu0 0
      %1309 = vmatprep.subr.bf16.mxu0 0
      %1310 = vmatpush1.bf16.msra.mxu0 0
      %1311 = vmatprep.subr.bf16.mxu0 0
      %1312 = vmatpush1.bf16.msra.mxu0 0
      %1313 = vmatprep.subr.bf16.mxu0 0
      %1314 = vmatpush1.bf16.msra.mxu0 0
      %1315 = vmatprep.subr.bf16.mxu0 0
      %1316 = vmatpush1.bf16.msra.mxu0 0
      %1317 = vmatprep.subr.bf16.mxu0 0
      %1318 = vmatpush1.bf16.msra.mxu0 0
      %1319 = vmatprep.subr.bf16.mxu0 0
      %1320 = vmatpush1.bf16.msra.mxu0 0
      %1321 = vmatprep.subr.bf16.mxu0 0
      %1322 = vmatpush1.bf16.msra.mxu0 0
      %1323 = vmatprep.subr.bf16.mxu0 0
      %1324 = vmatpush1.bf16.msra.mxu0 0
      %1325 = vmatprep.subr.bf16.mxu0 0
      %1326 = vmatpush1.bf16.msra.mxu0 0
      %1327 = vmatprep.subr.bf16.mxu0 0
      %1328 = vmatpush1.bf16.msra.mxu0 0
      %1329 = vmatprep.subr.bf16.mxu0 0
      %1330 = vmatpush1.bf16.msra.mxu0 0
      %1331 = vmatprep.mubr.bf16.mxu0 0
      %1332 = vmatmul.mubr.bf16.gmra.mrb[0].mxu0 %v1288
      %v1333 = vpop.f32.mrb[0].mxu0
      %v1334 = vadd.f32 0.0, %v1333
      %v1335 = vpop.f32.mrb[0].mxu0
      %v1336 = vadd.f32 0.0, %v1335
      %v1337 = vpop.f32.mrb[0].mxu0
      %v1338 = vpop.f32.mrb[0].mxu0
      %1339 = vdwg.mxu0
      %1340 = vmatprep.subr.bf16.mxu0 0
      %1341 = vmatpush1.bf16.msra.mxu0 %v1297
      %1342 = vmatprep.subr.bf16.mxu0 0
      %1343 = vmatpush1.bf16.msra.mxu0 0
      %1344 = vmatprep.subr.bf16.mxu0 0
      %1345 = vmatpush1.bf16.msra.mxu0 0
      %1346 = vmatprep.subr.bf16.mxu0 0
      %1347 = vmatpush1.bf16.msra.mxu0 0
      %1348 = vmatprep.subr.bf16.mxu0 0
      %1349 = vmatpush1.bf16.msra.mxu0 0
      %1350 = vmatprep.subr.bf16.mxu0 0
      %1351 = vmatpush1.bf16.msra.mxu0 0
      %1352 = vmatprep.subr.bf16.mxu0 0
      %1353 = vmatpush1.bf16.msra.mxu0 0
      %1354 = vmatprep.subr.bf16.mxu0 0
      %1355 = vmatpush1.bf16.msra.mxu0 0
      %1356 = vmatprep.subr.bf16.mxu0 0
      %1357 = vmatpush1.bf16.msra.mxu0 0
      %1358 = vmatprep.subr.bf16.mxu0 0
      %1359 = vmatpush1.bf16.msra.mxu0 0
      %1360 = vmatprep.subr.bf16.mxu0 0
      %1361 = vmatpush1.bf16.msra.mxu0 0
      %1362 = vmatprep.subr.bf16.mxu0 0
      %1363 = vmatpush1.bf16.msra.mxu0 0
      %1364 = vmatprep.subr.bf16.mxu0 0
      %1365 = vmatpush1.bf16.msra.mxu0 0
      %1366 = vmatprep.subr.bf16.mxu0 0
      %1367 = vmatpush1.bf16.msra.mxu0 0
      %1368 = vmatprep.subr.bf16.mxu0 0
      %1369 = vmatpush1.bf16.msra.mxu0 0
      %1370 = vmatprep.subr.bf16.mxu0 0
      %1371 = vmatpush1.bf16.msra.mxu0 0
      %1372 = vmatprep.mubr.bf16.mxu0 0
      %1373 = vmatmul.mubr.bf16.gmra.mrb[0].mxu0 %v1288
      %v1374 = vpop.f32.mrb[0].mxu0
      %v1375 = vadd.f32 0.0, %v1374
      %v1376 = vpop.f32.mrb[0].mxu0
      %v1377 = vpop.f32.mrb[0].mxu0
      %v1378 = vpop.f32.mrb[0].mxu0
      %1379 = vdwg.mxu0
      %v1380 = vadd.f32 %v1251, %v1334
      %v1381 = vadd.f32 %v1252, %v1336
      %v1382 = vadd.f32 %v1253, %v1375
      %v1383 = vld [vmem:[%s2] sm:$0xff]
      %1385 = vset.pattern.permute.xlu0 0
      %1386 = vperm.xlu0 %1385, %v1383
      %v1387 = vpop.permute.xlu0 %1386
      %v1389 = vadd.f32 %v1380, %v1387
      %v1390 = vadd.f32 %v1381, %v1387
      %v1391 = vadd.f32 %v1382, %v1387
      %v1392 = vmax.f32 %v1389, 0.0
      %v1393 = vmax.f32 %v1390, 0.0
      %v1394 = vmax.f32 %v1391, 0.0
      %v1395 = vld [vmem:[%s5] sm:$0x7]
      %v1397 = vlaneseq
      %v1398 = vshrl.u32 %v1397, 7
      %v1399 = vsub.s32 0, %v1398
      %v1400 = vrot.slane %v1395, %v1399
      %v1401 = vlaneseq
      %v1402 = vshrl.u32 %v1401, 7
      %v1403 = vsub.s32 1, %v1402
      %v1404 = vrot.slane %v1395, %v1403
      %v1405 = vlaneseq
      %v1406 = vshrl.u32 %v1405, 7
      %v1407 = vsub.s32 2, %v1406
      %v1408 = vrot.slane %v1395, %v1407
      %v1412 = vmul.f32 %v1392, %v1400
      %v1413 = vmul.f32 %v1393, %v1404
      %v1414 = vmul.f32 %v1394, %v1408
      %v1415 = vpack.c.bf16 %v1412, %v1412
      %v1416 = vpack.c.bf16 %v1413, %v1413
      %v1417 = vpack.c.bf16 %v1414, %v1414
      %v1421 = vunpack.c.l.b16 %v1415
      %v1422 = vunpack.c.l.b16 %v1416
      %v1423 = vunpack.c.l.b16 %v1417
      %v1424 = vpack.c.b16 %v1422, %v1421
      %v1425 = vpack.c.b16 %v1423, %v1423
      %1428 = vst [vmem:[#allocation2 + $0x4] sm:$0xff] %v1424
      %1429 = vst [vmem:[#allocation2 + $0xc] sm:$0xf] %v1425
      %v1430 = vld [vmem:[%s3] sm:$0x3]
      %v1431 = vld [vmem:[#allocation2] sm:$0xff]
      %v1432 = vld [vmem:[#allocation2 + $0x8] sm:$0xff]
      %s1433 = scalar_lea.vmem %s3, 2
      %v1434 = vld [vmem:[%s1433] sm:$0x3]
      %v1437 = vunpack.c.l.b16 %v1431
      %v1438 = vunpack.c.h.b16 %v1431
      %v1439 = vunpack.c.l.b16 %v1432
      %v1440 = vunpack.c.h.b16 %v1432
      %v1441 = vpack.c.b16 %v1437, %v1437
      %v1442 = vpack.c.b16 %v1438, %v1438
      %v1443 = vpack.c.b16 %v1439, %v1439
      %v1444 = vpack.c.b16 %v1440, %v1440
      %1445 = vrot.lane.b32.xlu0 %v1441, 18
      %v1446 = vpop.permute.xlu0 %1445
      %1447 = vrot.lane.b32.xlu0 %v1442, 18
      %v1448 = vpop.permute.xlu0 %1447
      %1449 = vrot.lane.b32.xlu0 %v1443, 18
      %v1450 = vpop.permute.xlu0 %1449
      %1451 = vrot.lane.b32.xlu0 %v1444, 18
      %v1452 = vpop.permute.xlu0 %1451
      %v1453 = vsel %vm289, %v1446, %v1448
      %v1454 = vsel %vm289, %v1448, %v1450
      %v1455 = vsel %vm289, %v1450, %v1452
      %vm1456 = vcmask 64512
      %v1458 = vsel %vm1456, %v1434, 0
      %vm1460 = vcmask 1043456
      %v1462 = vsel %vm1460, %v1453, 0
      %v1465 = vsel %vm1460, %v1454, 0
      %v1468 = vsel %vm1460, %v1455, 0
      %1470 = vmatprep.subr.bf16.mxu0 %v1465
      %1471 = vmatpush1.bf16.msra.mxu0 %v1462
      %1472 = vmatprep.subr.bf16.mxu0 0
      %1473 = vmatpush1.bf16.msra.mxu0 0
      %1474 = vmatprep.subr.bf16.mxu0 0
      %1475 = vmatpush1.bf16.msra.mxu0 0
      %1476 = vmatprep.subr.bf16.mxu0 0
      %1477 = vmatpush1.bf16.msra.mxu0 0
      %1478 = vmatprep.subr.bf16.mxu0 0
      %1479 = vmatpush1.bf16.msra.mxu0 0
      %1480 = vmatprep.subr.bf16.mxu0 0
      %1481 = vmatpush1.bf16.msra.mxu0 0
      %1482 = vmatprep.subr.bf16.mxu0 0
      %1483 = vmatpush1.bf16.msra.mxu0 0
      %1484 = vmatprep.subr.bf16.mxu0 0
      %1485 = vmatpush1.bf16.msra.mxu0 0
      %1486 = vmatprep.subr.bf16.mxu0 0
      %1487 = vmatpush1.bf16.msra.mxu0 0
      %1488 = vmatprep.subr.bf16.mxu0 0
      %1489 = vmatpush1.bf16.msra.mxu0 0
      %1490 = vmatprep.subr.bf16.mxu0 0
      %1491 = vmatpush1.bf16.msra.mxu0 0
      %1492 = vmatprep.subr.bf16.mxu0 0
      %1493 = vmatpush1.bf16.msra.mxu0 0
      %1494 = vmatprep.subr.bf16.mxu0 0
      %1495 = vmatpush1.bf16.msra.mxu0 0
      %1496 = vmatprep.subr.bf16.mxu0 0
      %1497 = vmatpush1.bf16.msra.mxu0 0
      %1498 = vmatprep.subr.bf16.mxu0 0
      %1499 = vmatpush1.bf16.msra.mxu0 0
      %1500 = vmatprep.subr.bf16.mxu0 0
      %1501 = vmatpush1.bf16.msra.mxu0 0
      %1502 = vmatprep.mubr.bf16.mxu0 0
      %1503 = vmatmul.mubr.bf16.gmra.mrb[0].mxu0 %v1458
      %v1504 = vpop.f32.mrb[0].mxu0
      %v1505 = vadd.f32 0.0, %v1504
      %v1506 = vpop.f32.mrb[0].mxu0
      %v1507 = vadd.f32 0.0, %v1506
      %v1508 = vpop.f32.mrb[0].mxu0
      %v1509 = vpop.f32.mrb[0].mxu0
      %1510 = vdwg.mxu0
      %1511 = vmatprep.subr.bf16.mxu0 0
      %1512 = vmatpush1.bf16.msra.mxu0 %v1468
      %1513 = vmatprep.subr.bf16.mxu0 0
      %1514 = vmatpush1.bf16.msra.mxu0 0
      %1515 = vmatprep.subr.bf16.mxu0 0
      %1516 = vmatpush1.bf16.msra.mxu0 0
      %1517 = vmatprep.subr.bf16.mxu0 0
      %1518 = vmatpush1.bf16.msra.mxu0 0
      %1519 = vmatprep.subr.bf16.mxu0 0
      %1520 = vmatpush1.bf16.msra.mxu0 0
      %1521 = vmatprep.subr.bf16.mxu0 0
      %1522 = vmatpush1.bf16.msra.mxu0 0
      %1523 = vmatprep.subr.bf16.mxu0 0
      %1524 = vmatpush1.bf16.msra.mxu0 0
      %1525 = vmatprep.subr.bf16.mxu0 0
      %1526 = vmatpush1.bf16.msra.mxu0 0
      %1527 = vmatprep.subr.bf16.mxu0 0
      %1528 = vmatpush1.bf16.msra.mxu0 0
      %1529 = vmatprep.subr.bf16.mxu0 0
      %1530 = vmatpush1.bf16.msra.mxu0 0
      %1531 = vmatprep.subr.bf16.mxu0 0
      %1532 = vmatpush1.bf16.msra.mxu0 0
      %1533 = vmatprep.subr.bf16.mxu0 0
      %1534 = vmatpush1.bf16.msra.mxu0 0
      %1535 = vmatprep.subr.bf16.mxu0 0
      %1536 = vmatpush1.bf16.msra.mxu0 0
      %1537 = vmatprep.subr.bf16.mxu0 0
      %1538 = vmatpush1.bf16.msra.mxu0 0
      %1539 = vmatprep.subr.bf16.mxu0 0
      %1540 = vmatpush1.bf16.msra.mxu0 0
      %1541 = vmatprep.subr.bf16.mxu0 0
      %1542 = vmatpush1.bf16.msra.mxu0 0
      %1543 = vmatprep.mubr.bf16.mxu0 0
      %1544 = vmatmul.mubr.bf16.gmra.mrb[0].mxu0 %v1458
      %v1545 = vpop.f32.mrb[0].mxu0
      %v1546 = vadd.f32 0.0, %v1545
      %v1547 = vpop.f32.mrb[0].mxu0
      %v1548 = vpop.f32.mrb[0].mxu0
      %v1549 = vpop.f32.mrb[0].mxu0
      %1550 = vdwg.mxu0
      %1551 = vrot.lane.b32.xlu0 %v1441, 19
      %v1552 = vpop.permute.xlu0 %1551
      %1553 = vrot.lane.b32.xlu0 %v1442, 19
      %v1554 = vpop.permute.xlu0 %1553
      %1555 = vrot.lane.b32.xlu0 %v1443, 19
      %v1556 = vpop.permute.xlu0 %1555
      %1557 = vrot.lane.b32.xlu0 %v1444, 19
      %v1558 = vpop.permute.xlu0 %1557
      %v1559 = vsel %vm396, %v1552, %v1554
      %v1560 = vsel %vm396, %v1554, %v1556
      %v1561 = vsel %vm396, %v1556, %v1558
      %v1563 = vsel %vm1456, %v1430, 0
      %v1566 = vsel %vm1460, %v1559, 0
      %v1569 = vsel %vm1460, %v1560, 0
      %v1572 = vsel %vm1460, %v1561, 0
      %1574 = vmatprep.subr.bf16.mxu0 %v1569
      %1575 = vmatpush1.bf16.msra.mxu0 %v1566
      %1576 = vmatprep.subr.bf16.mxu0 0
      %1577 = vmatpush1.bf16.msra.mxu0 0
      %1578 = vmatprep.subr.bf16.mxu0 0
      %1579 = vmatpush1.bf16.msra.mxu0 0
      %1580 = vmatprep.subr.bf16.mxu0 0
      %1581 = vmatpush1.bf16.msra.mxu0 0
      %1582 = vmatprep.subr.bf16.mxu0 0
      %1583 = vmatpush1.bf16.msra.mxu0 0
      %1584 = vmatprep.subr.bf16.mxu0 0
      %1585 = vmatpush1.bf16.msra.mxu0 0
      %1586 = vmatprep.subr.bf16.mxu0 0
      %1587 = vmatpush1.bf16.msra.mxu0 0
      %1588 = vmatprep.subr.bf16.mxu0 0
      %1589 = vmatpush1.bf16.msra.mxu0 0
      %1590 = vmatprep.subr.bf16.mxu0 0
      %1591 = vmatpush1.bf16.msra.mxu0 0
      %1592 = vmatprep.subr.bf16.mxu0 0
      %1593 = vmatpush1.bf16.msra.mxu0 0
      %1594 = vmatprep.subr.bf16.mxu0 0
      %1595 = vmatpush1.bf16.msra.mxu0 0
      %1596 = vmatprep.subr.bf16.mxu0 0
      %1597 = vmatpush1.bf16.msra.mxu0 0
      %1598 = vmatprep.subr.bf16.mxu0 0
      %1599 = vmatpush1.bf16.msra.mxu0 0
      %1600 = vmatprep.subr.bf16.mxu0 0
      %1601 = vmatpush1.bf16.msra.mxu0 0
      %1602 = vmatprep.subr.bf16.mxu0 0
      %1603 = vmatpush1.bf16.msra.mxu0 0
      %1604 = vmatprep.subr.bf16.mxu0 0
      %1605 = vmatpush1.bf16.msra.mxu0 0
      %1606 = vmatprep.mubr.bf16.mxu0 0
      %1607 = vmatmul.mubr.bf16.gmra.mrb[0].mxu0 %v1563
      %v1608 = vpop.f32.mrb[0].mxu0
      %v1609 = vadd.f32 %v1505, %v1608
      %v1610 = vpop.f32.mrb[0].mxu0
      %v1611 = vadd.f32 %v1507, %v1610
      %v1612 = vpop.f32.mrb[0].mxu0
      %v1613 = vpop.f32.mrb[0].mxu0
      %1614 = vdwg.mxu0
      %1615 = vmatprep.subr.bf16.mxu0 0
      %1616 = vmatpush1.bf16.msra.mxu0 %v1572
      %1617 = vmatprep.subr.bf16.mxu0 0
      %1618 = vmatpush1.bf16.msra.mxu0 0
      %1619 = vmatprep.subr.bf16.mxu0 0
      %1620 = vmatpush1.bf16.msra.mxu0 0
      %1621 = vmatprep.subr.bf16.mxu0 0
      %1622 = vmatpush1.bf16.msra.mxu0 0
      %1623 = vmatprep.subr.bf16.mxu0 0
      %1624 = vmatpush1.bf16.msra.mxu0 0
      %1625 = vmatprep.subr.bf16.mxu0 0
      %1626 = vmatpush1.bf16.msra.mxu0 0
      %1627 = vmatprep.subr.bf16.mxu0 0
      %1628 = vmatpush1.bf16.msra.mxu0 0
      %1629 = vmatprep.subr.bf16.mxu0 0
      %1630 = vmatpush1.bf16.msra.mxu0 0
      %1631 = vmatprep.subr.bf16.mxu0 0
      %1632 = vmatpush1.bf16.msra.mxu0 0
      %1633 = vmatprep.subr.bf16.mxu0 0
      %1634 = vmatpush1.bf16.msra.mxu0 0
      %1635 = vmatprep.subr.bf16.mxu0 0
      %1636 = vmatpush1.bf16.msra.mxu0 0
      %1637 = vmatprep.subr.bf16.mxu0 0
      %1638 = vmatpush1.bf16.msra.mxu0 0
      %1639 = vmatprep.subr.bf16.mxu0 0
      %1640 = vmatpush1.bf16.msra.mxu0 0
      %1641 = vmatprep.subr.bf16.mxu0 0
      %1642 = vmatpush1.bf16.msra.mxu0 0
      %1643 = vmatprep.subr.bf16.mxu0 0
      %1644 = vmatpush1.bf16.msra.mxu0 0
      %1645 = vmatprep.subr.bf16.mxu0 0
      %1646 = vmatpush1.bf16.msra.mxu0 0
      %1647 = vmatprep.mubr.bf16.mxu0 0
      %1648 = vmatmul.mubr.bf16.gmra.mrb[0].mxu0 %v1563
      %v1649 = vpop.f32.mrb[0].mxu0
      %v1650 = vadd.f32 %v1546, %v1649
      %v1651 = vpop.f32.mrb[0].mxu0
      %v1652 = vpop.f32.mrb[0].mxu0
      %v1653 = vpop.f32.mrb[0].mxu0
      %1654 = vdwg.mxu0
      %s1655 = scalar_lea.vmem %s3, 4
      %v1656 = vld [vmem:[%s1655] sm:$0x3]
      %1657 = vrot.lane.b32.xlu0 %v1441, 1
      %v1658 = vpop.permute.xlu0 %1657
      %1659 = vrot.lane.b32.xlu0 %v1442, 1
      %v1660 = vpop.permute.xlu0 %1659
      %1661 = vrot.lane.b32.xlu0 %v1443, 1
      %v1662 = vpop.permute.xlu0 %1661
      %1663 = vrot.lane.b32.xlu0 %v1444, 1
      %v1664 = vpop.permute.xlu0 %1663
      %v1665 = vsel %vm651, %v1658, %v1660
      %v1666 = vsel %vm651, %v1660, %v1662
      %v1667 = vsel %vm651, %v1662, %v1664
      %v1669 = vsel %vm1456, %v1656, 0
      %v1672 = vsel %vm1460, %v1665, 0
      %v1675 = vsel %vm1460, %v1666, 0
      %v1678 = vsel %vm1460, %v1667, 0
      %1680 = vmatprep.subr.bf16.mxu0 %v1675
      %1681 = vmatpush1.bf16.msra.mxu0 %v1672
      %1682 = vmatprep.subr.bf16.mxu0 0
      %1683 = vmatpush1.bf16.msra.mxu0 0
      %1684 = vmatprep.subr.bf16.mxu0 0
      %1685 = vmatpush1.bf16.msra.mxu0 0
      %1686 = vmatprep.subr.bf16.mxu0 0
      %1687 = vmatpush1.bf16.msra.mxu0 0
      %1688 = vmatprep.subr.bf16.mxu0 0
      %1689 = vmatpush1.bf16.msra.mxu0 0
      %1690 = vmatprep.subr.bf16.mxu0 0
      %1691 = vmatpush1.bf16.msra.mxu0 0
      %1692 = vmatprep.subr.bf16.mxu0 0
      %1693 = vmatpush1.bf16.msra.mxu0 0
      %1694 = vmatprep.subr.bf16.mxu0 0
      %1695 = vmatpush1.bf16.msra.mxu0 0
      %1696 = vmatprep.subr.bf16.mxu0 0
      %1697 = vmatpush1.bf16.msra.mxu0 0
      %1698 = vmatprep.subr.bf16.mxu0 0
      %1699 = vmatpush1.bf16.msra.mxu0 0
      %1700 = vmatprep.subr.bf16.mxu0 0
      %1701 = vmatpush1.bf16.msra.mxu0 0
      %1702 = vmatprep.subr.bf16.mxu0 0
      %1703 = vmatpush1.bf16.msra.mxu0 0
      %1704 = vmatprep.subr.bf16.mxu0 0
      %1705 = vmatpush1.bf16.msra.mxu0 0
      %1706 = vmatprep.subr.bf16.mxu0 0
      %1707 = vmatpush1.bf16.msra.mxu0 0
      %1708 = vmatprep.subr.bf16.mxu0 0
      %1709 = vmatpush1.bf16.msra.mxu0 0
      %1710 = vmatprep.subr.bf16.mxu0 0
      %1711 = vmatpush1.bf16.msra.mxu0 0
      %1712 = vmatprep.mubr.bf16.mxu0 0
      %1713 = vmatmul.mubr.bf16.gmra.mrb[0].mxu0 %v1669
      %v1714 = vpop.f32.mrb[0].mxu0
      %v1715 = vadd.f32 0.0, %v1714
      %v1716 = vpop.f32.mrb[0].mxu0
      %v1717 = vadd.f32 0.0, %v1716
      %v1718 = vpop.f32.mrb[0].mxu0
      %v1719 = vpop.f32.mrb[0].mxu0
      %1720 = vdwg.mxu0
      %1721 = vmatprep.subr.bf16.mxu0 0
      %1722 = vmatpush1.bf16.msra.mxu0 %v1678
      %1723 = vmatprep.subr.bf16.mxu0 0
      %1724 = vmatpush1.bf16.msra.mxu0 0
      %1725 = vmatprep.subr.bf16.mxu0 0
      %1726 = vmatpush1.bf16.msra.mxu0 0
      %1727 = vmatprep.subr.bf16.mxu0 0
      %1728 = vmatpush1.bf16.msra.mxu0 0
      %1729 = vmatprep.subr.bf16.mxu0 0
      %1730 = vmatpush1.bf16.msra.mxu0 0
      %1731 = vmatprep.subr.bf16.mxu0 0
      %1732 = vmatpush1.bf16.msra.mxu0 0
      %1733 = vmatprep.subr.bf16.mxu0 0
      %1734 = vmatpush1.bf16.msra.mxu0 0
      %1735 = vmatprep.subr.bf16.mxu0 0
      %1736 = vmatpush1.bf16.msra.mxu0 0
      %1737 = vmatprep.subr.bf16.mxu0 0
      %1738 = vmatpush1.bf16.msra.mxu0 0
      %1739 = vmatprep.subr.bf16.mxu0 0
      %1740 = vmatpush1.bf16.msra.mxu0 0
      %1741 = vmatprep.subr.bf16.mxu0 0
      %1742 = vmatpush1.bf16.msra.mxu0 0
      %1743 = vmatprep.subr.bf16.mxu0 0
      %1744 = vmatpush1.bf16.msra.mxu0 0
      %1745 = vmatprep.subr.bf16.mxu0 0
      %1746 = vmatpush1.bf16.msra.mxu0 0
      %1747 = vmatprep.subr.bf16.mxu0 0
      %1748 = vmatpush1.bf16.msra.mxu0 0
      %1749 = vmatprep.subr.bf16.mxu0 0
      %1750 = vmatpush1.bf16.msra.mxu0 0
      %1751 = vmatprep.subr.bf16.mxu0 0
      %1752 = vmatpush1.bf16.msra.mxu0 0
      %1753 = vmatprep.mubr.bf16.mxu0 0
      %1754 = vmatmul.mubr.bf16.gmra.mrb[0].mxu0 %v1669
      %v1755 = vpop.f32.mrb[0].mxu0
      %v1756 = vadd.f32 0.0, %v1755
      %v1757 = vpop.f32.mrb[0].mxu0
      %v1758 = vpop.f32.mrb[0].mxu0
      %v1759 = vpop.f32.mrb[0].mxu0
      %1760 = vdwg.mxu0
      %v1761 = vadd.f32 %v1609, %v1715
      %v1762 = vadd.f32 %v1611, %v1717
      %v1763 = vadd.f32 %v1650, %v1756
      %s1764 = scalar_lea.vmem %s3, 6
      %v1765 = vld [vmem:[%s1764] sm:$0x3]
      %v1766 = vld [vmem:[#allocation2 + $0x4] sm:$0xff]
      %v1767 = vld [vmem:[#allocation2 + $0xc] sm:$0xf]
      %v1770 = vunpack.c.l.b16 %v1766
      %v1771 = vunpack.c.h.b16 %v1766
      %v1772 = vunpack.c.l.b16 %v1767
      %v1773 = vpack.c.b16 %v1770, %v1770
      %v1774 = vpack.c.b16 %v1771, %v1771
      %v1775 = vpack.c.b16 %v1772, %v1772
      %v1777 = vsel %vm1456, %v1765, 0
      %v1780 = vsel %vm1460, %v1773, 0
      %v1783 = vsel %vm1460, %v1774, 0
      %v1786 = vsel %vm1460, %v1775, 0
      %1788 = vmatprep.subr.bf16.mxu0 %v1783
      %1789 = vmatpush1.bf16.msra.mxu0 %v1780
      %1790 = vmatprep.subr.bf16.mxu0 0
      %1791 = vmatpush1.bf16.msra.mxu0 0
      %1792 = vmatprep.subr.bf16.mxu0 0
      %1793 = vmatpush1.bf16.msra.mxu0 0
      %1794 = vmatprep.subr.bf16.mxu0 0
      %1795 = vmatpush1.bf16.msra.mxu0 0
      %1796 = vmatprep.subr.bf16.mxu0 0
      %1797 = vmatpush1.bf16.msra.mxu0 0
      %1798 = vmatprep.subr.bf16.mxu0 0
      %1799 = vmatpush1.bf16.msra.mxu0 0
      %1800 = vmatprep.subr.bf16.mxu0 0
      %1801 = vmatpush1.bf16.msra.mxu0 0
      %1802 = vmatprep.subr.bf16.mxu0 0
      %1803 = vmatpush1.bf16.msra.mxu0 0
      %1804 = vmatprep.subr.bf16.mxu0 0
      %1805 = vmatpush1.bf16.msra.mxu0 0
      %1806 = vmatprep.subr.bf16.mxu0 0
      %1807 = vmatpush1.bf16.msra.mxu0 0
      %1808 = vmatprep.subr.bf16.mxu0 0
      %1809 = vmatpush1.bf16.msra.mxu0 0
      %1810 = vmatprep.subr.bf16.mxu0 0
      %1811 = vmatpush1.bf16.msra.mxu0 0
      %1812 = vmatprep.subr.bf16.mxu0 0
      %1813 = vmatpush1.bf16.msra.mxu0 0
      %1814 = vmatprep.subr.bf16.mxu0 0
      %1815 = vmatpush1.bf16.msra.mxu0 0
      %1816 = vmatprep.subr.bf16.mxu0 0
      %1817 = vmatpush1.bf16.msra.mxu0 0
      %1818 = vmatprep.subr.bf16.mxu0 0
      %1819 = vmatpush1.bf16.msra.mxu0 0
      %1820 = vmatprep.mubr.bf16.mxu0 0
      %1821 = vmatmul.mubr.bf16.gmra.mrb[0].mxu0 %v1777
      %v1822 = vpop.f32.mrb[0].mxu0
      %v1823 = vadd.f32 0.0, %v1822
      %v1824 = vpop.f32.mrb[0].mxu0
      %v1825 = vadd.f32 0.0, %v1824
      %v1826 = vpop.f32.mrb[0].mxu0
      %v1827 = vpop.f32.mrb[0].mxu0
      %1828 = vdwg.mxu0
      %1829 = vmatprep.subr.bf16.mxu0 0
      %1830 = vmatpush1.bf16.msra.mxu0 %v1786
      %1831 = vmatprep.subr.bf16.mxu0 0
      %1832 = vmatpush1.bf16.msra.mxu0 0
      %1833 = vmatprep.subr.bf16.mxu0 0
      %1834 = vmatpush1.bf16.msra.mxu0 0
      %1835 = vmatprep.subr.bf16.mxu0 0
      %1836 = vmatpush1.bf16.msra.mxu0 0
      %1837 = vmatprep.subr.bf16.mxu0 0
      %1838 = vmatpush1.bf16.msra.mxu0 0
      %1839 = vmatprep.subr.bf16.mxu0 0
      %1840 = vmatpush1.bf16.msra.mxu0 0
      %1841 = vmatprep.subr.bf16.mxu0 0
      %1842 = vmatpush1.bf16.msra.mxu0 0
      %1843 = vmatprep.subr.bf16.mxu0 0
      %1844 = vmatpush1.bf16.msra.mxu0 0
      %1845 = vmatprep.subr.bf16.mxu0 0
      %1846 = vmatpush1.bf16.msra.mxu0 0
      %1847 = vmatprep.subr.bf16.mxu0 0
      %1848 = vmatpush1.bf16.msra.mxu0 0
      %1849 = vmatprep.subr.bf16.mxu0 0
      %1850 = vmatpush1.bf16.msra.mxu0 0
      %1851 = vmatprep.subr.bf16.mxu0 0
      %1852 = vmatpush1.bf16.msra.mxu0 0
      %1853 = vmatprep.subr.bf16.mxu0 0
      %1854 = vmatpush1.bf16.msra.mxu0 0
      %1855 = vmatprep.subr.bf16.mxu0 0
      %1856 = vmatpush1.bf16.msra.mxu0 0
      %1857 = vmatprep.subr.bf16.mxu0 0
      %1858 = vmatpush1.bf16.msra.mxu0 0
      %1859 = vmatprep.subr.bf16.mxu0 0
      %1860 = vmatpush1.bf16.msra.mxu0 0
      %1861 = vmatprep.mubr.bf16.mxu0 0
      %1862 = vmatmul.mubr.bf16.gmra.mrb[0].mxu0 %v1777
      %v1863 = vpop.f32.mrb[0].mxu0
      %v1864 = vadd.f32 0.0, %v1863
      %v1865 = vpop.f32.mrb[0].mxu0
      %v1866 = vpop.f32.mrb[0].mxu0
      %v1867 = vpop.f32.mrb[0].mxu0
      %1868 = vdwg.mxu0
      %v1869 = vadd.f32 %v1761, %v1823
      %v1870 = vadd.f32 %v1762, %v1825
      %v1871 = vadd.f32 %v1763, %v1864
      %v1872 = vld [vmem:[%s4] sm:$0xf]
      %1874 = vset.pattern.permute.xlu0 0
      %1875 = vperm.xlu0 %1874, %v1872
      %v1876 = vpop.permute.xlu0 %1875
      %v1878 = vadd.f32 %v1869, %v1876
      %v1879 = vadd.f32 %v1870, %v1876
      %v1880 = vadd.f32 %v1871, %v1876
      %v1881 = vmax.f32 %v1878, 0.0
      %v1882 = vmax.f32 %v1879, 0.0
      %v1883 = vmax.f32 %v1880, 0.0
      %1884 = vst [vmem:[%s251] sm:$0xf] %v1881
      %1885 = vst [vmem:[%s251 + $0x8] sm:$0xf] %v1882
      %1886 = vst [vmem:[%s251 + $0x10] sm:$0xf] %v1883
      %s1887 = scalar_lea.vmem %s3, 8
      %v1888 = vld [vmem:[%s1887] sm:$0x3]
      %v1889 = vld [vmem:[#allocation2] sm:$0xff]
      %v1890 = vld [vmem:[#allocation2 + $0x8] sm:$0xff]
      %s1891 = scalar_lea.vmem %s3, 10
      %v1892 = vld [vmem:[%s1891] sm:$0x3]
      %v1895 = vunpack.c.l.b16 %v1889
      %v1896 = vunpack.c.h.b16 %v1889
      %v1897 = vunpack.c.l.b16 %v1890
      %v1898 = vunpack.c.h.b16 %v1890
      %v1899 = vpack.c.b16 %v1895, %v1895
      %v1900 = vpack.c.b16 %v1896, %v1896
      %v1901 = vpack.c.b16 %v1897, %v1897
      %v1902 = vpack.c.b16 %v1898, %v1898
      %1903 = vrot.lane.b32.xlu0 %v1899, 17
      %v1904 = vpop.permute.xlu0 %1903
      %1905 = vrot.lane.b32.xlu0 %v1900, 17
      %v1906 = vpop.permute.xlu0 %1905
      %1907 = vrot.lane.b32.xlu0 %v1901, 17
      %v1908 = vpop.permute.xlu0 %1907
      %1909 = vrot.lane.b32.xlu0 %v1902, 17
      %v1910 = vpop.permute.xlu0 %1909
      %v1911 = vsel %vm522, %v1904, %v1906
      %v1912 = vsel %vm522, %v1906, %v1908
      %v1913 = vsel %vm522, %v1908, %v1910
      %v1915 = vsel %vm1456, %v1892, 0
      %v1918 = vsel %vm1460, %v1911, 0
      %v1921 = vsel %vm1460, %v1912, 0
      %v1924 = vsel %vm1460, %v1913, 0
      %1926 = vmatprep.subr.bf16.mxu0 %v1921
      %1927 = vmatpush1.bf16.msra.mxu0 %v1918
      %1928 = vmatprep.subr.bf16.mxu0 0
      %1929 = vmatpush1.bf16.msra.mxu0 0
      %1930 = vmatprep.subr.bf16.mxu0 0
      %1931 = vmatpush1.bf16.msra.mxu0 0
      %1932 = vmatprep.subr.bf16.mxu0 0
      %1933 = vmatpush1.bf16.msra.mxu0 0
      %1934 = vmatprep.subr.bf16.mxu0 0
      %1935 = vmatpush1.bf16.msra.mxu0 0
      %1936 = vmatprep.subr.bf16.mxu0 0
      %1937 = vmatpush1.bf16.msra.mxu0 0
      %1938 = vmatprep.subr.bf16.mxu0 0
      %1939 = vmatpush1.bf16.msra.mxu0 0
      %1940 = vmatprep.subr.bf16.mxu0 0
      %1941 = vmatpush1.bf16.msra.mxu0 0
      %1942 = vmatprep.subr.bf16.mxu0 0
      %1943 = vmatpush1.bf16.msra.mxu0 0
      %1944 = vmatprep.subr.bf16.mxu0 0
      %1945 = vmatpush1.bf16.msra.mxu0 0
      %1946 = vmatprep.subr.bf16.mxu0 0
      %1947 = vmatpush1.bf16.msra.mxu0 0
      %1948 = vmatprep.subr.bf16.mxu0 0
      %1949 = vmatpush1.bf16.msra.mxu0 0
      %1950 = vmatprep.subr.bf16.mxu0 0
      %1951 = vmatpush1.bf16.msra.mxu0 0
      %1952 = vmatprep.subr.bf16.mxu0 0
      %1953 = vmatpush1.bf16.msra.mxu0 0
      %1954 = vmatprep.subr.bf16.mxu0 0
      %1955 = vmatpush1.bf16.msra.mxu0 0
      %1956 = vmatprep.subr.bf16.mxu0 0
      %1957 = vmatpush1.bf16.msra.mxu0 0
      %1958 = vmatprep.mubr.bf16.mxu0 0
      %1959 = vmatmul.mubr.bf16.gmra.mrb[0].mxu0 %v1915
      %v1960 = vpop.f32.mrb[0].mxu0
      %v1961 = vadd.f32 0.0, %v1960
      %v1962 = vpop.f32.mrb[0].mxu0
      %v1963 = vadd.f32 0.0, %v1962
      %v1964 = vpop.f32.mrb[0].mxu0
      %v1965 = vpop.f32.mrb[0].mxu0
      %1966 = vdwg.mxu0
      %1967 = vmatprep.subr.bf16.mxu0 0
      %1968 = vmatpush1.bf16.msra.mxu0 %v1924
      %1969 = vmatprep.subr.bf16.mxu0 0
      %1970 = vmatpush1.bf16.msra.mxu0 0
      %1971 = vmatprep.subr.bf16.mxu0 0
      %1972 = vmatpush1.bf16.msra.mxu0 0
      %1973 = vmatprep.subr.bf16.mxu0 0
      %1974 = vmatpush1.bf16.msra.mxu0 0
      %1975 = vmatprep.subr.bf16.mxu0 0
      %1976 = vmatpush1.bf16.msra.mxu0 0
      %1977 = vmatprep.subr.bf16.mxu0 0
      %1978 = vmatpush1.bf16.msra.mxu0 0
      %1979 = vmatprep.subr.bf16.mxu0 0
      %1980 = vmatpush1.bf16.msra.mxu0 0
      %1981 = vmatprep.subr.bf16.mxu0 0
      %1982 = vmatpush1.bf16.msra.mxu0 0
      %1983 = vmatprep.subr.bf16.mxu0 0
      %1984 = vmatpush1.bf16.msra.mxu0 0
      %1985 = vmatprep.subr.bf16.mxu0 0
      %1986 = vmatpush1.bf16.msra.mxu0 0
      %1987 = vmatprep.subr.bf16.mxu0 0
      %1988 = vmatpush1.bf16.msra.mxu0 0
      %1989 = vmatprep.subr.bf16.mxu0 0
      %1990 = vmatpush1.bf16.msra.mxu0 0
      %1991 = vmatprep.subr.bf16.mxu0 0
      %1992 = vmatpush1.bf16.msra.mxu0 0
      %1993 = vmatprep.subr.bf16.mxu0 0
      %1994 = vmatpush1.bf16.msra.mxu0 0
      %1995 = vmatprep.subr.bf16.mxu0 0
      %1996 = vmatpush1.bf16.msra.mxu0 0
      %1997 = vmatprep.subr.bf16.mxu0 0
      %1998 = vmatpush1.bf16.msra.mxu0 0
      %1999 = vmatprep.mubr.bf16.mxu0 0
      %2000 = vmatmul.mubr.bf16.gmra.mrb[0].mxu0 %v1915
      %v2001 = vpop.f32.mrb[0].mxu0
      %v2002 = vadd.f32 0.0, %v2001
      %v2003 = vpop.f32.mrb[0].mxu0
      %v2004 = vpop.f32.mrb[0].mxu0
      %v2005 = vpop.f32.mrb[0].mxu0
      %2006 = vdwg.mxu0
      %2007 = vrot.lane.b32.xlu0 %v1899, 18
      %v2008 = vpop.permute.xlu0 %2007
      %2009 = vrot.lane.b32.xlu0 %v1900, 18
      %v2010 = vpop.permute.xlu0 %2009
      %2011 = vrot.lane.b32.xlu0 %v1901, 18
      %v2012 = vpop.permute.xlu0 %2011
      %2013 = vrot.lane.b32.xlu0 %v1902, 18
      %v2014 = vpop.permute.xlu0 %2013
      %v2015 = vsel %vm289, %v2008, %v2010
      %v2016 = vsel %vm289, %v2010, %v2012
      %v2017 = vsel %vm289, %v2012, %v2014
      %v2019 = vsel %vm1456, %v1888, 0
      %v2022 = vsel %vm1460, %v2015, 0
      %v2025 = vsel %vm1460, %v2016, 0
      %v2028 = vsel %vm1460, %v2017, 0
      %2030 = vmatprep.subr.bf16.mxu0 %v2025
      %2031 = vmatpush1.bf16.msra.mxu0 %v2022
      %2032 = vmatprep.subr.bf16.mxu0 0
      %2033 = vmatpush1.bf16.msra.mxu0 0
      %2034 = vmatprep.subr.bf16.mxu0 0
      %2035 = vmatpush1.bf16.msra.mxu0 0
      %2036 = vmatprep.subr.bf16.mxu0 0
      %2037 = vmatpush1.bf16.msra.mxu0 0
      %2038 = vmatprep.subr.bf16.mxu0 0
      %2039 = vmatpush1.bf16.msra.mxu0 0
      %2040 = vmatprep.subr.bf16.mxu0 0
      %2041 = vmatpush1.bf16.msra.mxu0 0
      %2042 = vmatprep.subr.bf16.mxu0 0
      %2043 = vmatpush1.bf16.msra.mxu0 0
      %2044 = vmatprep.subr.bf16.mxu0 0
      %2045 = vmatpush1.bf16.msra.mxu0 0
      %2046 = vmatprep.subr.bf16.mxu0 0
      %2047 = vmatpush1.bf16.msra.mxu0 0
      %2048 = vmatprep.subr.bf16.mxu0 0
      %2049 = vmatpush1.bf16.msra.mxu0 0
      %2050 = vmatprep.subr.bf16.mxu0 0
      %2051 = vmatpush1.bf16.msra.mxu0 0
      %2052 = vmatprep.subr.bf16.mxu0 0
      %2053 = vmatpush1.bf16.msra.mxu0 0
      %2054 = vmatprep.subr.bf16.mxu0 0
      %2055 = vmatpush1.bf16.msra.mxu0 0
      %2056 = vmatprep.subr.bf16.mxu0 0
      %2057 = vmatpush1.bf16.msra.mxu0 0
      %2058 = vmatprep.subr.bf16.mxu0 0
      %2059 = vmatpush1.bf16.msra.mxu0 0
      %2060 = vmatprep.subr.bf16.mxu0 0
      %2061 = vmatpush1.bf16.msra.mxu0 0
      %2062 = vmatprep.mubr.bf16.mxu0 0
      %2063 = vmatmul.mubr.bf16.gmra.mrb[0].mxu0 %v2019
      %v2064 = vpop.f32.mrb[0].mxu0
      %v2065 = vadd.f32 %v1961, %v2064
      %v2066 = vpop.f32.mrb[0].mxu0
      %v2067 = vadd.f32 %v1963, %v2066
      %v2068 = vpop.f32.mrb[0].mxu0
      %v2069 = vpop.f32.mrb[0].mxu0
      %2070 = vdwg.mxu0
      %2071 = vmatprep.subr.bf16.mxu0 0
      %2072 = vmatpush1.bf16.msra.mxu0 %v2028
      %2073 = vmatprep.subr.bf16.mxu0 0
      %2074 = vmatpush1.bf16.msra.mxu0 0
      %2075 = vmatprep.subr.bf16.mxu0 0
      %2076 = vmatpush1.bf16.msra.mxu0 0
      %2077 = vmatprep.subr.bf16.mxu0 0
      %2078 = vmatpush1.bf16.msra.mxu0 0
      %2079 = vmatprep.subr.bf16.mxu0 0
      %2080 = vmatpush1.bf16.msra.mxu0 0
      %2081 = vmatprep.subr.bf16.mxu0 0
      %2082 = vmatpush1.bf16.msra.mxu0 0
      %2083 = vmatprep.subr.bf16.mxu0 0
      %2084 = vmatpush1.bf16.msra.mxu0 0
      %2085 = vmatprep.subr.bf16.mxu0 0
      %2086 = vmatpush1.bf16.msra.mxu0 0
      %2087 = vmatprep.subr.bf16.mxu0 0
      %2088 = vmatpush1.bf16.msra.mxu0 0
      %2089 = vmatprep.subr.bf16.mxu0 0
      %2090 = vmatpush1.bf16.msra.mxu0 0
      %2091 = vmatprep.subr.bf16.mxu0 0
      %2092 = vmatpush1.bf16.msra.mxu0 0
      %2093 = vmatprep.subr.bf16.mxu0 0
      %2094 = vmatpush1.bf16.msra.mxu0 0
      %2095 = vmatprep.subr.bf16.mxu0 0
      %2096 = vmatpush1.bf16.msra.mxu0 0
      %2097 = vmatprep.subr.bf16.mxu0 0
      %2098 = vmatpush1.bf16.msra.mxu0 0
      %2099 = vmatprep.subr.bf16.mxu0 0
      %2100 = vmatpush1.bf16.msra.mxu0 0
      %2101 = vmatprep.subr.bf16.mxu0 0
      %2102 = vmatpush1.bf16.msra.mxu0 0
      %2103 = vmatprep.mubr.bf16.mxu0 0
      %2104 = vmatmul.mubr.bf16.gmra.mrb[0].mxu0 %v2019
      %v2105 = vpop.f32.mrb[0].mxu0
      %v2106 = vadd.f32 %v2002, %v2105
      %v2107 = vpop.f32.mrb[0].mxu0
      %v2108 = vpop.f32.mrb[0].mxu0
      %v2109 = vpop.f32.mrb[0].mxu0
      %2110 = vdwg.mxu0
      %s2111 = scalar_lea.vmem %s3, 12
      %v2112 = vld [vmem:[%s2111] sm:$0x3]
      %v2113 = vld [vmem:[#allocation2 + $0x4] sm:$0xff]
      %v2114 = vld [vmem:[#allocation2 + $0xc] sm:$0xf]
      %v2117 = vunpack.c.l.b16 %v2113
      %v2118 = vunpack.c.h.b16 %v2113
      %v2119 = vunpack.c.l.b16 %v2114
      %v2120 = vpack.c.b16 %v2117, %v2117
      %v2121 = vpack.c.b16 %v2118, %v2118
      %v2122 = vpack.c.b16 %v2119, %v2119
      %v2124 = vsel %vm1456, %v2112, 0
      %v2127 = vsel %vm1460, %v2120, 0
      %v2130 = vsel %vm1460, %v2121, 0
      %v2133 = vsel %vm1460, %v2122, 0
      %2135 = vmatprep.subr.bf16.mxu0 %v2130
      %2136 = vmatpush1.bf16.msra.mxu0 %v2127
      %2137 = vmatprep.subr.bf16.mxu0 0
      %2138 = vmatpush1.bf16.msra.mxu0 0
      %2139 = vmatprep.subr.bf16.mxu0 0
      %2140 = vmatpush1.bf16.msra.mxu0 0
      %2141 = vmatprep.subr.bf16.mxu0 0
      %2142 = vmatpush1.bf16.msra.mxu0 0
      %2143 = vmatprep.subr.bf16.mxu0 0
      %2144 = vmatpush1.bf16.msra.mxu0 0
      %2145 = vmatprep.subr.bf16.mxu0 0
      %2146 = vmatpush1.bf16.msra.mxu0 0
      %2147 = vmatprep.subr.bf16.mxu0 0
      %2148 = vmatpush1.bf16.msra.mxu0 0
      %2149 = vmatprep.subr.bf16.mxu0 0
      %2150 = vmatpush1.bf16.msra.mxu0 0
      %2151 = vmatprep.subr.bf16.mxu0 0
      %2152 = vmatpush1.bf16.msra.mxu0 0
      %2153 = vmatprep.subr.bf16.mxu0 0
      %2154 = vmatpush1.bf16.msra.mxu0 0
      %2155 = vmatprep.subr.bf16.mxu0 0
      %2156 = vmatpush1.bf16.msra.mxu0 0
      %2157 = vmatprep.subr.bf16.mxu0 0
      %2158 = vmatpush1.bf16.msra.mxu0 0
      %2159 = vmatprep.subr.bf16.mxu0 0
      %2160 = vmatpush1.bf16.msra.mxu0 0
      %2161 = vmatprep.subr.bf16.mxu0 0
      %2162 = vmatpush1.bf16.msra.mxu0 0
      %2163 = vmatprep.subr.bf16.mxu0 0
      %2164 = vmatpush1.bf16.msra.mxu0 0
      %2165 = vmatprep.subr.bf16.mxu0 0
      %2166 = vmatpush1.bf16.msra.mxu0 0
      %2167 = vmatprep.mubr.bf16.mxu0 0
      %2168 = vmatmul.mubr.bf16.gmra.mrb[0].mxu0 %v2124
      %v2169 = vpop.f32.mrb[0].mxu0
      %v2170 = vadd.f32 0.0, %v2169
      %v2171 = vpop.f32.mrb[0].mxu0
      %v2172 = vadd.f32 0.0, %v2171
      %v2173 = vpop.f32.mrb[0].mxu0
      %v2174 = vpop.f32.mrb[0].mxu0
      %2175 = vdwg.mxu0
      %2176 = vmatprep.subr.bf16.mxu0 0
      %2177 = vmatpush1.bf16.msra.mxu0 %v2133
      %2178 = vmatprep.subr.bf16.mxu0 0
      %2179 = vmatpush1.bf16.msra.mxu0 0
      %2180 = vmatprep.subr.bf16.mxu0 0
      %2181 = vmatpush1.bf16.msra.mxu0 0
      %2182 = vmatprep.subr.bf16.mxu0 0
      %2183 = vmatpush1.bf16.msra.mxu0 0
      %2184 = vmatprep.subr.bf16.mxu0 0
      %2185 = vmatpush1.bf16.msra.mxu0 0
      %2186 = vmatprep.subr.bf16.mxu0 0
      %2187 = vmatpush1.bf16.msra.mxu0 0
      %2188 = vmatprep.subr.bf16.mxu0 0
      %2189 = vmatpush1.bf16.msra.mxu0 0
      %2190 = vmatprep.subr.bf16.mxu0 0
      %2191 = vmatpush1.bf16.msra.mxu0 0
      %2192 = vmatprep.subr.bf16.mxu0 0
      %2193 = vmatpush1.bf16.msra.mxu0 0
      %2194 = vmatprep.subr.bf16.mxu0 0
      %2195 = vmatpush1.bf16.msra.mxu0 0
      %2196 = vmatprep.subr.bf16.mxu0 0
      %2197 = vmatpush1.bf16.msra.mxu0 0
      %2198 = vmatprep.subr.bf16.mxu0 0
      %2199 = vmatpush1.bf16.msra.mxu0 0
      %2200 = vmatprep.subr.bf16.mxu0 0
      %2201 = vmatpush1.bf16.msra.mxu0 0
      %2202 = vmatprep.subr.bf16.mxu0 0
      %2203 = vmatpush1.bf16.msra.mxu0 0
      %2204 = vmatprep.subr.bf16.mxu0 0
      %2205 = vmatpush1.bf16.msra.mxu0 0
      %2206 = vmatprep.subr.bf16.mxu0 0
      %2207 = vmatpush1.bf16.msra.mxu0 0
      %2208 = vmatprep.mubr.bf16.mxu0 0
      %2209 = vmatmul.mubr.bf16.gmra.mrb[0].mxu0 %v2124
      %v2210 = vpop.f32.mrb[0].mxu0
      %v2211 = vadd.f32 0.0, %v2210
      %v2212 = vpop.f32.mrb[0].mxu0
      %v2213 = vpop.f32.mrb[0].mxu0
      %v2214 = vpop.f32.mrb[0].mxu0
      %2215 = vdwg.mxu0
      %v2216 = vadd.f32 %v2065, %v2170
      %v2217 = vadd.f32 %v2067, %v2172
      %v2218 = vadd.f32 %v2106, %v2211
      %s2219 = scalar_lea.vmem %s3, 14
      %v2220 = vld [vmem:[%s2219] sm:$0x3]
      %v2221 = vld [vmem:[#allocation2 + $0x4] sm:$0xff]
      %v2222 = vld [vmem:[#allocation2 + $0xc] sm:$0xff]
      %v2225 = vunpack.c.l.b16 %v2221
      %v2226 = vunpack.c.h.b16 %v2221
      %v2227 = vunpack.c.l.b16 %v2222
      %v2228 = vunpack.c.h.b16 %v2222
      %v2229 = vpack.c.b16 %v2225, %v2225
      %v2230 = vpack.c.b16 %v2226, %v2226
      %v2231 = vpack.c.b16 %v2227, %v2227
      %v2232 = vpack.c.b16 %v2228, %v2228
      %2233 = vrot.lane.b32.xlu0 %v2229, 127
      %v2234 = vpop.permute.xlu0 %2233
      %2235 = vrot.lane.b32.xlu0 %v2230, 127
      %v2236 = vpop.permute.xlu0 %2235
      %2237 = vrot.lane.b32.xlu0 %v2231, 127
      %v2238 = vpop.permute.xlu0 %2237
      %2239 = vrot.lane.b32.xlu0 %v2232, 127
      %v2240 = vpop.permute.xlu0 %2239
      %v2241 = vsel %vm896, %v2234, %v2236
      %v2242 = vsel %vm896, %v2236, %v2238
      %v2243 = vsel %vm896, %v2238, %v2240
      %v2245 = vsel %vm1456, %v2220, 0
      %v2248 = vsel %vm1460, %v2241, 0
      %v2251 = vsel %vm1460, %v2242, 0
      %v2254 = vsel %vm1460, %v2243, 0
      %2256 = vmatprep.subr.bf16.mxu0 %v2251
      %2257 = vmatpush1.bf16.msra.mxu0 %v2248
      %2258 = vmatprep.subr.bf16.mxu0 0
      %2259 = vmatpush1.bf16.msra.mxu0 0
      %2260 = vmatprep.subr.bf16.mxu0 0
      %2261 = vmatpush1.bf16.msra.mxu0 0
      %2262 = vmatprep.subr.bf16.mxu0 0
      %2263 = vmatpush1.bf16.msra.mxu0 0
      %2264 = vmatprep.subr.bf16.mxu0 0
      %2265 = vmatpush1.bf16.msra.mxu0 0
      %2266 = vmatprep.subr.bf16.mxu0 0
      %2267 = vmatpush1.bf16.msra.mxu0 0
      %2268 = vmatprep.subr.bf16.mxu0 0
      %2269 = vmatpush1.bf16.msra.mxu0 0
      %2270 = vmatprep.subr.bf16.mxu0 0
      %2271 = vmatpush1.bf16.msra.mxu0 0
      %2272 = vmatprep.subr.bf16.mxu0 0
      %2273 = vmatpush1.bf16.msra.mxu0 0
      %2274 = vmatprep.subr.bf16.mxu0 0
      %2275 = vmatpush1.bf16.msra.mxu0 0
      %2276 = vmatprep.subr.bf16.mxu0 0
      %2277 = vmatpush1.bf16.msra.mxu0 0
      %2278 = vmatprep.subr.bf16.mxu0 0
      %2279 = vmatpush1.bf16.msra.mxu0 0
      %2280 = vmatprep.subr.bf16.mxu0 0
      %2281 = vmatpush1.bf16.msra.mxu0 0
      %2282 = vmatprep.subr.bf16.mxu0 0
      %2283 = vmatpush1.bf16.msra.mxu0 0
      %2284 = vmatprep.subr.bf16.mxu0 0
      %2285 = vmatpush1.bf16.msra.mxu0 0
      %2286 = vmatprep.subr.bf16.mxu0 0
      %2287 = vmatpush1.bf16.msra.mxu0 0
      %2288 = vmatprep.mubr.bf16.mxu0 0
      %2289 = vmatmul.mubr.bf16.gmra.mrb[0].mxu0 %v2245
      %v2290 = vpop.f32.mrb[0].mxu0
      %v2291 = vadd.f32 0.0, %v2290
      %v2292 = vpop.f32.mrb[0].mxu0
      %v2293 = vadd.f32 0.0, %v2292
      %v2294 = vpop.f32.mrb[0].mxu0
      %v2295 = vpop.f32.mrb[0].mxu0
      %2296 = vdwg.mxu0
      %2297 = vmatprep.subr.bf16.mxu0 0
      %2298 = vmatpush1.bf16.msra.mxu0 %v2254
      %2299 = vmatprep.subr.bf16.mxu0 0
      %2300 = vmatpush1.bf16.msra.mxu0 0
      %2301 = vmatprep.subr.bf16.mxu0 0
      %2302 = vmatpush1.bf16.msra.mxu0 0
      %2303 = vmatprep.subr.bf16.mxu0 0
      %2304 = vmatpush1.bf16.msra.mxu0 0
      %2305 = vmatprep.subr.bf16.mxu0 0
      %2306 = vmatpush1.bf16.msra.mxu0 0
      %2307 = vmatprep.subr.bf16.mxu0 0
      %2308 = vmatpush1.bf16.msra.mxu0 0
      %2309 = vmatprep.subr.bf16.mxu0 0
      %2310 = vmatpush1.bf16.msra.mxu0 0
      %2311 = vmatprep.subr.bf16.mxu0 0
      %2312 = vmatpush1.bf16.msra.mxu0 0
      %2313 = vmatprep.subr.bf16.mxu0 0
      %2314 = vmatpush1.bf16.msra.mxu0 0
      %2315 = vmatprep.subr.bf16.mxu0 0
      %2316 = vmatpush1.bf16.msra.mxu0 0
      %2317 = vmatprep.subr.bf16.mxu0 0
      %2318 = vmatpush1.bf16.msra.mxu0 0
      %2319 = vmatprep.subr.bf16.mxu0 0
      %2320 = vmatpush1.bf16.msra.mxu0 0
      %2321 = vmatprep.subr.bf16.mxu0 0
      %2322 = vmatpush1.bf16.msra.mxu0 0
      %2323 = vmatprep.subr.bf16.mxu0 0
      %2324 = vmatpush1.bf16.msra.mxu0 0
      %2325 = vmatprep.subr.bf16.mxu0 0
      %2326 = vmatpush1.bf16.msra.mxu0 0
      %2327 = vmatprep.subr.bf16.mxu0 0
      %2328 = vmatpush1.bf16.msra.mxu0 0
      %2329 = vmatprep.mubr.bf16.mxu0 0
      %2330 = vmatmul.mubr.bf16.gmra.mrb[0].mxu0 %v2245
      %v2331 = vpop.f32.mrb[0].mxu0
      %v2332 = vadd.f32 0.0, %v2331
      %v2333 = vpop.f32.mrb[0].mxu0
      %v2334 = vpop.f32.mrb[0].mxu0
      %v2335 = vpop.f32.mrb[0].mxu0
      %2336 = vdwg.mxu0
      %v2337 = vadd.f32 %v2216, %v2291
      %v2338 = vadd.f32 %v2217, %v2293
      %v2339 = vadd.f32 %v2218, %v2332
      %v2340 = vld [vmem:[%s4] sm:$0xf]
      %2342 = vset.pattern.permute.xlu0 0
      %2343 = vperm.xlu0 %2342, %v2340
      %v2344 = vpop.permute.xlu0 %2343
      %v2346 = vadd.f32 %v2337, %v2344
      %v2347 = vadd.f32 %v2338, %v2344
      %v2348 = vadd.f32 %v2339, %v2344
      %v2349 = vmax.f32 %v2346, 0.0
      %v2350 = vmax.f32 %v2347, 0.0
      %v2351 = vmax.f32 %v2348, 0.0
      %v2355 = vrot.slane %v2349, 4
      %v2356 = vrot.slane %v2350, 4
      %v2357 = vrot.slane %v2351, 4
      %2361 = vst [vmem:[%s251] sm:$0xf0] %v2355
      %2362 = vst [vmem:[%s251 + $0x8] sm:$0xf0] %v2356
      %2363 = vst [vmem:[%s251 + $0x10] sm:$0xf0] %v2357
      %s2364 = scalar_lea.vmem %s3, 16
      %v2365 = vld [vmem:[%s2364] sm:$0x3]
      %v2366 = vld [vmem:[#allocation2] sm:$0xff]
      %v2367 = vld [vmem:[#allocation2 + $0x8] sm:$0xff]
      %s2368 = scalar_lea.vmem %s3, 18
      %v2369 = vld [vmem:[%s2368] sm:$0x3]
      %v2370 = vld [vmem:[#allocation2 + $0x4] sm:$0xff]
      %v2371 = vld [vmem:[#allocation2 + $0xc] sm:$0xf]
      %v2374 = vunpack.c.l.b16 %v2370
      %v2375 = vunpack.c.h.b16 %v2370
      %v2376 = vunpack.c.l.b16 %v2371
      %v2377 = vpack.c.b16 %v2374, %v2374
      %v2378 = vpack.c.b16 %v2375, %v2375
      %v2379 = vpack.c.b16 %v2376, %v2376
      %v2381 = vsel %vm1456, %v2369, 0
      %v2384 = vsel %vm1460, %v2377, 0
      %v2387 = vsel %vm1460, %v2378, 0
      %v2390 = vsel %vm1460, %v2379, 0
      %2392 = vmatprep.subr.bf16.mxu0 %v2387
      %2393 = vmatpush1.bf16.msra.mxu0 %v2384
      %2394 = vmatprep.subr.bf16.mxu0 0
      %2395 = vmatpush1.bf16.msra.mxu0 0
      %2396 = vmatprep.subr.bf16.mxu0 0
      %2397 = vmatpush1.bf16.msra.mxu0 0
      %2398 = vmatprep.subr.bf16.mxu0 0
      %2399 = vmatpush1.bf16.msra.mxu0 0
      %2400 = vmatprep.subr.bf16.mxu0 0
      %2401 = vmatpush1.bf16.msra.mxu0 0
      %2402 = vmatprep.subr.bf16.mxu0 0
      %2403 = vmatpush1.bf16.msra.mxu0 0
      %2404 = vmatprep.subr.bf16.mxu0 0
      %2405 = vmatpush1.bf16.msra.mxu0 0
      %2406 = vmatprep.subr.bf16.mxu0 0
      %2407 = vmatpush1.bf16.msra.mxu0 0
      %2408 = vmatprep.subr.bf16.mxu0 0
      %2409 = vmatpush1.bf16.msra.mxu0 0
      %2410 = vmatprep.subr.bf16.mxu0 0
      %2411 = vmatpush1.bf16.msra.mxu0 0
      %2412 = vmatprep.subr.bf16.mxu0 0
      %2413 = vmatpush1.bf16.msra.mxu0 0
      %2414 = vmatprep.subr.bf16.mxu0 0
      %2415 = vmatpush1.bf16.msra.mxu0 0
      %2416 = vmatprep.subr.bf16.mxu0 0
      %2417 = vmatpush1.bf16.msra.mxu0 0
      %2418 = vmatprep.subr.bf16.mxu0 0
      %2419 = vmatpush1.bf16.msra.mxu0 0
      %2420 = vmatprep.subr.bf16.mxu0 0
      %2421 = vmatpush1.bf16.msra.mxu0 0
      %2422 = vmatprep.subr.bf16.mxu0 0
      %2423 = vmatpush1.bf16.msra.mxu0 0
      %2424 = vmatprep.mubr.bf16.mxu0 0
      %2425 = vmatmul.mubr.bf16.gmra.mrb[0].mxu0 %v2381
      %v2426 = vpop.f32.mrb[0].mxu0
      %v2427 = vadd.f32 0.0, %v2426
      %v2428 = vpop.f32.mrb[0].mxu0
      %v2429 = vadd.f32 0.0, %v2428
      %v2430 = vpop.f32.mrb[0].mxu0
      %v2431 = vpop.f32.mrb[0].mxu0
      %2432 = vdwg.mxu0
      %2433 = vmatprep.subr.bf16.mxu0 0
      %2434 = vmatpush1.bf16.msra.mxu0 %v2390
      %2435 = vmatprep.subr.bf16.mxu0 0
      %2436 = vmatpush1.bf16.msra.mxu0 0
      %2437 = vmatprep.subr.bf16.mxu0 0
      %2438 = vmatpush1.bf16.msra.mxu0 0
      %2439 = vmatprep.subr.bf16.mxu0 0
      %2440 = vmatpush1.bf16.msra.mxu0 0
      %2441 = vmatprep.subr.bf16.mxu0 0
      %2442 = vmatpush1.bf16.msra.mxu0 0
      %2443 = vmatprep.subr.bf16.mxu0 0
      %2444 = vmatpush1.bf16.msra.mxu0 0
      %2445 = vmatprep.subr.bf16.mxu0 0
      %2446 = vmatpush1.bf16.msra.mxu0 0
      %2447 = vmatprep.subr.bf16.mxu0 0
      %2448 = vmatpush1.bf16.msra.mxu0 0
      %2449 = vmatprep.subr.bf16.mxu0 0
      %2450 = vmatpush1.bf16.msra.mxu0 0
      %2451 = vmatprep.subr.bf16.mxu0 0
      %2452 = vmatpush1.bf16.msra.mxu0 0
      %2453 = vmatprep.subr.bf16.mxu0 0
      %2454 = vmatpush1.bf16.msra.mxu0 0
      %2455 = vmatprep.subr.bf16.mxu0 0
      %2456 = vmatpush1.bf16.msra.mxu0 0
      %2457 = vmatprep.subr.bf16.mxu0 0
      %2458 = vmatpush1.bf16.msra.mxu0 0
      %2459 = vmatprep.subr.bf16.mxu0 0
      %2460 = vmatpush1.bf16.msra.mxu0 0
      %2461 = vmatprep.subr.bf16.mxu0 0
      %2462 = vmatpush1.bf16.msra.mxu0 0
      %2463 = vmatprep.subr.bf16.mxu0 0
      %2464 = vmatpush1.bf16.msra.mxu0 0
      %2465 = vmatprep.mubr.bf16.mxu0 0
      %2466 = vmatmul.mubr.bf16.gmra.mrb[0].mxu0 %v2381
      %v2467 = vpop.f32.mrb[0].mxu0
      %v2468 = vadd.f32 0.0, %v2467
      %v2469 = vpop.f32.mrb[0].mxu0
      %v2470 = vpop.f32.mrb[0].mxu0
      %v2471 = vpop.f32.mrb[0].mxu0
      %2472 = vdwg.mxu0
      %v2475 = vunpack.c.l.b16 %v2366
      %v2476 = vunpack.c.h.b16 %v2366
      %v2477 = vunpack.c.l.b16 %v2367
      %v2478 = vunpack.c.h.b16 %v2367
      %v2479 = vpack.c.b16 %v2475, %v2475
      %v2480 = vpack.c.b16 %v2476, %v2476
      %v2481 = vpack.c.b16 %v2477, %v2477
      %v2482 = vpack.c.b16 %v2478, %v2478
      %2483 = vrot.lane.b32.xlu0 %v2479, 1
      %v2484 = vpop.permute.xlu0 %2483
      %2485 = vrot.lane.b32.xlu0 %v2480, 1
      %v2486 = vpop.permute.xlu0 %2485
      %2487 = vrot.lane.b32.xlu0 %v2481, 1
      %v2488 = vpop.permute.xlu0 %2487
      %2489 = vrot.lane.b32.xlu0 %v2482, 1
      %v2490 = vpop.permute.xlu0 %2489
      %v2491 = vsel %vm651, %v2484, %v2486
      %v2492 = vsel %vm651, %v2486, %v2488
      %v2493 = vsel %vm651, %v2488, %v2490
      %v2495 = vsel %vm1456, %v2365, 0
      %v2498 = vsel %vm1460, %v2491, 0
      %v2501 = vsel %vm1460, %v2492, 0
      %v2504 = vsel %vm1460, %v2493, 0
      %2506 = vmatprep.subr.bf16.mxu0 %v2501
      %2507 = vmatpush1.bf16.msra.mxu0 %v2498
      %2508 = vmatprep.subr.bf16.mxu0 0
      %2509 = vmatpush1.bf16.msra.mxu0 0
      %2510 = vmatprep.subr.bf16.mxu0 0
      %2511 = vmatpush1.bf16.msra.mxu0 0
      %2512 = vmatprep.subr.bf16.mxu0 0
      %2513 = vmatpush1.bf16.msra.mxu0 0
      %2514 = vmatprep.subr.bf16.mxu0 0
      %2515 = vmatpush1.bf16.msra.mxu0 0
      %2516 = vmatprep.subr.bf16.mxu0 0
      %2517 = vmatpush1.bf16.msra.mxu0 0
      %2518 = vmatprep.subr.bf16.mxu0 0
      %2519 = vmatpush1.bf16.msra.mxu0 0
      %2520 = vmatprep.subr.bf16.mxu0 0
      %2521 = vmatpush1.bf16.msra.mxu0 0
      %2522 = vmatprep.subr.bf16.mxu0 0
      %2523 = vmatpush1.bf16.msra.mxu0 0
      %2524 = vmatprep.subr.bf16.mxu0 0
      %2525 = vmatpush1.bf16.msra.mxu0 0
      %2526 = vmatprep.subr.bf16.mxu0 0
      %2527 = vmatpush1.bf16.msra.mxu0 0
      %2528 = vmatprep.subr.bf16.mxu0 0
      %2529 = vmatpush1.bf16.msra.mxu0 0
      %2530 = vmatprep.subr.bf16.mxu0 0
      %2531 = vmatpush1.bf16.msra.mxu0 0
      %2532 = vmatprep.subr.bf16.mxu0 0
      %2533 = vmatpush1.bf16.msra.mxu0 0
      %2534 = vmatprep.subr.bf16.mxu0 0
      %2535 = vmatpush1.bf16.msra.mxu0 0
      %2536 = vmatprep.subr.bf16.mxu0 0
      %2537 = vmatpush1.bf16.msra.mxu0 0
      %2538 = vmatprep.mubr.bf16.mxu0 0
      %2539 = vmatmul.mubr.bf16.gmra.mrb[0].mxu0 %v2495
      %v2540 = vpop.f32.mrb[0].mxu0
      %v2541 = vadd.f32 %v2427, %v2540
      %v2542 = vpop.f32.mrb[0].mxu0
      %v2543 = vadd.f32 %v2429, %v2542
      %v2544 = vpop.f32.mrb[0].mxu0
      %v2545 = vpop.f32.mrb[0].mxu0
      %2546 = vdwg.mxu0
      %2547 = vmatprep.subr.bf16.mxu0 0
      %2548 = vmatpush1.bf16.msra.mxu0 %v2504
      %2549 = vmatprep.subr.bf16.mxu0 0
      %2550 = vmatpush1.bf16.msra.mxu0 0
      %2551 = vmatprep.subr.bf16.mxu0 0
      %2552 = vmatpush1.bf16.msra.mxu0 0
      %2553 = vmatprep.subr.bf16.mxu0 0
      %2554 = vmatpush1.bf16.msra.mxu0 0
      %2555 = vmatprep.subr.bf16.mxu0 0
      %2556 = vmatpush1.bf16.msra.mxu0 0
      %2557 = vmatprep.subr.bf16.mxu0 0
      %2558 = vmatpush1.bf16.msra.mxu0 0
      %2559 = vmatprep.subr.bf16.mxu0 0
      %2560 = vmatpush1.bf16.msra.mxu0 0
      %2561 = vmatprep.subr.bf16.mxu0 0
      %2562 = vmatpush1.bf16.msra.mxu0 0
      %2563 = vmatprep.subr.bf16.mxu0 0
      %2564 = vmatpush1.bf16.msra.mxu0 0
      %2565 = vmatprep.subr.bf16.mxu0 0
      %2566 = vmatpush1.bf16.msra.mxu0 0
      %2567 = vmatprep.subr.bf16.mxu0 0
      %2568 = vmatpush1.bf16.msra.mxu0 0
      %2569 = vmatprep.subr.bf16.mxu0 0
      %2570 = vmatpush1.bf16.msra.mxu0 0
      %2571 = vmatprep.subr.bf16.mxu0 0
      %2572 = vmatpush1.bf16.msra.mxu0 0
      %2573 = vmatprep.subr.bf16.mxu0 0
      %2574 = vmatpush1.bf16.msra.mxu0 0
      %2575 = vmatprep.subr.bf16.mxu0 0
      %2576 = vmatpush1.bf16.msra.mxu0 0
      %2577 = vmatprep.subr.bf16.mxu0 0
      %2578 = vmatpush1.bf16.msra.mxu0 0
      %2579 = vmatprep.mubr.bf16.mxu0 0
      %2580 = vmatmul.mubr.bf16.gmra.mrb[0].mxu0 %v2495
      %v2581 = vpop.f32.mrb[0].mxu0
      %v2582 = vadd.f32 %v2468, %v2581
      %v2583 = vpop.f32.mrb[0].mxu0
      %v2584 = vpop.f32.mrb[0].mxu0
      %v2585 = vpop.f32.mrb[0].mxu0
      %2586 = vdwg.mxu0
      %s2587 = scalar_lea.vmem %s3, 20
      %v2588 = vld [vmem:[%s2587] sm:$0x3]
      %v2589 = vld [vmem:[#allocation2 + $0x4] sm:$0xff]
      %v2590 = vld [vmem:[#allocation2 + $0xc] sm:$0xff]
      %v2593 = vunpack.c.l.b16 %v2589
      %v2594 = vunpack.c.h.b16 %v2589
      %v2595 = vunpack.c.l.b16 %v2590
      %v2596 = vunpack.c.h.b16 %v2590
      %v2597 = vpack.c.b16 %v2593, %v2593
      %v2598 = vpack.c.b16 %v2594, %v2594
      %v2599 = vpack.c.b16 %v2595, %v2595
      %v2600 = vpack.c.b16 %v2596, %v2596
      %2601 = vrot.lane.b32.xlu0 %v2597, 111
      %v2602 = vpop.permute.xlu0 %2601
      %2603 = vrot.lane.b32.xlu0 %v2598, 111
      %v2604 = vpop.permute.xlu0 %2603
      %2605 = vrot.lane.b32.xlu0 %v2599, 111
      %v2606 = vpop.permute.xlu0 %2605
      %2607 = vrot.lane.b32.xlu0 %v2600, 111
      %v2608 = vpop.permute.xlu0 %2607
      %v2609 = vsel %vm1025, %v2602, %v2604
      %v2610 = vsel %vm1025, %v2604, %v2606
      %v2611 = vsel %vm1025, %v2606, %v2608
      %v2613 = vsel %vm1456, %v2588, 0
      %v2616 = vsel %vm1460, %v2609, 0
      %v2619 = vsel %vm1460, %v2610, 0
      %v2622 = vsel %vm1460, %v2611, 0
      %2624 = vmatprep.subr.bf16.mxu0 %v2619
      %2625 = vmatpush1.bf16.msra.mxu0 %v2616
      %2626 = vmatprep.subr.bf16.mxu0 0
      %2627 = vmatpush1.bf16.msra.mxu0 0
      %2628 = vmatprep.subr.bf16.mxu0 0
      %2629 = vmatpush1.bf16.msra.mxu0 0
      %2630 = vmatprep.subr.bf16.mxu0 0
      %2631 = vmatpush1.bf16.msra.mxu0 0
      %2632 = vmatprep.subr.bf16.mxu0 0
      %2633 = vmatpush1.bf16.msra.mxu0 0
      %2634 = vmatprep.subr.bf16.mxu0 0
      %2635 = vmatpush1.bf16.msra.mxu0 0
      %2636 = vmatprep.subr.bf16.mxu0 0
      %2637 = vmatpush1.bf16.msra.mxu0 0
      %2638 = vmatprep.subr.bf16.mxu0 0
      %2639 = vmatpush1.bf16.msra.mxu0 0
      %2640 = vmatprep.subr.bf16.mxu0 0
      %2641 = vmatpush1.bf16.msra.mxu0 0
      %2642 = vmatprep.subr.bf16.mxu0 0
      %2643 = vmatpush1.bf16.msra.mxu0 0
      %2644 = vmatprep.subr.bf16.mxu0 0
      %2645 = vmatpush1.bf16.msra.mxu0 0
      %2646 = vmatprep.subr.bf16.mxu0 0
      %2647 = vmatpush1.bf16.msra.mxu0 0
      %2648 = vmatprep.subr.bf16.mxu0 0
      %2649 = vmatpush1.bf16.msra.mxu0 0
      %2650 = vmatprep.subr.bf16.mxu0 0
      %2651 = vmatpush1.bf16.msra.mxu0 0
      %2652 = vmatprep.subr.bf16.mxu0 0
      %2653 = vmatpush1.bf16.msra.mxu0 0
      %2654 = vmatprep.subr.bf16.mxu0 0
      %2655 = vmatpush1.bf16.msra.mxu0 0
      %2656 = vmatprep.mubr.bf16.mxu0 0
      %2657 = vmatmul.mubr.bf16.gmra.mrb[0].mxu0 %v2613
      %v2658 = vpop.f32.mrb[0].mxu0
      %v2659 = vadd.f32 0.0, %v2658
      %v2660 = vpop.f32.mrb[0].mxu0
      %v2661 = vadd.f32 0.0, %v2660
      %v2662 = vpop.f32.mrb[0].mxu0
      %v2663 = vpop.f32.mrb[0].mxu0
      %2664 = vdwg.mxu0
      %2665 = vmatprep.subr.bf16.mxu0 0
      %2666 = vmatpush1.bf16.msra.mxu0 %v2622
      %2667 = vmatprep.subr.bf16.mxu0 0
      %2668 = vmatpush1.bf16.msra.mxu0 0
      %2669 = vmatprep.subr.bf16.mxu0 0
      %2670 = vmatpush1.bf16.msra.mxu0 0
      %2671 = vmatprep.subr.bf16.mxu0 0
      %2672 = vmatpush1.bf16.msra.mxu0 0
      %2673 = vmatprep.subr.bf16.mxu0 0
      %2674 = vmatpush1.bf16.msra.mxu0 0
      %2675 = vmatprep.subr.bf16.mxu0 0
      %2676 = vmatpush1.bf16.msra.mxu0 0
      %2677 = vmatprep.subr.bf16.mxu0 0
      %2678 = vmatpush1.bf16.msra.mxu0 0
      %2679 = vmatprep.subr.bf16.mxu0 0
      %2680 = vmatpush1.bf16.msra.mxu0 0
      %2681 = vmatprep.subr.bf16.mxu0 0
      %2682 = vmatpush1.bf16.msra.mxu0 0
      %2683 = vmatprep.subr.bf16.mxu0 0
      %2684 = vmatpush1.bf16.msra.mxu0 0
      %2685 = vmatprep.subr.bf16.mxu0 0
      %2686 = vmatpush1.bf16.msra.mxu0 0
      %2687 = vmatprep.subr.bf16.mxu0 0
      %2688 = vmatpush1.bf16.msra.mxu0 0
      %2689 = vmatprep.subr.bf16.mxu0 0
      %2690 = vmatpush1.bf16.msra.mxu0 0
      %2691 = vmatprep.subr.bf16.mxu0 0
      %2692 = vmatpush1.bf16.msra.mxu0 0
      %2693 = vmatprep.subr.bf16.mxu0 0
      %2694 = vmatpush1.bf16.msra.mxu0 0
      %2695 = vmatprep.subr.bf16.mxu0 0
      %2696 = vmatpush1.bf16.msra.mxu0 0
      %2697 = vmatprep.mubr.bf16.mxu0 0
      %2698 = vmatmul.mubr.bf16.gmra.mrb[0].mxu0 %v2613
      %v2699 = vpop.f32.mrb[0].mxu0
      %v2700 = vadd.f32 0.0, %v2699
      %v2701 = vpop.f32.mrb[0].mxu0
      %v2702 = vpop.f32.mrb[0].mxu0
      %v2703 = vpop.f32.mrb[0].mxu0
      %2704 = vdwg.mxu0
      %v2705 = vadd.f32 %v2541, %v2659
      %v2706 = vadd.f32 %v2543, %v2661
      %v2707 = vadd.f32 %v2582, %v2700
      %s2708 = scalar_lea.vmem %s3, 22
      %v2709 = vld [vmem:[%s2708] sm:$0x3]
      %2710 = vrot.lane.b32.xlu0 %v2597, 110
      %v2711 = vpop.permute.xlu0 %2710
      %2712 = vrot.lane.b32.xlu0 %v2598, 110
      %v2713 = vpop.permute.xlu0 %2712
      %2714 = vrot.lane.b32.xlu0 %v2599, 110
      %v2715 = vpop.permute.xlu0 %2714
      %2716 = vrot.lane.b32.xlu0 %v2600, 110
      %v2717 = vpop.permute.xlu0 %2716
      %v2718 = vsel %vm1154, %v2711, %v2713
      %v2719 = vsel %vm1154, %v2713, %v2715
      %v2720 = vsel %vm1154, %v2715, %v2717
      %v2722 = vsel %vm1456, %v2709, 0
      %v2725 = vsel %vm1460, %v2718, 0
      %v2728 = vsel %vm1460, %v2719, 0
      %v2731 = vsel %vm1460, %v2720, 0
      %2733 = vmatprep.subr.bf16.mxu0 %v2728
      %2734 = vmatpush1.bf16.msra.mxu0 %v2725
      %2735 = vmatprep.subr.bf16.mxu0 0
      %2736 = vmatpush1.bf16.msra.mxu0 0
      %2737 = vmatprep.subr.bf16.mxu0 0
      %2738 = vmatpush1.bf16.msra.mxu0 0
      %2739 = vmatprep.subr.bf16.mxu0 0
      %2740 = vmatpush1.bf16.msra.mxu0 0
      %2741 = vmatprep.subr.bf16.mxu0 0
      %2742 = vmatpush1.bf16.msra.mxu0 0
      %2743 = vmatprep.subr.bf16.mxu0 0
      %2744 = vmatpush1.bf16.msra.mxu0 0
      %2745 = vmatprep.subr.bf16.mxu0 0
      %2746 = vmatpush1.bf16.msra.mxu0 0
      %2747 = vmatprep.subr.bf16.mxu0 0
      %2748 = vmatpush1.bf16.msra.mxu0 0
      %2749 = vmatprep.subr.bf16.mxu0 0
      %2750 = vmatpush1.bf16.msra.mxu0 0
      %2751 = vmatprep.subr.bf16.mxu0 0
      %2752 = vmatpush1.bf16.msra.mxu0 0
      %2753 = vmatprep.subr.bf16.mxu0 0
      %2754 = vmatpush1.bf16.msra.mxu0 0
      %2755 = vmatprep.subr.bf16.mxu0 0
      %2756 = vmatpush1.bf16.msra.mxu0 0
      %2757 = vmatprep.subr.bf16.mxu0 0
      %2758 = vmatpush1.bf16.msra.mxu0 0
      %2759 = vmatprep.subr.bf16.mxu0 0
      %2760 = vmatpush1.bf16.msra.mxu0 0
      %2761 = vmatprep.subr.bf16.mxu0 0
      %2762 = vmatpush1.bf16.msra.mxu0 0
      %2763 = vmatprep.subr.bf16.mxu0 0
      %2764 = vmatpush1.bf16.msra.mxu0 0
      %2765 = vmatprep.mubr.bf16.mxu0 0
      %2766 = vmatmul.mubr.bf16.gmra.mrb[0].mxu0 %v2722
      %v2767 = vpop.f32.mrb[0].mxu0
      %v2768 = vadd.f32 0.0, %v2767
      %v2769 = vpop.f32.mrb[0].mxu0
      %v2770 = vadd.f32 0.0, %v2769
      %v2771 = vpop.f32.mrb[0].mxu0
      %v2772 = vpop.f32.mrb[0].mxu0
      %2773 = vdwg.mxu0
      %2774 = vmatprep.subr.bf16.mxu0 0
      %2775 = vmatpush1.bf16.msra.mxu0 %v2731
      %2776 = vmatprep.subr.bf16.mxu0 0
      %2777 = vmatpush1.bf16.msra.mxu0 0
      %2778 = vmatprep.subr.bf16.mxu0 0
      %2779 = vmatpush1.bf16.msra.mxu0 0
      %2780 = vmatprep.subr.bf16.mxu0 0
      %2781 = vmatpush1.bf16.msra.mxu0 0
      %2782 = vmatprep.subr.bf16.mxu0 0
      %2783 = vmatpush1.bf16.msra.mxu0 0
      %2784 = vmatprep.subr.bf16.mxu0 0
      %2785 = vmatpush1.bf16.msra.mxu0 0
      %2786 = vmatprep.subr.bf16.mxu0 0
      %2787 = vmatpush1.bf16.msra.mxu0 0
      %2788 = vmatprep.subr.bf16.mxu0 0
      %2789 = vmatpush1.bf16.msra.mxu0 0
      %2790 = vmatprep.subr.bf16.mxu0 0
      %2791 = vmatpush1.bf16.msra.mxu0 0
      %2792 = vmatprep.subr.bf16.mxu0 0
      %2793 = vmatpush1.bf16.msra.mxu0 0
      %2794 = vmatprep.subr.bf16.mxu0 0
      %2795 = vmatpush1.bf16.msra.mxu0 0
      %2796 = vmatprep.subr.bf16.mxu0 0
      %2797 = vmatpush1.bf16.msra.mxu0 0
      %2798 = vmatprep.subr.bf16.mxu0 0
      %2799 = vmatpush1.bf16.msra.mxu0 0
      %2800 = vmatprep.subr.bf16.mxu0 0
      %2801 = vmatpush1.bf16.msra.mxu0 0
      %2802 = vmatprep.subr.bf16.mxu0 0
      %2803 = vmatpush1.bf16.msra.mxu0 0
      %2804 = vmatprep.subr.bf16.mxu0 0
      %2805 = vmatpush1.bf16.msra.mxu0 0
      %2806 = vmatprep.mubr.bf16.mxu0 0
      %2807 = vmatmul.mubr.bf16.gmra.mrb[0].mxu0 %v2722
      %v2808 = vpop.f32.mrb[0].mxu0
      %v2809 = vadd.f32 0.0, %v2808
      %v2810 = vpop.f32.mrb[0].mxu0
      %v2811 = vpop.f32.mrb[0].mxu0
      %v2812 = vpop.f32.mrb[0].mxu0
      %2813 = vdwg.mxu0
      %v2814 = vadd.f32 %v2705, %v2768
      %v2815 = vadd.f32 %v2706, %v2770
      %v2816 = vadd.f32 %v2707, %v2809
      %v2817 = vld [vmem:[%s4] sm:$0xf]
      %2819 = vset.pattern.permute.xlu0 0
      %2820 = vperm.xlu0 %2819, %v2817
      %v2821 = vpop.permute.xlu0 %2820
      %v2823 = vadd.f32 %v2814, %v2821
      %v2824 = vadd.f32 %v2815, %v2821
      %v2825 = vadd.f32 %v2816, %v2821
      %v2826 = vmax.f32 %v2823, 0.0
      %v2827 = vmax.f32 %v2824, 0.0
      %v2828 = vmax.f32 %v2825, 0.0
      %2829 = vst [vmem:[%s251 + $0x18] sm:$0xf] %v2826
      %2830 = vst [vmem:[%s251 + $0x20] sm:$0xf] %v2827
      %2831 = vst [vmem:[%s251 + $0x28] sm:$0xf] %v2828
      %s2832 = scalar_lea.vmem %s3, 24
      %v2833 = vld [vmem:[%s2832] sm:$0x3]
      %v2834 = vld [vmem:[#allocation2 + $0x4] sm:$0xff]
      %v2835 = vld [vmem:[#allocation2 + $0xc] sm:$0xf]
      %s2836 = scalar_lea.vmem %s3, 26
      %v2837 = vld [vmem:[%s2836] sm:$0x3]
      %v2838 = vld [vmem:[#allocation2 + $0x4] sm:$0xff]
      %v2839 = vld [vmem:[#allocation2 + $0xc] sm:$0xff]
      %v2842 = vunpack.c.l.b16 %v2838
      %v2843 = vunpack.c.h.b16 %v2838
      %v2844 = vunpack.c.l.b16 %v2839
      %v2845 = vunpack.c.h.b16 %v2839
      %v2846 = vpack.c.b16 %v2842, %v2842
      %v2847 = vpack.c.b16 %v2843, %v2843
      %v2848 = vpack.c.b16 %v2844, %v2844
      %v2849 = vpack.c.b16 %v2845, %v2845
      %2850 = vrot.lane.b32.xlu0 %v2846, 127
      %v2851 = vpop.permute.xlu0 %2850
      %2852 = vrot.lane.b32.xlu0 %v2847, 127
      %v2853 = vpop.permute.xlu0 %2852
      %2854 = vrot.lane.b32.xlu0 %v2848, 127
      %v2855 = vpop.permute.xlu0 %2854
      %2856 = vrot.lane.b32.xlu0 %v2849, 127
      %v2857 = vpop.permute.xlu0 %2856
      %v2858 = vsel %vm896, %v2851, %v2853
      %v2859 = vsel %vm896, %v2853, %v2855
      %v2860 = vsel %vm896, %v2855, %v2857
      %v2862 = vsel %vm1456, %v2837, 0
      %v2865 = vsel %vm1460, %v2858, 0
      %v2868 = vsel %vm1460, %v2859, 0
      %v2871 = vsel %vm1460, %v2860, 0
      %2873 = vmatprep.subr.bf16.mxu0 %v2868
      %2874 = vmatpush1.bf16.msra.mxu0 %v2865
      %2875 = vmatprep.subr.bf16.mxu0 0
      %2876 = vmatpush1.bf16.msra.mxu0 0
      %2877 = vmatprep.subr.bf16.mxu0 0
      %2878 = vmatpush1.bf16.msra.mxu0 0
      %2879 = vmatprep.subr.bf16.mxu0 0
      %2880 = vmatpush1.bf16.msra.mxu0 0
      %2881 = vmatprep.subr.bf16.mxu0 0
      %2882 = vmatpush1.bf16.msra.mxu0 0
      %2883 = vmatprep.subr.bf16.mxu0 0
      %2884 = vmatpush1.bf16.msra.mxu0 0
      %2885 = vmatprep.subr.bf16.mxu0 0
      %2886 = vmatpush1.bf16.msra.mxu0 0
      %2887 = vmatprep.subr.bf16.mxu0 0
      %2888 = vmatpush1.bf16.msra.mxu0 0
      %2889 = vmatprep.subr.bf16.mxu0 0
      %2890 = vmatpush1.bf16.msra.mxu0 0
      %2891 = vmatprep.subr.bf16.mxu0 0
      %2892 = vmatpush1.bf16.msra.mxu0 0
      %2893 = vmatprep.subr.bf16.mxu0 0
      %2894 = vmatpush1.bf16.msra.mxu0 0
      %2895 = vmatprep.subr.bf16.mxu0 0
      %2896 = vmatpush1.bf16.msra.mxu0 0
      %2897 = vmatprep.subr.bf16.mxu0 0
      %2898 = vmatpush1.bf16.msra.mxu0 0
      %2899 = vmatprep.subr.bf16.mxu0 0
      %2900 = vmatpush1.bf16.msra.mxu0 0
      %2901 = vmatprep.subr.bf16.mxu0 0
      %2902 = vmatpush1.bf16.msra.mxu0 0
      %2903 = vmatprep.subr.bf16.mxu0 0
      %2904 = vmatpush1.bf16.msra.mxu0 0
      %2905 = vmatprep.mubr.bf16.mxu0 0
      %2906 = vmatmul.mubr.bf16.gmra.mrb[0].mxu0 %v2862
      %v2907 = vpop.f32.mrb[0].mxu0
      %v2908 = vadd.f32 0.0, %v2907
      %v2909 = vpop.f32.mrb[0].mxu0
      %v2910 = vadd.f32 0.0, %v2909
      %v2911 = vpop.f32.mrb[0].mxu0
      %v2912 = vpop.f32.mrb[0].mxu0
      %2913 = vdwg.mxu0
      %2914 = vmatprep.subr.bf16.mxu0 0
      %2915 = vmatpush1.bf16.msra.mxu0 %v2871
      %2916 = vmatprep.subr.bf16.mxu0 0
      %2917 = vmatpush1.bf16.msra.mxu0 0
      %2918 = vmatprep.subr.bf16.mxu0 0
      %2919 = vmatpush1.bf16.msra.mxu0 0
      %2920 = vmatprep.subr.bf16.mxu0 0
      %2921 = vmatpush1.bf16.msra.mxu0 0
      %2922 = vmatprep.subr.bf16.mxu0 0
      %2923 = vmatpush1.bf16.msra.mxu0 0
      %2924 = vmatprep.subr.bf16.mxu0 0
      %2925 = vmatpush1.bf16.msra.mxu0 0
      %2926 = vmatprep.subr.bf16.mxu0 0
      %2927 = vmatpush1.bf16.msra.mxu0 0
      %2928 = vmatprep.subr.bf16.mxu0 0
      %2929 = vmatpush1.bf16.msra.mxu0 0
      %2930 = vmatprep.subr.bf16.mxu0 0
      %2931 = vmatpush1.bf16.msra.mxu0 0
      %2932 = vmatprep.subr.bf16.mxu0 0
      %2933 = vmatpush1.bf16.msra.mxu0 0
      %2934 = vmatprep.subr.bf16.mxu0 0
      %2935 = vmatpush1.bf16.msra.mxu0 0
      %2936 = vmatprep.subr.bf16.mxu0 0
      %2937 = vmatpush1.bf16.msra.mxu0 0
      %2938 = vmatprep.subr.bf16.mxu0 0
      %2939 = vmatpush1.bf16.msra.mxu0 0
      %2940 = vmatprep.subr.bf16.mxu0 0
      %2941 = vmatpush1.bf16.msra.mxu0 0
      %2942 = vmatprep.subr.bf16.mxu0 0
      %2943 = vmatpush1.bf16.msra.mxu0 0
      %2944 = vmatprep.subr.bf16.mxu0 0
      %2945 = vmatpush1.bf16.msra.mxu0 0
      %2946 = vmatprep.mubr.bf16.mxu0 0
      %2947 = vmatmul.mubr.bf16.gmra.mrb[0].mxu0 %v2862
      %v2948 = vpop.f32.mrb[0].mxu0
      %v2949 = vadd.f32 0.0, %v2948
      %v2950 = vpop.f32.mrb[0].mxu0
      %v2951 = vpop.f32.mrb[0].mxu0
      %v2952 = vpop.f32.mrb[0].mxu0
      %2953 = vdwg.mxu0
      %v2956 = vunpack.c.l.b16 %v2834
      %v2957 = vunpack.c.h.b16 %v2834
      %v2958 = vunpack.c.l.b16 %v2835
      %v2959 = vpack.c.b16 %v2956, %v2956
      %v2960 = vpack.c.b16 %v2957, %v2957
      %v2961 = vpack.c.b16 %v2958, %v2958
      %v2963 = vsel %vm1456, %v2833, 0
      %v2966 = vsel %vm1460, %v2959, 0
      %v2969 = vsel %vm1460, %v2960, 0
      %v2972 = vsel %vm1460, %v2961, 0
      %2974 = vmatprep.subr.bf16.mxu0 %v2969
      %2975 = vmatpush1.bf16.msra.mxu0 %v2966
      %2976 = vmatprep.subr.bf16.mxu0 0
      %2977 = vmatpush1.bf16.msra.mxu0 0
      %2978 = vmatprep.subr.bf16.mxu0 0
      %2979 = vmatpush1.bf16.msra.mxu0 0
      %2980 = vmatprep.subr.bf16.mxu0 0
      %2981 = vmatpush1.bf16.msra.mxu0 0
      %2982 = vmatprep.subr.bf16.mxu0 0
      %2983 = vmatpush1.bf16.msra.mxu0 0
      %2984 = vmatprep.subr.bf16.mxu0 0
      %2985 = vmatpush1.bf16.msra.mxu0 0
      %2986 = vmatprep.subr.bf16.mxu0 0
      %2987 = vmatpush1.bf16.msra.mxu0 0
      %2988 = vmatprep.subr.bf16.mxu0 0
      %2989 = vmatpush1.bf16.msra.mxu0 0
      %2990 = vmatprep.subr.bf16.mxu0 0
      %2991 = vmatpush1.bf16.msra.mxu0 0
      %2992 = vmatprep.subr.bf16.mxu0 0
      %2993 = vmatpush1.bf16.msra.mxu0 0
      %2994 = vmatprep.subr.bf16.mxu0 0
      %2995 = vmatpush1.bf16.msra.mxu0 0
      %2996 = vmatprep.subr.bf16.mxu0 0
      %2997 = vmatpush1.bf16.msra.mxu0 0
      %2998 = vmatprep.subr.bf16.mxu0 0
      %2999 = vmatpush1.bf16.msra.mxu0 0
      %3000 = vmatprep.subr.bf16.mxu0 0
      %3001 = vmatpush1.bf16.msra.mxu0 0
      %3002 = vmatprep.subr.bf16.mxu0 0
      %3003 = vmatpush1.bf16.msra.mxu0 0
      %3004 = vmatprep.subr.bf16.mxu0 0
      %3005 = vmatpush1.bf16.msra.mxu0 0
      %3006 = vmatprep.mubr.bf16.mxu0 0
      %3007 = vmatmul.mubr.bf16.gmra.mrb[0].mxu0 %v2963
      %v3008 = vpop.f32.mrb[0].mxu0
      %v3009 = vadd.f32 %v2908, %v3008
      %v3010 = vpop.f32.mrb[0].mxu0
      %v3011 = vadd.f32 %v2910, %v3010
      %v3012 = vpop.f32.mrb[0].mxu0
      %v3013 = vpop.f32.mrb[0].mxu0
      %3014 = vdwg.mxu0
      %3015 = vmatprep.subr.bf16.mxu0 0
      %3016 = vmatpush1.bf16.msra.mxu0 %v2972
      %3017 = vmatprep.subr.bf16.mxu0 0
      %3018 = vmatpush1.bf16.msra.mxu0 0
      %3019 = vmatprep.subr.bf16.mxu0 0
      %3020 = vmatpush1.bf16.msra.mxu0 0
      %3021 = vmatprep.subr.bf16.mxu0 0
      %3022 = vmatpush1.bf16.msra.mxu0 0
      %3023 = vmatprep.subr.bf16.mxu0 0
      %3024 = vmatpush1.bf16.msra.mxu0 0
      %3025 = vmatprep.subr.bf16.mxu0 0
      %3026 = vmatpush1.bf16.msra.mxu0 0
      %3027 = vmatprep.subr.bf16.mxu0 0
      %3028 = vmatpush1.bf16.msra.mxu0 0
      %3029 = vmatprep.subr.bf16.mxu0 0
      %3030 = vmatpush1.bf16.msra.mxu0 0
      %3031 = vmatprep.subr.bf16.mxu0 0
      %3032 = vmatpush1.bf16.msra.mxu0 0
      %3033 = vmatprep.subr.bf16.mxu0 0
      %3034 = vmatpush1.bf16.msra.mxu0 0
      %3035 = vmatprep.subr.bf16.mxu0 0
      %3036 = vmatpush1.bf16.msra.mxu0 0
      %3037 = vmatprep.subr.bf16.mxu0 0
      %3038 = vmatpush1.bf16.msra.mxu0 0
      %3039 = vmatprep.subr.bf16.mxu0 0
      %3040 = vmatpush1.bf16.msra.mxu0 0
      %3041 = vmatprep.subr.bf16.mxu0 0
      %3042 = vmatpush1.bf16.msra.mxu0 0
      %3043 = vmatprep.subr.bf16.mxu0 0
      %3044 = vmatpush1.bf16.msra.mxu0 0
      %3045 = vmatprep.subr.bf16.mxu0 0
      %3046 = vmatpush1.bf16.msra.mxu0 0
      %3047 = vmatprep.mubr.bf16.mxu0 0
      %3048 = vmatmul.mubr.bf16.gmra.mrb[0].mxu0 %v2963
      %v3049 = vpop.f32.mrb[0].mxu0
      %v3050 = vadd.f32 %v2949, %v3049
      %v3051 = vpop.f32.mrb[0].mxu0
      %v3052 = vpop.f32.mrb[0].mxu0
      %v3053 = vpop.f32.mrb[0].mxu0
      %3054 = vdwg.mxu0
      %s3055 = scalar_lea.vmem %s3, 28
      %v3056 = vld [vmem:[%s3055] sm:$0x3]
      %3057 = vrot.lane.b32.xlu0 %v2846, 110
      %v3058 = vpop.permute.xlu0 %3057
      %3059 = vrot.lane.b32.xlu0 %v2847, 110
      %v3060 = vpop.permute.xlu0 %3059
      %3061 = vrot.lane.b32.xlu0 %v2848, 110
      %v3062 = vpop.permute.xlu0 %3061
      %3063 = vrot.lane.b32.xlu0 %v2849, 110
      %v3064 = vpop.permute.xlu0 %3063
      %v3065 = vsel %vm1154, %v3058, %v3060
      %v3066 = vsel %vm1154, %v3060, %v3062
      %v3067 = vsel %vm1154, %v3062, %v3064
      %v3069 = vsel %vm1456, %v3056, 0
      %v3072 = vsel %vm1460, %v3065, 0
      %v3075 = vsel %vm1460, %v3066, 0
      %v3078 = vsel %vm1460, %v3067, 0
      %3080 = vmatprep.subr.bf16.mxu0 %v3075
      %3081 = vmatpush1.bf16.msra.mxu0 %v3072
      %3082 = vmatprep.subr.bf16.mxu0 0
      %3083 = vmatpush1.bf16.msra.mxu0 0
      %3084 = vmatprep.subr.bf16.mxu0 0
      %3085 = vmatpush1.bf16.msra.mxu0 0
      %3086 = vmatprep.subr.bf16.mxu0 0
      %3087 = vmatpush1.bf16.msra.mxu0 0
      %3088 = vmatprep.subr.bf16.mxu0 0
      %3089 = vmatpush1.bf16.msra.mxu0 0
      %3090 = vmatprep.subr.bf16.mxu0 0
      %3091 = vmatpush1.bf16.msra.mxu0 0
      %3092 = vmatprep.subr.bf16.mxu0 0
      %3093 = vmatpush1.bf16.msra.mxu0 0
      %3094 = vmatprep.subr.bf16.mxu0 0
      %3095 = vmatpush1.bf16.msra.mxu0 0
      %3096 = vmatprep.subr.bf16.mxu0 0
      %3097 = vmatpush1.bf16.msra.mxu0 0
      %3098 = vmatprep.subr.bf16.mxu0 0
      %3099 = vmatpush1.bf16.msra.mxu0 0
      %3100 = vmatprep.subr.bf16.mxu0 0
      %3101 = vmatpush1.bf16.msra.mxu0 0
      %3102 = vmatprep.subr.bf16.mxu0 0
      %3103 = vmatpush1.bf16.msra.mxu0 0
      %3104 = vmatprep.subr.bf16.mxu0 0
      %3105 = vmatpush1.bf16.msra.mxu0 0
      %3106 = vmatprep.subr.bf16.mxu0 0
      %3107 = vmatpush1.bf16.msra.mxu0 0
      %3108 = vmatprep.subr.bf16.mxu0 0
      %3109 = vmatpush1.bf16.msra.mxu0 0
      %3110 = vmatprep.subr.bf16.mxu0 0
      %3111 = vmatpush1.bf16.msra.mxu0 0
      %3112 = vmatprep.mubr.bf16.mxu0 0
      %3113 = vmatmul.mubr.bf16.gmra.mrb[0].mxu0 %v3069
      %v3114 = vpop.f32.mrb[0].mxu0
      %v3115 = vadd.f32 0.0, %v3114
      %v3116 = vpop.f32.mrb[0].mxu0
      %v3117 = vadd.f32 0.0, %v3116
      %v3118 = vpop.f32.mrb[0].mxu0
      %v3119 = vpop.f32.mrb[0].mxu0
      %3120 = vdwg.mxu0
      %3121 = vmatprep.subr.bf16.mxu0 0
      %3122 = vmatpush1.bf16.msra.mxu0 %v3078
      %3123 = vmatprep.subr.bf16.mxu0 0
      %3124 = vmatpush1.bf16.msra.mxu0 0
      %3125 = vmatprep.subr.bf16.mxu0 0
      %3126 = vmatpush1.bf16.msra.mxu0 0
      %3127 = vmatprep.subr.bf16.mxu0 0
      %3128 = vmatpush1.bf16.msra.mxu0 0
      %3129 = vmatprep.subr.bf16.mxu0 0
      %3130 = vmatpush1.bf16.msra.mxu0 0
      %3131 = vmatprep.subr.bf16.mxu0 0
      %3132 = vmatpush1.bf16.msra.mxu0 0
      %3133 = vmatprep.subr.bf16.mxu0 0
      %3134 = vmatpush1.bf16.msra.mxu0 0
      %3135 = vmatprep.subr.bf16.mxu0 0
      %3136 = vmatpush1.bf16.msra.mxu0 0
      %3137 = vmatprep.subr.bf16.mxu0 0
      %3138 = vmatpush1.bf16.msra.mxu0 0
      %3139 = vmatprep.subr.bf16.mxu0 0
      %3140 = vmatpush1.bf16.msra.mxu0 0
      %3141 = vmatprep.subr.bf16.mxu0 0
      %3142 = vmatpush1.bf16.msra.mxu0 0
      %3143 = vmatprep.subr.bf16.mxu0 0
      %3144 = vmatpush1.bf16.msra.mxu0 0
      %3145 = vmatprep.subr.bf16.mxu0 0
      %3146 = vmatpush1.bf16.msra.mxu0 0
      %3147 = vmatprep.subr.bf16.mxu0 0
      %3148 = vmatpush1.bf16.msra.mxu0 0
      %3149 = vmatprep.subr.bf16.mxu0 0
      %3150 = vmatpush1.bf16.msra.mxu0 0
      %3151 = vmatprep.subr.bf16.mxu0 0
      %3152 = vmatpush1.bf16.msra.mxu0 0
      %3153 = vmatprep.mubr.bf16.mxu0 0
      %3154 = vmatmul.mubr.bf16.gmra.mrb[0].mxu0 %v3069
      %v3155 = vpop.f32.mrb[0].mxu0
      %v3156 = vadd.f32 0.0, %v3155
      %v3157 = vpop.f32.mrb[0].mxu0
      %v3158 = vpop.f32.mrb[0].mxu0
      %v3159 = vpop.f32.mrb[0].mxu0
      %3160 = vdwg.mxu0
      %v3161 = vadd.f32 %v3009, %v3115
      %v3162 = vadd.f32 %v3011, %v3117
      %v3163 = vadd.f32 %v3050, %v3156
      %s3164 = scalar_lea.vmem %s3, 30
      %v3165 = vld [vmem:[%s3164] sm:$0x3]
      %3166 = vrot.lane.b32.xlu0 %v2846, 109
      %v3167 = vpop.permute.xlu0 %3166
      %3168 = vrot.lane.b32.xlu0 %v2847, 109
      %v3169 = vpop.permute.xlu0 %3168
      %3170 = vrot.lane.b32.xlu0 %v2848, 109
      %v3171 = vpop.permute.xlu0 %3170
      %3172 = vrot.lane.b32.xlu0 %v2849, 109
      %v3173 = vpop.permute.xlu0 %3172
      %v3174 = vsel %vm1283, %v3167, %v3169
      %v3175 = vsel %vm1283, %v3169, %v3171
      %v3176 = vsel %vm1283, %v3171, %v3173
      %v3178 = vsel %vm1456, %v3165, 0
      %v3181 = vsel %vm1460, %v3174, 0
      %v3184 = vsel %vm1460, %v3175, 0
      %v3187 = vsel %vm1460, %v3176, 0
      %3189 = vmatprep.subr.bf16.mxu0 %v3184
      %3190 = vmatpush1.bf16.msra.mxu0 %v3181
      %3191 = vmatprep.subr.bf16.mxu0 0
      %3192 = vmatpush1.bf16.msra.mxu0 0
      %3193 = vmatprep.subr.bf16.mxu0 0
      %3194 = vmatpush1.bf16.msra.mxu0 0
      %3195 = vmatprep.subr.bf16.mxu0 0
      %3196 = vmatpush1.bf16.msra.mxu0 0
      %3197 = vmatprep.subr.bf16.mxu0 0
      %3198 = vmatpush1.bf16.msra.mxu0 0
      %3199 = vmatprep.subr.bf16.mxu0 0
      %3200 = vmatpush1.bf16.msra.mxu0 0
      %3201 = vmatprep.subr.bf16.mxu0 0
      %3202 = vmatpush1.bf16.msra.mxu0 0
      %3203 = vmatprep.subr.bf16.mxu0 0
      %3204 = vmatpush1.bf16.msra.mxu0 0
      %3205 = vmatprep.subr.bf16.mxu0 0
      %3206 = vmatpush1.bf16.msra.mxu0 0
      %3207 = vmatprep.subr.bf16.mxu0 0
      %3208 = vmatpush1.bf16.msra.mxu0 0
      %3209 = vmatprep.subr.bf16.mxu0 0
      %3210 = vmatpush1.bf16.msra.mxu0 0
      %3211 = vmatprep.subr.bf16.mxu0 0
      %3212 = vmatpush1.bf16.msra.mxu0 0
      %3213 = vmatprep.subr.bf16.mxu0 0
      %3214 = vmatpush1.bf16.msra.mxu0 0
      %3215 = vmatprep.subr.bf16.mxu0 0
      %3216 = vmatpush1.bf16.msra.mxu0 0
      %3217 = vmatprep.subr.bf16.mxu0 0
      %3218 = vmatpush1.bf16.msra.mxu0 0
      %3219 = vmatprep.subr.bf16.mxu0 0
      %3220 = vmatpush1.bf16.msra.mxu0 0
      %3221 = vmatprep.mubr.bf16.mxu0 0
      %3222 = vmatmul.mubr.bf16.gmra.mrb[0].mxu0 %v3178
      %v3223 = vpop.f32.mrb[0].mxu0
      %v3224 = vadd.f32 0.0, %v3223
      %v3225 = vpop.f32.mrb[0].mxu0
      %v3226 = vadd.f32 0.0, %v3225
      %v3227 = vpop.f32.mrb[0].mxu0
      %v3228 = vpop.f32.mrb[0].mxu0
      %3229 = vdwg.mxu0
      %3230 = vmatprep.subr.bf16.mxu0 0
      %3231 = vmatpush1.bf16.msra.mxu0 %v3187
      %3232 = vmatprep.subr.bf16.mxu0 0
      %3233 = vmatpush1.bf16.msra.mxu0 0
      %3234 = vmatprep.subr.bf16.mxu0 0
      %3235 = vmatpush1.bf16.msra.mxu0 0
      %3236 = vmatprep.subr.bf16.mxu0 0
      %3237 = vmatpush1.bf16.msra.mxu0 0
      %3238 = vmatprep.subr.bf16.mxu0 0
      %3239 = vmatpush1.bf16.msra.mxu0 0
      %3240 = vmatprep.subr.bf16.mxu0 0
      %3241 = vmatpush1.bf16.msra.mxu0 0
      %3242 = vmatprep.subr.bf16.mxu0 0
      %3243 = vmatpush1.bf16.msra.mxu0 0
      %3244 = vmatprep.subr.bf16.mxu0 0
      %3245 = vmatpush1.bf16.msra.mxu0 0
      %3246 = vmatprep.subr.bf16.mxu0 0
      %3247 = vmatpush1.bf16.msra.mxu0 0
      %3248 = vmatprep.subr.bf16.mxu0 0
      %3249 = vmatpush1.bf16.msra.mxu0 0
      %3250 = vmatprep.subr.bf16.mxu0 0
      %3251 = vmatpush1.bf16.msra.mxu0 0
      %3252 = vmatprep.subr.bf16.mxu0 0
      %3253 = vmatpush1.bf16.msra.mxu0 0
      %3254 = vmatprep.subr.bf16.mxu0 0
      %3255 = vmatpush1.bf16.msra.mxu0 0
      %3256 = vmatprep.subr.bf16.mxu0 0
      %3257 = vmatpush1.bf16.msra.mxu0 0
      %3258 = vmatprep.subr.bf16.mxu0 0
      %3259 = vmatpush1.bf16.msra.mxu0 0
      %3260 = vmatprep.subr.bf16.mxu0 0
      %3261 = vmatpush1.bf16.msra.mxu0 0
      %3262 = vmatprep.mubr.bf16.mxu0 0
      %3263 = vmatmul.mubr.bf16.gmra.mrb[0].mxu0 %v3178
      %v3264 = vpop.f32.mrb[0].mxu0
      %v3265 = vadd.f32 0.0, %v3264
      %v3266 = vpop.f32.mrb[0].mxu0
      %v3267 = vpop.f32.mrb[0].mxu0
      %v3268 = vpop.f32.mrb[0].mxu0
      %3269 = vdwg.mxu0
      %v3270 = vadd.f32 %v3161, %v3224
      %v3271 = vadd.f32 %v3162, %v3226
      %v3272 = vadd.f32 %v3163, %v3265
      %v3273 = vld [vmem:[%s4] sm:$0xf]
      %3275 = vset.pattern.permute.xlu0 0
      %3276 = vperm.xlu0 %3275, %v3273
      %v3277 = vpop.permute.xlu0 %3276
      %v3279 = vadd.f32 %v3270, %v3277
      %v3280 = vadd.f32 %v3271, %v3277
      %v3281 = vadd.f32 %v3272, %v3277
      %v3282 = vmax.f32 %v3279, 0.0
      %v3283 = vmax.f32 %v3280, 0.0
      %v3284 = vmax.f32 %v3281, 0.0
      %v3288 = vrot.slane %v3282, 4
      %v3289 = vrot.slane %v3283, 4
      %v3290 = vrot.slane %v3284, 4
      %3294 = vst [vmem:[%s251 + $0x18] sm:$0xf0] %v3288
      %3295 = vst [vmem:[%s251 + $0x20] sm:$0xf0] %v3289
      %3296 = vst [vmem:[%s251 + $0x28] sm:$0xf0] %v3290
      %p3297 = scmp.lt.s32.totalorder %s17, 1
      %s3298 = scalar_select %p3297, %s17, 1
      %s3299 = smul.addr %s3298, 6
      %s3300 = smul.addr %s3299, 8
      %s3301 = scalar_lea.vmem %s6, %s3300
      // Predicated region
      $region49: #{decoder_block_v2.1} parent=43 // pred_check
        %p3302 = pneg %p166
      $region50: #{decoder_block_v2.1} parent=43 // pred_check_branch
        %3304 = sbr.rel (%p3302) target = $region52
      $region51: #{decoder_block_v2.1} parent=43 // pred_region
        _
      $region52: #{decoder_block_v2.1} parent=43 // pred_fallthru
        _
    $region44: #{decoder_block_v2.1} parent=5 // pred_fallthru
      _
    %p3305 = scmp.le.s32.totalorder 2, %s12
    // Predicated region
    $region53: #{decoder_block_v2.1} parent=5 // pred_check
      %p3306 = pneg %p3305
    $region54: #{decoder_block_v2.1} parent=5 // pred_check_branch
      %3308 = sbr.rel (%p3306) target = $region56
    $region55: #{decoder_block_v2.1} parent=5 // pred_region
      %s3309 = ssub.s32 %s12, 2
      // Predicated region
      $region57: #{decoder_block_v2.1} parent=55 // pred_check
        %p3310 = pneg %p172
      $region58: #{decoder_block_v2.1} parent=55 // pred_check_branch
        %3312 = sbr.rel (%p3310) target = $region60
      $region59: #{decoder_block_v2.1} parent=55 // pred_region
        %p3313 = scmp.lt.s32.totalorder %s18, 1
        %s3314 = scalar_select %p3313, %s18, 1
        %s3315 = smul.addr %s3314, 6
        %s3316 = smul.addr %s3315, 8
        %s3317 = scalar_lea.vmem %s6, %s3316
      $region60: #{decoder_block_v2.1} parent=55 // pred_fallthru
        _
    $region56: #{decoder_block_v2.1} parent=5 // pred_fallthru
      _
  $region6: #{decoder_block_v2.1} parent=0 // loop_footer
    %s16 = sadd.s32 1, %s12
  $region7: #{decoder_block_v2.1} parent=0 // loop_footer_branch
    %11 = sbr.rel target = $region3
  $region8: #{decoder_block_v2.1} parent=0 // loop_exit
    _

</llo_original>
